<compile_context>
chip_gen: v7x
topology: tpu7x:2x2x1
jax: 0.10.0
libtpu: 0.0.40
codegen_flags: <defaults>
</compile_context>

<pallas_src>
import numpy as np

import jax
import jax.numpy as jnp
from jax import lax
from jax.experimental import pallas as pl
from jax.experimental.pallas import tpu as pltpu


def _basic_block_kernel(x_ref, a1_ref, s1_ref, b1_ref, a2_ref, s2_ref, b2_ref,
                        o_ref, xpad_ref, ypad_ref):
    # x_ref : (B, H, W*C)     lane-folded input block (also the residual).
    # a*_ref: (3, W*C, W*C)   block-banded conv weights, one (W*C, W*C) per kh.
    # s/b   : (1, W*C)        folded BN scale / shift, tiled across W (f32).
    # o_ref : (B, H, W*C)     lane-folded output block.
    # xpad_ref / ypad_ref: VMEM (B, H+2, W*C)  row-padded input / conv1 act.
    B, Hp2, WC = xpad_ref.shape
    H = Hp2 - 2
    M = B * H
    cdt = xpad_ref.dtype

    x_fold = x_ref[...]                                    # (B, H, W*C)

    # Re-zero ONLY the two halo rows each step (interior is fully overwritten
    # below); cheap and correct regardless of how the grid is split over cores.
    zrow = jnp.zeros((B, 1, WC), cdt)
    xpad_ref[:, 0:1, :] = zrow
    xpad_ref[:, H + 1:H + 2, :] = zrow
    ypad_ref[:, 0:1, :] = zrow
    ypad_ref[:, H + 1:H + 2, :] = zrow

    xpad_ref[:, 1:H + 1, :] = x_fold.astype(cdt)

    def conv3x3_banded(src_ref, a_ref):
        # One MXU matmul per kh row tap: (B*H, W*C) x (W*C, W*C), f32 acc.
        # kw taps and the horizontal zero padding live inside the banded weight.
        acc = jnp.dot(src_ref[:, 0:H, :].reshape(M, WC), a_ref[0],
                      preferred_element_type=jnp.float32)
        for kh in (1, 2):
            acc = acc + jnp.dot(src_ref[:, kh:kh + H, :].reshape(M, WC),
                                a_ref[kh], preferred_element_type=jnp.float32)
        return acc                                          # (B*H, W*C) f32

    # conv1 + bn1 + relu: result stays on-chip in the lane-dense VMEM scratch.
    y1 = jnp.maximum(conv3x3_banded(xpad_ref, a1_ref) * s1_ref[0] + b1_ref[0],
                     0.0)
    ypad_ref[:, 1:H + 1, :] = y1.reshape(B, H, WC).astype(cdt)

    # conv2 + bn2 + residual (from the already-resident input block) + relu.
    y2 = conv3x3_banded(ypad_ref, a2_ref) * s2_ref[0] + b2_ref[0]
    y2 = y2 + x_fold.reshape(M, WC).astype(jnp.float32)
    y2 = jnp.maximum(y2, 0.0)
    o_ref[...] = y2.reshape(B, H, WC).astype(o_ref.dtype)   # dense, unmasked store


def _band_expand(w, width):
    """(3, 3, C, C) HWIO conv taps -> (3, W*C, W*C) block-banded matrices.

    A[kh][wi*C + ci, wo*C + co] = w[kh, wi - wo + 1, ci, co] when the kw tap
    (wi - wo + 1) is in {0, 1, 2} and wi is in range, else 0, so that the
    lane-folded conv row is  out_row = sum_kh  in_row(kh) @ A[kh]  with the
    "SAME" horizontal zero padding built into the band structure.
    """
    kh_, kw_, cin, cout = w.shape
    assert kh_ == 3 and kw_ == 3 and cin == cout
    C = cin
    wo = np.arange(width)
    mats = []
    for kh in range(3):
        blk = jnp.zeros((width, width, C, C), w.dtype)      # (wi, wo, ci, co)
        for kw in range(3):
            wi = wo + kw - 1
            valid = (wi >= 0) & (wi < width)
            blk = blk.at[wi[valid], wo[valid]].set(w[kh, kw])
        mats.append(
            jnp.transpose(blk, (0, 2, 1, 3)).reshape(width * C, width * C))
    return jnp.stack(mats, axis=0)


def _vmem_need_bytes(batch_block, H, WC, io_itemsize, c_itemsize):
    """Post-layout VMEM footprint ((8,128)-padded tiles, actual dtypes)."""
    pad8 = lambda v: -(-v // 8) * 8
    pad128 = lambda v: -(-v // 128) * 128
    io_blk = batch_block * pad8(H) * pad128(WC) * io_itemsize
    w_blk = 3 * pad8(WC) * pad128(WC) * c_itemsize
    vec_blk = pad8(1) * pad128(WC) * 4
    pad_scratch = batch_block * pad8(H + 2) * pad128(WC) * c_itemsize
    acc = batch_block * pad8(H) * pad128(WC) * 4
    return (2 * 2 * io_blk          # x and out blocks, double-buffered
            + 2 * 2 * w_blk         # two banded weights (resident, 2 bufs)
            + 4 * 2 * vec_blk       # four BN vectors
            + 2 * pad_scratch       # xpad + ypad scratch
            + 2 * acc)              # f32 conv accumulators / spill headroom


def basic_block_pallas(x_nhwc, w1, s1, b1, w2, s2, b2, *,
                       compute_dtype=jnp.bfloat16, batch_block=None):
    """Fused BasicBlock (stride=1, no downsample). x_nhwc: (N,H,W,C); w: (3,3,C,C)."""
    N, H, W, C = x_nhwc.shape
    assert w1.shape == (3, 3, C, C) and w2.shape == (3, 3, C, C), \
        "stride=1 / downsample=None BasicBlock requires inplanes == planes"
    assert H % 8 == 0, "H must be a multiple of 8 (sublane tile) for this kernel"
    WC = W * C
    assert WC % 128 == 0, "W*C must be a multiple of 128 (lane tile) for this kernel"
    cdt = compute_dtype or x_nhwc.dtype
    io_is = jnp.dtype(x_nhwc.dtype).itemsize
    c_is = jnp.dtype(cdt).itemsize

    # Physical VMEM -> budget (keeps the v7x 64 MiB per-core limit safe).
    try:
        phys_vmem = getattr(pltpu.get_tpu_info(), "vmem_capacity_bytes",
                            64 * 1024 * 1024)
    except Exception:
        phys_vmem = 64 * 1024 * 1024
    vmem_cap = (phys_vmem * 3) // 4

    # Pick the largest batch block (divisor of N) whose footprint fits.
    if batch_block is None:
        batch_block = 1
        for d in range(N, 0, -1):
            if N % d == 0 and _vmem_need_bytes(d, H, WC, io_is, c_is) <= vmem_cap // 2:
                batch_block = d
                break
    assert N % batch_block == 0, "batch_block must divide N"
    B = batch_block

    need = _vmem_need_bytes(B, H, WC, io_is, c_is)
    assert need <= vmem_cap, (
        f"per-step footprint {need >> 20} MiB exceeds the {vmem_cap >> 20} MiB "
        "VMEM budget -- retile (H grid axis / per-tap matmuls) for this shape")
    vmem_limit = int(min(max(int(need * 1.25), 16 * 1024 * 1024), vmem_cap))

    # Block-banded conv weights and W-tiled BN vectors (built once, XLA-side).
    a1 = _band_expand(w1, W).astype(cdt)
    a2 = _band_expand(w2, W).astype(cdt)
    s1f = jnp.tile(s1.astype(jnp.float32), W).reshape(1, WC)
    b1f = jnp.tile(b1.astype(jnp.float32), W).reshape(1, WC)
    s2f = jnp.tile(s2.astype(jnp.float32), W).reshape(1, WC)
    b2f = jnp.tile(b2.astype(jnp.float32), W).reshape(1, WC)

    x_fold = x_nhwc.reshape(N, H, WC)      # lane-dense fold (free, contiguous)

    out = pl.pallas_call(
        _basic_block_kernel,
        out_shape=jax.ShapeDtypeStruct((N, H, WC), x_nhwc.dtype),
        grid=(N // B,),
        in_specs=[
            pl.BlockSpec((B, H, WC), lambda n: (n, 0, 0)),      # x (and residual)
            pl.BlockSpec((3, WC, WC), lambda n: (0, 0, 0)),     # banded w1 (resident)
            pl.BlockSpec((1, WC), lambda n: (0, 0)),            # bn1 scale
            pl.BlockSpec((1, WC), lambda n: (0, 0)),            # bn1 shift
            pl.BlockSpec((3, WC, WC), lambda n: (0, 0, 0)),     # banded w2 (resident)
            pl.BlockSpec((1, WC), lambda n: (0, 0)),            # bn2 scale
            pl.BlockSpec((1, WC), lambda n: (0, 0)),            # bn2 shift
        ],
        out_specs=pl.BlockSpec((B, H, WC), lambda n: (n, 0, 0)),
        scratch_shapes=[
            pltpu.VMEM((B, H + 2, WC), cdt),   # row-padded input tile
            pltpu.VMEM((B, H + 2, WC), cdt),   # row-padded conv1 activation
        ],
        compiler_params=pltpu.CompilerParams(
            dimension_semantics=("parallel",),
            vmem_limit_bytes=vmem_limit,
        ),
    )(x_fold, a1, s1f, b1f, a2, s2f, b2f)
    return out.reshape(N, H, W, C)


def fold_bn(gamma, beta, mean, var, eps=1e-5):
    scale = gamma / jnp.sqrt(var + eps)
    shift = beta - mean * scale
    return scale, shift


def basic_block_forward(x_nchw, p, *, compute_dtype=jnp.bfloat16,
                        batch_block=None):
    """BasicBlock forward (stride=1, downsample=None). x_nchw: (N, C, H, W)."""
    x = jnp.transpose(x_nchw, (0, 2, 3, 1))                    # -> NHWC
    s1, b1 = fold_bn(p["gamma1"], p["beta1"], p["mean1"], p["var1"])
    s2, b2 = fold_bn(p["gamma2"], p["beta2"], p["mean2"], p["var2"])
    out = basic_block_pallas(x, p["w1"], s1, b1, p["w2"], s2, b2,
                             compute_dtype=compute_dtype, batch_block=batch_block)
    return jnp.transpose(out, (0, 3, 1, 2))                    # -> NCHW


def reference_forward(x_nchw, p, compute_dtype=jnp.float32):
    """Pure-JAX reference (lax.conv) with the same operand casts as the kernel."""
    x = jnp.transpose(x_nchw, (0, 2, 3, 1))
    cdt = compute_dtype
    w1 = p["w1"].astype(cdt)
    w2 = p["w2"].astype(cdt)
    dn = lax.conv_dimension_numbers(x.shape, w1.shape, ("NHWC", "HWIO", "NHWC"))
    s1, b1 = fold_bn(p["gamma1"], p["beta1"], p["mean1"], p["var1"])
    s2, b2 = fold_bn(p["gamma2"], p["beta2"], p["mean2"], p["var2"])
    y = lax.conv_general_dilated(x.astype(cdt), w1, (1, 1), "SAME",
                                 dimension_numbers=dn,
                                 preferred_element_type=jnp.float32)
    y = jnp.maximum(y * s1 + b1, 0.0)
    y = lax.conv_general_dilated(y.astype(cdt), w2, (1, 1), "SAME",
                                 dimension_numbers=dn,
                                 preferred_element_type=jnp.float32)
    y = jnp.maximum(y * s2 + b2 + x.astype(jnp.float32), 0.0)
    return jnp.transpose(y, (0, 3, 1, 2)).astype(x_nchw.dtype)


def make_params(key, inplanes, planes):
    ks = jax.random.split(key, 8)
    # Conv weights stored in HWIO layout (3, 3, Cin, Cout); PyTorch's OIHW
    # (Cout, Cin, 3, 3) would be transposed via (2, 3, 1, 0).
    w1 = 0.1 * jax.random.normal(ks[0], (3, 3, inplanes, planes), jnp.float32)
    w2 = 0.1 * jax.random.normal(ks[1], (3, 3, planes, planes), jnp.float32)
    return {
        "w1": w1,
        "w2": w2,
        "gamma1": 1.0 + 0.1 * jax.random.normal(ks[2], (planes,), jnp.float32),
        "beta1": 0.1 * jax.random.normal(ks[3], (planes,), jnp.float32),
        "mean1": 0.1 * jax.random.normal(ks[4], (planes,), jnp.float32),
        "var1": 1.0 + 0.1 * jnp.abs(jax.random.normal(ks[5], (planes,), jnp.float32)),
        "gamma2": 1.0 + 0.1 * jax.random.normal(ks[6], (planes,), jnp.float32),
        "beta2": 0.1 * jax.random.normal(ks[7], (planes,), jnp.float32),
        "mean2": jnp.zeros((planes,), jnp.float32),
        "var2": jnp.ones((planes,), jnp.float32),
    }


if __name__ == "__main__":
    # inplanes = planes = 64 (ResNet stage-1 channel count), stride = 1.
    N, C, H, W = 4, 64, 8, 8
    key = jax.random.PRNGKey(0)
    kx, kp = jax.random.split(key)
    x = jax.random.normal(kx, (N, C, H, W), jnp.float32)       # NCHW like PyTorch
    params = make_params(kp, C, C)

    # 1) f32 compute path, 2 samples per grid step (exercises the multi-step
    #    grid and the per-step halo re-zeroing); tight check vs f32 reference.
    out32 = jax.block_until_ready(
        basic_block_forward(x, params, compute_dtype=jnp.float32, batch_block=2))
    ref32 = jax.block_until_ready(reference_forward(x, params, jnp.float32))
    assert out32.shape == (N, C, H, W)
    assert jnp.allclose(out32, ref32, atol=1e-3, rtol=1e-3), \
        "f32 mismatch vs reference"

    # 2) Default path: bf16 operands / f32 accumulation, whole batch per step;
    #    compared against a reference with matching bf16 operand casts.
    outbf = jax.block_until_ready(basic_block_forward(x, params))
    refbf = jax.block_until_ready(reference_forward(x, params, jnp.bfloat16))
    assert jnp.allclose(outbf, refbf, atol=1e-2, rtol=1e-2), \
        "bf16 mismatch vs reference"

    print("KERNEL_OK")
</pallas_src>

<mosaic_0001>
module attributes {stable_mosaic.version = 11 : i64} {
  func.func @_basic_block_kernel(%arg0: i32, %arg1: memref<2x8x512xf32, #tpu.memory_space<vmem>>, %arg2: memref<3x512x512xf32, #tpu.memory_space<vmem>>, %arg3: memref<1x512xf32, #tpu.memory_space<vmem>>, %arg4: memref<1x512xf32, #tpu.memory_space<vmem>>, %arg5: memref<3x512x512xf32, #tpu.memory_space<vmem>>, %arg6: memref<1x512xf32, #tpu.memory_space<vmem>>, %arg7: memref<1x512xf32, #tpu.memory_space<vmem>>, %arg8: memref<2x8x512xf32, #tpu.memory_space<vmem>>, %arg9: memref<2x10x512xf32, #tpu.memory_space<vmem>>, %arg10: memref<2x10x512xf32, #tpu.memory_space<vmem>>) attributes {dimension_semantics = [#tpu.dimension_semantics<parallel>], iteration_bounds = array<i64: 2>, scalar_prefetch = 0 : i64, scratch_operands = 2 : i64, tpu.core_type = #tpu.core_type<tc>, window_params = [{transform_indices = @transform_0, window_bounds = array<i64: 2, 8, 512>}, {pipeline_mode = #tpu.pipeline_mode<synchronous>, transform_indices = @transform_1, window_bounds = array<i64: 3, 512, 512>}, {pipeline_mode = #tpu.pipeline_mode<synchronous>, transform_indices = @transform_2, window_bounds = array<i64: 1, 512>}, {pipeline_mode = #tpu.pipeline_mode<synchronous>, transform_indices = @transform_3, window_bounds = array<i64: 1, 512>}, {pipeline_mode = #tpu.pipeline_mode<synchronous>, transform_indices = @transform_4, window_bounds = array<i64: 3, 512, 512>}, {pipeline_mode = #tpu.pipeline_mode<synchronous>, transform_indices = @transform_5, window_bounds = array<i64: 1, 512>}, {pipeline_mode = #tpu.pipeline_mode<synchronous>, transform_indices = @transform_6, window_bounds = array<i64: 1, 512>}, {transform_indices = @transform_7, window_bounds = array<i64: 2, 8, 512>}]} {
    %c0 = arith.constant 0 : index
    %c0_0 = arith.constant 0 : index
    %c0_1 = arith.constant 0 : index
    %0 = vector.load %arg1[%c0, %c0_0, %c0_1] : memref<2x8x512xf32, #tpu.memory_space<vmem>>, vector<2x8x512xf32>
    %cst = arith.constant 0.000000e+00 : f32
    %1 = vector.broadcast %cst : f32 to vector<2x1x512xf32>
    %c0_2 = arith.constant 0 : index
    %c0_3 = arith.constant 0 : index
    %c0_4 = arith.constant 0 : index
    %2 = vector.load %arg9[%c0_2, %c0_3, %c0_4] : memref<2x10x512xf32, #tpu.memory_space<vmem>>, vector<2x1x512xf32>
    tpu.vector_store %arg9[%c0_2, %c0_3, %c0_4], %1 {strides = array<i32>} : memref<2x10x512xf32, #tpu.memory_space<vmem>>, vector<2x1x512xf32>,
    %c0_5 = arith.constant 0 : index
    %c9 = arith.constant 9 : index
    %c0_6 = arith.constant 0 : index
    %3 = vector.load %arg9[%c0_5, %c9, %c0_6] : memref<2x10x512xf32, #tpu.memory_space<vmem>>, vector<2x1x512xf32>
    tpu.vector_store %arg9[%c0_5, %c9, %c0_6], %1 {strides = array<i32>} : memref<2x10x512xf32, #tpu.memory_space<vmem>>, vector<2x1x512xf32>,
    %c0_7 = arith.constant 0 : index
    %c0_8 = arith.constant 0 : index
    %c0_9 = arith.constant 0 : index
    %4 = vector.load %arg10[%c0_7, %c0_8, %c0_9] : memref<2x10x512xf32, #tpu.memory_space<vmem>>, vector<2x1x512xf32>
    tpu.vector_store %arg10[%c0_7, %c0_8, %c0_9], %1 {strides = array<i32>} : memref<2x10x512xf32, #tpu.memory_space<vmem>>, vector<2x1x512xf32>,
    %c0_10 = arith.constant 0 : index
    %c9_11 = arith.constant 9 : index
    %c0_12 = arith.constant 0 : index
    %5 = vector.load %arg10[%c0_10, %c9_11, %c0_12] : memref<2x10x512xf32, #tpu.memory_space<vmem>>, vector<2x1x512xf32>
    tpu.vector_store %arg10[%c0_10, %c9_11, %c0_12], %1 {strides = array<i32>} : memref<2x10x512xf32, #tpu.memory_space<vmem>>, vector<2x1x512xf32>,
    %c0_13 = arith.constant 0 : index
    %c1 = arith.constant 1 : index
    %c0_14 = arith.constant 0 : index
    %6 = vector.load %arg9[%c0_13, %c1, %c0_14] : memref<2x10x512xf32, #tpu.memory_space<vmem>>, vector<2x8x512xf32>
    tpu.vector_store %arg9[%c0_13, %c1, %c0_14], %0 {strides = array<i32>} : memref<2x10x512xf32, #tpu.memory_space<vmem>>, vector<2x8x512xf32>,
    %c0_15 = arith.constant 0 : index
    %c0_16 = arith.constant 0 : index
    %c0_17 = arith.constant 0 : index
    %7 = vector.load %arg9[%c0_15, %c0_16, %c0_17] : memref<2x10x512xf32, #tpu.memory_space<vmem>>, vector<2x8x512xf32>
    %8 = vector.shape_cast %7 : vector<2x8x512xf32> to vector<16x512xf32>
    %c0_18 = arith.constant 0 : index
    %c0_19 = arith.constant 0 : index
    %c0_20 = arith.constant 0 : index
    %9 = vector.load %arg2[%c0_18, %c0_19, %c0_20] : memref<3x512x512xf32, #tpu.memory_space<vmem>>, vector<1x512x512xf32>
    %10 = vector.shape_cast %9 : vector<1x512x512xf32> to vector<512x512xf32>
    %cst_21 = arith.constant dense<0.000000e+00> : vector<16x512xf32>
    %11 = tpu.matmul %8, %10, %cst_21 {dimension_numbers = #tpu.dot_dimension_numbers<[1], [0], [0], [1], [0, 0, 1, 1], [], []>} : vector<16x512xf32>, vector<512x512xf32>, vector<16x512xf32> -> vector<16x512xf32>
    %c0_22 = arith.constant 0 : index
    %c1_23 = arith.constant 1 : index
    %c0_24 = arith.constant 0 : index
    %12 = vector.load %arg9[%c0_22, %c1_23, %c0_24] : memref<2x10x512xf32, #tpu.memory_space<vmem>>, vector<2x8x512xf32>
    %13 = vector.shape_cast %12 : vector<2x8x512xf32> to vector<16x512xf32>
    %c1_25 = arith.constant 1 : index
    %c0_26 = arith.constant 0 : index
    %c0_27 = arith.constant 0 : index
    %14 = vector.load %arg2[%c1_25, %c0_26, %c0_27] : memref<3x512x512xf32, #tpu.memory_space<vmem>>, vector<1x512x512xf32>
    %15 = vector.shape_cast %14 : vector<1x512x512xf32> to vector<512x512xf32>
    %cst_28 = arith.constant dense<0.000000e+00> : vector<16x512xf32>
    %16 = tpu.matmul %13, %15, %cst_28 {dimension_numbers = #tpu.dot_dimension_numbers<[1], [0], [0], [1], [0, 0, 1, 1], [], []>} : vector<16x512xf32>, vector<512x512xf32>, vector<16x512xf32> -> vector<16x512xf32>
    %17 = arith.addf %11, %16 : vector<16x512xf32>
    %c0_29 = arith.constant 0 : index
    %c2 = arith.constant 2 : index
    %c0_30 = arith.constant 0 : index
    %18 = vector.load %arg9[%c0_29, %c2, %c0_30] : memref<2x10x512xf32, #tpu.memory_space<vmem>>, vector<2x8x512xf32>
    %19 = vector.shape_cast %18 : vector<2x8x512xf32> to vector<16x512xf32>
    %c2_31 = arith.constant 2 : index
    %c0_32 = arith.constant 0 : index
    %c0_33 = arith.constant 0 : index
    %20 = vector.load %arg2[%c2_31, %c0_32, %c0_33] : memref<3x512x512xf32, #tpu.memory_space<vmem>>, vector<1x512x512xf32>
    %21 = vector.shape_cast %20 : vector<1x512x512xf32> to vector<512x512xf32>
    %cst_34 = arith.constant dense<0.000000e+00> : vector<16x512xf32>
    %22 = tpu.matmul %19, %21, %cst_34 {dimension_numbers = #tpu.dot_dimension_numbers<[1], [0], [0], [1], [0, 0, 1, 1], [], []>} : vector<16x512xf32>, vector<512x512xf32>, vector<16x512xf32> -> vector<16x512xf32>
    %23 = arith.addf %17, %22 : vector<16x512xf32>
    %c0_35 = arith.constant 0 : index
    %c0_36 = arith.constant 0 : index
    %24 = vector.load %arg3[%c0_35, %c0_36] : memref<1x512xf32, #tpu.memory_space<vmem>>, vector<1x512xf32>
    %25 = vector.shape_cast %24 : vector<1x512xf32> to vector<512xf32>
    %26 = vector.shape_cast %25 : vector<512xf32> to vector<1x512xf32>
    %27 = vector.broadcast %26 : vector<1x512xf32> to vector<16x512xf32>
    %28 = arith.mulf %23, %27 : vector<16x512xf32>
    %c0_37 = arith.constant 0 : index
    %c0_38 = arith.constant 0 : index
    %29 = vector.load %arg4[%c0_37, %c0_38] : memref<1x512xf32, #tpu.memory_space<vmem>>, vector<1x512xf32>
    %30 = vector.shape_cast %29 : vector<1x512xf32> to vector<512xf32>
    %31 = vector.shape_cast %30 : vector<512xf32> to vector<1x512xf32>
    %32 = vector.broadcast %31 : vector<1x512xf32> to vector<16x512xf32>
    %33 = arith.addf %28, %32 : vector<16x512xf32>
    %cst_39 = arith.constant 0.000000e+00 : f32
    %34 = vector.broadcast %cst_39 : f32 to vector<16x512xf32>
    %35 = arith.maximumf %33, %34 : vector<16x512xf32>
    %36 = vector.shape_cast %35 : vector<16x512xf32> to vector<2x8x512xf32>
    %c0_40 = arith.constant 0 : index
    %c1_41 = arith.constant 1 : index
    %c0_42 = arith.constant 0 : index
    %37 = vector.load %arg10[%c0_40, %c1_41, %c0_42] : memref<2x10x512xf32, #tpu.memory_space<vmem>>, vector<2x8x512xf32>
    tpu.vector_store %arg10[%c0_40, %c1_41, %c0_42], %36 {strides = array<i32>} : memref<2x10x512xf32, #tpu.memory_space<vmem>>, vector<2x8x512xf32>,
    %c0_43 = arith.constant 0 : index
    %c0_44 = arith.constant 0 : index
    %c0_45 = arith.constant 0 : index
    %38 = vector.load %arg10[%c0_43, %c0_44, %c0_45] : memref<2x10x512xf32, #tpu.memory_space<vmem>>, vector<2x8x512xf32>
    %39 = vector.shape_cast %38 : vector<2x8x512xf32> to vector<16x512xf32>
    %c0_46 = arith.constant 0 : index
    %c0_47 = arith.constant 0 : index
    %c0_48 = arith.constant 0 : index
    %40 = vector.load %arg5[%c0_46, %c0_47, %c0_48] : memref<3x512x512xf32, #tpu.memory_space<vmem>>, vector<1x512x512xf32>
    %41 = vector.shape_cast %40 : vector<1x512x512xf32> to vector<512x512xf32>
    %cst_49 = arith.constant dense<0.000000e+00> : vector<16x512xf32>
    %42 = tpu.matmul %39, %41, %cst_49 {dimension_numbers = #tpu.dot_dimension_numbers<[1], [0], [0], [1], [0, 0, 1, 1], [], []>} : vector<16x512xf32>, vector<512x512xf32>, vector<16x512xf32> -> vector<16x512xf32>
    %c0_50 = arith.constant 0 : index
    %c1_51 = arith.constant 1 : index
    %c0_52 = arith.constant 0 : index
    %43 = vector.load %arg10[%c0_50, %c1_51, %c0_52] : memref<2x10x512xf32, #tpu.memory_space<vmem>>, vector<2x8x512xf32>
    %44 = vector.shape_cast %43 : vector<2x8x512xf32> to vector<16x512xf32>
    %c1_53 = arith.constant 1 : index
    %c0_54 = arith.constant 0 : index
    %c0_55 = arith.constant 0 : index
    %45 = vector.load %arg5[%c1_53, %c0_54, %c0_55] : memref<3x512x512xf32, #tpu.memory_space<vmem>>, vector<1x512x512xf32>
    %46 = vector.shape_cast %45 : vector<1x512x512xf32> to vector<512x512xf32>
    %cst_56 = arith.constant dense<0.000000e+00> : vector<16x512xf32>
    %47 = tpu.matmul %44, %46, %cst_56 {dimension_numbers = #tpu.dot_dimension_numbers<[1], [0], [0], [1], [0, 0, 1, 1], [], []>} : vector<16x512xf32>, vector<512x512xf32>, vector<16x512xf32> -> vector<16x512xf32>
    %48 = arith.addf %42, %47 : vector<16x512xf32>
    %c0_57 = arith.constant 0 : index
    %c2_58 = arith.constant 2 : index
    %c0_59 = arith.constant 0 : index
    %49 = vector.load %arg10[%c0_57, %c2_58, %c0_59] : memref<2x10x512xf32, #tpu.memory_space<vmem>>, vector<2x8x512xf32>
    %50 = vector.shape_cast %49 : vector<2x8x512xf32> to vector<16x512xf32>
    %c2_60 = arith.constant 2 : index
    %c0_61 = arith.constant 0 : index
    %c0_62 = arith.constant 0 : index
    %51 = vector.load %arg5[%c2_60, %c0_61, %c0_62] : memref<3x512x512xf32, #tpu.memory_space<vmem>>, vector<1x512x512xf32>
    %52 = vector.shape_cast %51 : vector<1x512x512xf32> to vector<512x512xf32>
    %cst_63 = arith.constant dense<0.000000e+00> : vector<16x512xf32>
    %53 = tpu.matmul %50, %52, %cst_63 {dimension_numbers = #tpu.dot_dimension_numbers<[1], [0], [0], [1], [0, 0, 1, 1], [], []>} : vector<16x512xf32>, vector<512x512xf32>, vector<16x512xf32> -> vector<16x512xf32>
    %54 = arith.addf %48, %53 : vector<16x512xf32>
    %c0_64 = arith.constant 0 : index
    %c0_65 = arith.constant 0 : index
    %55 = vector.load %arg6[%c0_64, %c0_65] : memref<1x512xf32, #tpu.memory_space<vmem>>, vector<1x512xf32>
    %56 = vector.shape_cast %55 : vector<1x512xf32> to vector<512xf32>
    %57 = vector.shape_cast %56 : vector<512xf32> to vector<1x512xf32>
    %58 = vector.broadcast %57 : vector<1x512xf32> to vector<16x512xf32>
    %59 = arith.mulf %54, %58 : vector<16x512xf32>
    %c0_66 = arith.constant 0 : index
    %c0_67 = arith.constant 0 : index
    %60 = vector.load %arg7[%c0_66, %c0_67] : memref<1x512xf32, #tpu.memory_space<vmem>>, vector<1x512xf32>
    %61 = vector.shape_cast %60 : vector<1x512xf32> to vector<512xf32>
    %62 = vector.shape_cast %61 : vector<512xf32> to vector<1x512xf32>
    %63 = vector.broadcast %62 : vector<1x512xf32> to vector<16x512xf32>
    %64 = arith.addf %59, %63 : vector<16x512xf32>
    %65 = vector.shape_cast %0 : vector<2x8x512xf32> to vector<16x512xf32>
    %66 = arith.addf %64, %65 : vector<16x512xf32>
    %cst_68 = arith.constant 0.000000e+00 : f32
    %67 = vector.broadcast %cst_68 : f32 to vector<16x512xf32>
    %68 = arith.maximumf %66, %67 : vector<16x512xf32>
    %69 = vector.shape_cast %68 : vector<16x512xf32> to vector<2x8x512xf32>
    %c0_69 = arith.constant 0 : index
    %c0_70 = arith.constant 0 : index
    %c0_71 = arith.constant 0 : index
    %70 = vector.load %arg8[%c0_69, %c0_70, %c0_71] : memref<2x8x512xf32, #tpu.memory_space<vmem>>, vector<2x8x512xf32>
    tpu.vector_store %arg8[%c0_69, %c0_70, %c0_71], %69 {strides = array<i32>} : memref<2x8x512xf32, #tpu.memory_space<vmem>>, vector<2x8x512xf32>,
    return
  }
  func.func @transform_0(%arg0: i32) -> (i32, i32, i32) {
    %c0_i32 = arith.constant 0 : i32
    %c0_i32_0 = arith.constant 0 : i32
    %c0_i32_1 = arith.constant 0 : i32
    return %arg0, %c0_i32, %c0_i32_0 : i32, i32, i32
  }
  func.func @transform_1(%arg0: i32) -> (i32, i32, i32) {
    %c0_i32 = arith.constant 0 : i32
    %c0_i32_0 = arith.constant 0 : i32
    %c0_i32_1 = arith.constant 0 : i32
    %c0_i32_2 = arith.constant 0 : i32
    return %c0_i32, %c0_i32_0, %c0_i32_1 : i32, i32, i32
  }
  func.func @transform_2(%arg0: i32) -> (i32, i32) {
    %c0_i32 = arith.constant 0 : i32
    %c0_i32_0 = arith.constant 0 : i32
    %c0_i32_1 = arith.constant 0 : i32
    return %c0_i32, %c0_i32_0 : i32, i32
  }
  func.func @transform_3(%arg0: i32) -> (i32, i32) {
    %c0_i32 = arith.constant 0 : i32
    %c0_i32_0 = arith.constant 0 : i32
    %c0_i32_1 = arith.constant 0 : i32
    return %c0_i32, %c0_i32_0 : i32, i32
  }
  func.func @transform_4(%arg0: i32) -> (i32, i32, i32) {
    %c0_i32 = arith.constant 0 : i32
    %c0_i32_0 = arith.constant 0 : i32
    %c0_i32_1 = arith.constant 0 : i32
    %c0_i32_2 = arith.constant 0 : i32
    return %c0_i32, %c0_i32_0, %c0_i32_1 : i32, i32, i32
  }
  func.func @transform_5(%arg0: i32) -> (i32, i32) {
    %c0_i32 = arith.constant 0 : i32
    %c0_i32_0 = arith.constant 0 : i32
    %c0_i32_1 = arith.constant 0 : i32
    return %c0_i32, %c0_i32_0 : i32, i32
  }
  func.func @transform_6(%arg0: i32) -> (i32, i32) {
    %c0_i32 = arith.constant 0 : i32
    %c0_i32_0 = arith.constant 0 : i32
    %c0_i32_1 = arith.constant 0 : i32
    return %c0_i32, %c0_i32_0 : i32, i32
  }
  func.func @transform_7(%arg0: i32) -> (i32, i32, i32) {
    %c0_i32 = arith.constant 0 : i32
    %c0_i32_0 = arith.constant 0 : i32
    %c0_i32_1 = arith.constant 0 : i32
    return %arg0, %c0_i32, %c0_i32_0 : i32, i32, i32
  }
}

</mosaic_0001>

<llo_original>
// kernel: tpu_custom_call.1
$region0: #{tpu_custom_call.1}
  #allocation0 [shape = 'u32[]', space=smem, size = 0x4, offset = 0x4, fixed_abs, tag = 'smem constant byte address 0x4 - core index']
  #allocation1 [shape = 'u32[144,128]{1,0:T(1,128)}', space=vmem, size = 0x12000, scoped, tag = 'internal scratch']
  #allocation2 [shape = 'f32[2,10,512]{2,1,0:T(8,128)}', space=vmem, size = 0x10000, scoped, tag = 'scratch operand']
  #allocation3 [shape = 'f32[2,10,512]{2,1,0:T(8,128)}', space=vmem, size = 0x10000, scoped, tag = 'scratch operand']
  %s0 = inlined_call_operand.hbm [shape: f32[4,8,512], index: 0, kind: input, shape index: {}]
  %s1 = inlined_call_operand.hbm [shape: f32[3,512,512], index: 1, kind: input, shape index: {}]
  %s2 = inlined_call_operand.hbm [shape: f32[1,512], index: 2, kind: input, shape index: {}]
  %s3 = inlined_call_operand.hbm [shape: f32[1,512], index: 3, kind: input, shape index: {}]
  %s4 = inlined_call_operand.hbm [shape: f32[3,512,512], index: 4, kind: input, shape index: {}]
  %s5 = inlined_call_operand.hbm [shape: f32[1,512], index: 5, kind: input, shape index: {}]
  %s6 = inlined_call_operand.hbm [shape: f32[1,512], index: 6, kind: input, shape index: {}]
  %s7 = inlined_call_operand.hbm [shape: f32[4,8,512], index: 7, kind: output, shape index: {}]
  %s8 = sld [smem:[#allocation0]]
  $region89: #{tpu_custom_call.1} parent=0
    _
  %s10 = ssub.s32 1, %s8
  %s11 = scalar_select 0, %s10, %s8
  $region1: #{tpu_custom_call.1} parent=0
    #allocation4 [shape = 'u8[65536]{0}', space=vmem, size = 0x10000, scoped, tag = 'input window, operand 0']
    #allocation5 [shape = 's32[2]{0}', space=sflag, size = 0x8, scoped, tag = 'scoped memory for tpu_custom_call.1']
    #allocation6 [shape = 's32[2]{0}', space=sflag, size = 0x8, scoped, tag = 'scoped memory for tpu_custom_call.1']
    #allocation7 [shape = 'u8[3145728]{0}', space=vmem, size = 0x300000, scoped, tag = 'input window, operand 1, single buffered']
    #allocation8 [shape = 's32[1]{0}', space=sflag, size = 0x4, scoped, tag = 'scoped memory for tpu_custom_call.1']
    #allocation9 [shape = 'u8[2048]{0}', space=vmem, size = 0x800, scoped, tag = 'input window, operand 2, single buffered']
    #allocation10 [shape = 'u8[2048]{0}', space=vmem, size = 0x800, scoped, tag = 'input window, operand 3, single buffered']
    #allocation11 [shape = 's32[1]{0}', space=sflag, size = 0x4, scoped, tag = 'scoped memory for tpu_custom_call.1']
    #allocation12 [shape = 'u8[3145728]{0}', space=vmem, size = 0x300000, scoped, tag = 'input window, operand 4, single buffered']
    #allocation13 [shape = 'u8[2048]{0}', space=vmem, size = 0x800, scoped, tag = 'input window, operand 5, single buffered']
    #allocation14 [shape = 's32[1]{0}', space=sflag, size = 0x4, scoped, tag = 'scoped memory for tpu_custom_call.1']
    #allocation15 [shape = 'u8[2048]{0}', space=vmem, size = 0x800, scoped, tag = 'input window, operand 6, single buffered']
    #allocation16 [shape = 'u8[65536]{0}', space=vmem, size = 0x10000, scoped, tag = 'output window, operand 0']
    %12 = vsyncpa [#allocation5], 0
    %s13 = scalar_lea.sflag [#allocation5], 1
    %14 = vsyncpa %s13, 0
    %15 = vsyncpa [#allocation8], 0
    %16 = vsyncpa [#allocation11], 0
    %17 = vsyncpa [#allocation14], 0
    %18 = vsyncpa [#allocation6], 0
    %s19 = scalar_lea.sflag [#allocation6], 1
    %20 = vsyncpa %s19, 0
    loop: start=0, step=1, limit=4
    $region2: #{tpu_custom_call.1} parent=1 // loop_pre_header
      _
    $region3: #{tpu_custom_call.1} parent=1 // loop_header
      %s22 = sphi 0, %s26
      %p23 = scmp.ge.s32.totalorder %s22, 4
      %s32 = sphi 0, %s34
      %s35 = sphi 0, %s32
      %s36 = sphi 0, %s35
      %s52 = sphi 0, %s36
      %s56 = sphi 0, %s56
      %s58 = sphi 0, %s56
      %s59 = sphi 0, %s58
      %s73 = sphi 0, %s59
      %s77 = sphi 0, %s77
      %s79 = sphi 0, %s77
      %s80 = sphi 0, %s79
      %s94 = sphi 0, %s80
      %s98 = sphi 0, %s98
      %s100 = sphi 0, %s98
      %s101 = sphi 0, %s100
      %s115 = sphi 0, %s101
      %s119 = sphi 0, %s119
      %s121 = sphi 0, %s119
      %s122 = sphi 0, %s121
      %s136 = sphi 0, %s122
      %s140 = sphi 0, %s140
      %s142 = sphi 0, %s140
      %s143 = sphi 0, %s142
      %s157 = sphi 0, %s143
      %s161 = sphi 0, %s161
      %s163 = sphi 0, %s161
      %s164 = sphi 0, %s163
      %s178 = sphi 0, %s164
      %s184 = sphi 0, %s186
      %s187 = sphi 0, %s184
      %s188 = sphi 0, %s187
      %s204 = sphi 0, %s188
    $region4: #{tpu_custom_call.1} parent=1 // loop_header_branch
      %25 = sbr.rel (%p23) target = $region8
    $region5: #{tpu_custom_call.1} parent=1 // loop_body
      %s27 = ssub.s32 %s22, 1
      %s28 = ssub.s32 %s22, 2
      %s29 = sadd.s32 %s22, 1
      %s30 = ssub.s32 %s22, %s29
      %p31 = scmp.eq.s32.totalorder %s30, 0
      %s33 = sadd.s32 %s32, 1
      %s34 = scalar_select %p31, %s32, %s33
      %p37 = pneg %p31
      %p38 = scmp.eq.s32.totalorder %s22, 1
      %p39 = por %p37, %p38
      %p40 = scmp.ne.s32.totalorder %s32, %s35
      %p41 = scmp.eq.s32.totalorder %s22, 0
      %p42 = por %p40, %p41
      %p43 = scmp.ne.s32.totalorder %s32, %s35
      %p44 = scmp.eq.s32.totalorder %s27, 1
      %p45 = por %p43, %p44
      %p46 = scmp.ne.s32.totalorder %s35, %s36
      %p47 = scmp.eq.s32.totalorder %s27, 0
      %p48 = por %p46, %p47
      %p49 = scmp.ne.s32.totalorder %s35, %s36
      %p50 = scmp.eq.s32.totalorder %s28, 1
      %p51 = por %p49, %p50
      %p53 = scmp.ne.s32.totalorder %s36, %s52
      %p54 = scmp.eq.s32.totalorder %s28, 0
      %p55 = por %p53, %p54
      %s57 = sadd.s32 %s56, 1
      %p60 = scmp.eq.s32.totalorder %s22, 1
      %p61 = scmp.ne.s32.totalorder %s56, %s58
      %p62 = scmp.eq.s32.totalorder %s22, 0
      %p63 = por %p61, %p62
      %p64 = scmp.ne.s32.totalorder %s56, %s58
      %p65 = scmp.eq.s32.totalorder %s27, 1
      %p66 = por %p64, %p65
      %p67 = scmp.ne.s32.totalorder %s58, %s59
      %p68 = scmp.eq.s32.totalorder %s27, 0
      %p69 = por %p67, %p68
      %p70 = scmp.ne.s32.totalorder %s58, %s59
      %p71 = scmp.eq.s32.totalorder %s28, 1
      %p72 = por %p70, %p71
      %p74 = scmp.ne.s32.totalorder %s59, %s73
      %p75 = scmp.eq.s32.totalorder %s28, 0
      %p76 = por %p74, %p75
      %s78 = sadd.s32 %s77, 1
      %p81 = scmp.eq.s32.totalorder %s22, 1
      %p82 = scmp.ne.s32.totalorder %s77, %s79
      %p83 = scmp.eq.s32.totalorder %s22, 0
      %p84 = por %p82, %p83
      %p85 = scmp.ne.s32.totalorder %s77, %s79
      %p86 = scmp.eq.s32.totalorder %s27, 1
      %p87 = por %p85, %p86
      %p88 = scmp.ne.s32.totalorder %s79, %s80
      %p89 = scmp.eq.s32.totalorder %s27, 0
      %p90 = por %p88, %p89
      %p91 = scmp.ne.s32.totalorder %s79, %s80
      %p92 = scmp.eq.s32.totalorder %s28, 1
      %p93 = por %p91, %p92
      %p95 = scmp.ne.s32.totalorder %s80, %s94
      %p96 = scmp.eq.s32.totalorder %s28, 0
      %p97 = por %p95, %p96
      %s99 = sadd.s32 %s98, 1
      %p102 = scmp.eq.s32.totalorder %s22, 1
      %p103 = scmp.ne.s32.totalorder %s98, %s100
      %p104 = scmp.eq.s32.totalorder %s22, 0
      %p105 = por %p103, %p104
      %p106 = scmp.ne.s32.totalorder %s98, %s100
      %p107 = scmp.eq.s32.totalorder %s27, 1
      %p108 = por %p106, %p107
      %p109 = scmp.ne.s32.totalorder %s100, %s101
      %p110 = scmp.eq.s32.totalorder %s27, 0
      %p111 = por %p109, %p110
      %p112 = scmp.ne.s32.totalorder %s100, %s101
      %p113 = scmp.eq.s32.totalorder %s28, 1
      %p114 = por %p112, %p113
      %p116 = scmp.ne.s32.totalorder %s101, %s115
      %p117 = scmp.eq.s32.totalorder %s28, 0
      %p118 = por %p116, %p117
      %s120 = sadd.s32 %s119, 1
      %p123 = scmp.eq.s32.totalorder %s22, 1
      %p124 = scmp.ne.s32.totalorder %s119, %s121
      %p125 = scmp.eq.s32.totalorder %s22, 0
      %p126 = por %p124, %p125
      %p127 = scmp.ne.s32.totalorder %s119, %s121
      %p128 = scmp.eq.s32.totalorder %s27, 1
      %p129 = por %p127, %p128
      %p130 = scmp.ne.s32.totalorder %s121, %s122
      %p131 = scmp.eq.s32.totalorder %s27, 0
      %p132 = por %p130, %p131
      %p133 = scmp.ne.s32.totalorder %s121, %s122
      %p134 = scmp.eq.s32.totalorder %s28, 1
      %p135 = por %p133, %p134
      %p137 = scmp.ne.s32.totalorder %s122, %s136
      %p138 = scmp.eq.s32.totalorder %s28, 0
      %p139 = por %p137, %p138
      %s141 = sadd.s32 %s140, 1
      %p144 = scmp.eq.s32.totalorder %s22, 1
      %p145 = scmp.ne.s32.totalorder %s140, %s142
      %p146 = scmp.eq.s32.totalorder %s22, 0
      %p147 = por %p145, %p146
      %p148 = scmp.ne.s32.totalorder %s140, %s142
      %p149 = scmp.eq.s32.totalorder %s27, 1
      %p150 = por %p148, %p149
      %p151 = scmp.ne.s32.totalorder %s142, %s143
      %p152 = scmp.eq.s32.totalorder %s27, 0
      %p153 = por %p151, %p152
      %p154 = scmp.ne.s32.totalorder %s142, %s143
      %p155 = scmp.eq.s32.totalorder %s28, 1
      %p156 = por %p154, %p155
      %p158 = scmp.ne.s32.totalorder %s143, %s157
      %p159 = scmp.eq.s32.totalorder %s28, 0
      %p160 = por %p158, %p159
      %s162 = sadd.s32 %s161, 1
      %p165 = scmp.eq.s32.totalorder %s22, 1
      %p166 = scmp.ne.s32.totalorder %s161, %s163
      %p167 = scmp.eq.s32.totalorder %s22, 0
      %p168 = por %p166, %p167
      %p169 = scmp.ne.s32.totalorder %s161, %s163
      %p170 = scmp.eq.s32.totalorder %s27, 1
      %p171 = por %p169, %p170
      %p172 = scmp.ne.s32.totalorder %s163, %s164
      %p173 = scmp.eq.s32.totalorder %s27, 0
      %p174 = por %p172, %p173
      %p175 = scmp.ne.s32.totalorder %s163, %s164
      %p176 = scmp.eq.s32.totalorder %s28, 1
      %p177 = por %p175, %p176
      %p179 = scmp.ne.s32.totalorder %s164, %s178
      %p180 = scmp.eq.s32.totalorder %s28, 0
      %p181 = por %p179, %p180
      %s182 = ssub.s32 %s22, %s29
      %p183 = scmp.eq.s32.totalorder %s182, 0
      %s185 = sadd.s32 %s184, 1
      %s186 = scalar_select %p183, %s184, %s185
      %p189 = pneg %p183
      %p190 = scmp.eq.s32.totalorder %s22, 1
      %p191 = por %p189, %p190
      %p192 = scmp.ne.s32.totalorder %s184, %s187
      %p193 = scmp.eq.s32.totalorder %s22, 0
      %p194 = por %p192, %p193
      %p195 = scmp.ne.s32.totalorder %s184, %s187
      %p196 = scmp.eq.s32.totalorder %s27, 1
      %p197 = por %p195, %p196
      %p198 = scmp.ne.s32.totalorder %s187, %s188
      %p199 = scmp.eq.s32.totalorder %s27, 0
      %p200 = por %p198, %p199
      %p201 = scmp.ne.s32.totalorder %s187, %s188
      %p202 = scmp.eq.s32.totalorder %s28, 1
      %p203 = por %p201, %p202
      %p205 = scmp.ne.s32.totalorder %s188, %s204
      %p206 = scmp.eq.s32.totalorder %s28, 0
      %p207 = por %p205, %p206
      %p208 = scmp.le.s32.totalorder 1, %s22
      %p209 = scmp.lt.s32.totalorder %s22, 3
      %p210 = pnand %p208, %p209
      %p211 = pneg %p210
      // Predicated region
      $region9: #{tpu_custom_call.1} parent=5 // pred_check
        _
      $region10: #{tpu_custom_call.1} parent=5 // pred_check_branch
        %213 = sbr.rel (%p210) target = $region12
      $region11: #{tpu_custom_call.1} parent=5 // pred_region
        %s214 = ssub.s32 %s22, 1
        // Predicated region
        $region13: #{tpu_custom_call.1} parent=11 // pred_check
          %p215 = pneg %p69
        $region14: #{tpu_custom_call.1} parent=11 // pred_check_branch
          %217 = sbr.rel (%p215) target = $region16
        $region15: #{tpu_custom_call.1} parent=11 // pred_region
          %s219 = ssub.s32 98304, 98304
          %220 = vsyncadd [#allocation8], %s219
          %s221 = sshll.u32 [#allocation7], 4
          %s222 = int_to_ptr.vmem [resolvable:$true] %s221
          %227 = dma.hbm_to_vmem [thread:$0]  %s1, 98304, %s222, [#allocation8], 512, 512, 32
        $region16: #{tpu_custom_call.1} parent=11 // pred_fallthru
          _
        // Predicated region
        $region17: #{tpu_custom_call.1} parent=11 // pred_check
          %p228 = pneg %p90
        $region18: #{tpu_custom_call.1} parent=11 // pred_check_branch
          %230 = sbr.rel (%p228) target = $region20
        $region19: #{tpu_custom_call.1} parent=11 // pred_region
          %s232 = ssub.s32 64, 64
          %233 = vsyncadd [#allocation8], %s232
          %s235 = sshll.u32 [#allocation9], 4
          %s236 = int_to_ptr.vmem [resolvable:$true] %s235
          %238 = dma.hbm_to_vmem [thread:$0]  %s2, 64, %s236, [#allocation8]
        $region20: #{tpu_custom_call.1} parent=11 // pred_fallthru
          _
        // Predicated region
        $region21: #{tpu_custom_call.1} parent=11 // pred_check
          %p239 = pneg %p111
        $region22: #{tpu_custom_call.1} parent=11 // pred_check_branch
          %241 = sbr.rel (%p239) target = $region24
        $region23: #{tpu_custom_call.1} parent=11 // pred_region
          %s243 = ssub.s32 64, 64
          %244 = vsyncadd [#allocation11], %s243
          %s246 = sshll.u32 [#allocation10], 4
          %s247 = int_to_ptr.vmem [resolvable:$true] %s246
          %249 = dma.hbm_to_vmem [thread:$0]  %s3, 64, %s247, [#allocation11]
        $region24: #{tpu_custom_call.1} parent=11 // pred_fallthru
          _
        // Predicated region
        $region25: #{tpu_custom_call.1} parent=11 // pred_check
          %p250 = pneg %p132
        $region26: #{tpu_custom_call.1} parent=11 // pred_check_branch
          %252 = sbr.rel (%p250) target = $region28
        $region27: #{tpu_custom_call.1} parent=11 // pred_region
          %s254 = ssub.s32 98304, 98304
          %255 = vsyncadd [#allocation11], %s254
          %s256 = sshll.u32 [#allocation12], 4
          %s257 = int_to_ptr.vmem [resolvable:$true] %s256
          %262 = dma.hbm_to_vmem [thread:$0]  %s4, 98304, %s257, [#allocation11], 512, 512, 32
        $region28: #{tpu_custom_call.1} parent=11 // pred_fallthru
          _
        // Predicated region
        $region29: #{tpu_custom_call.1} parent=11 // pred_check
          %p263 = pneg %p153
        $region30: #{tpu_custom_call.1} parent=11 // pred_check_branch
          %265 = sbr.rel (%p263) target = $region32
        $region31: #{tpu_custom_call.1} parent=11 // pred_region
          %s267 = ssub.s32 64, 64
          %268 = vsyncadd [#allocation14], %s267
          %s270 = sshll.u32 [#allocation13], 4
          %s271 = int_to_ptr.vmem [resolvable:$true] %s270
          %273 = dma.hbm_to_vmem [thread:$0]  %s5, 64, %s271, [#allocation14]
        $region32: #{tpu_custom_call.1} parent=11 // pred_fallthru
          _
        // Predicated region
        $region33: #{tpu_custom_call.1} parent=11 // pred_check
          %p274 = pneg %p174
        $region34: #{tpu_custom_call.1} parent=11 // pred_check_branch
          %276 = sbr.rel (%p274) target = $region36
        $region35: #{tpu_custom_call.1} parent=11 // pred_region
          %s278 = ssub.s32 64, 64
          %279 = vsyncadd [#allocation14], %s278
          %s281 = sshll.u32 [#allocation15], 4
          %s282 = int_to_ptr.vmem [resolvable:$true] %s281
          %284 = dma.hbm_to_vmem [thread:$0]  %s6, 64, %s282, [#allocation14]
        $region36: #{tpu_custom_call.1} parent=11 // pred_fallthru
          _
      $region12: #{tpu_custom_call.1} parent=5 // pred_fallthru
        _
      %p285 = scmp.lt.s32.totalorder %s22, 2
      // Predicated region
      $region37: #{tpu_custom_call.1} parent=5 // pred_check
        %p286 = pneg %p285
      $region38: #{tpu_custom_call.1} parent=5 // pred_check_branch
        %288 = sbr.rel (%p286) target = $region40
      $region39: #{tpu_custom_call.1} parent=5 // pred_region
        // Predicated region
        $region41: #{tpu_custom_call.1} parent=39 // pred_check
          %p289 = pneg %p42
        $region42: #{tpu_custom_call.1} parent=39 // pred_check_branch
          %291 = sbr.rel (%p289) target = $region44
        $region43: #{tpu_custom_call.1} parent=39 // pred_region
          %s292 = sand.u32 %s32, 1
          %s293 = scalar_lea.sflag [#allocation5], %s292
          %s294 = sand.u32 %s32, 1
          %s295 = smul.addr %s294, 64
          %s296 = scalar_lea.vmem [#allocation4], %s295
          %s297 = smul.u32 2, %s22
          %s299 = ssub.s32 1024, 1024
          %300 = vsyncadd %s293, %s299
          %s301 = smul.addr %s297, 4
          %s302 = smul.addr %s301, 128
          %s303 = scalar_lea.hbm %s0, %s302
          %s304 = sshll.u32 %s296, 4
          %s305 = int_to_ptr.vmem [resolvable:$true] %s304
          %310 = dma.hbm_to_vmem [thread:$0]  %s303, 1024, %s305, %s293, 512, 512, 32
        $region44: #{tpu_custom_call.1} parent=39 // pred_fallthru
          _
      $region40: #{tpu_custom_call.1} parent=5 // pred_fallthru
        _
      %p311 = scmp.le.s32.totalorder 1, %s22
      %p312 = scmp.lt.s32.totalorder %s22, 3
      %p313 = pnand %p311, %p312
      %p314 = pneg %p313
      // Predicated region
      $region45: #{tpu_custom_call.1} parent=5 // pred_check
        _
      $region46: #{tpu_custom_call.1} parent=5 // pred_check_branch
        %316 = sbr.rel (%p313) target = $region48
      $region47: #{tpu_custom_call.1} parent=5 // pred_region
        %s317 = ssub.s32 %s22, 1
        %s318 = sand.u32 %s35, 1
        %s319 = scalar_lea.sflag [#allocation5], %s318
        %s320 = sand.u32 %s35, 1
        %s321 = smul.addr %s320, 64
        %s322 = scalar_lea.vmem [#allocation4], %s321
        // Predicated region
        $region49: #{tpu_custom_call.1} parent=47 // pred_check
          %p323 = pneg %p48
        $region50: #{tpu_custom_call.1} parent=47 // pred_check_branch
          %325 = sbr.rel (%p323) target = $region52
        $region51: #{tpu_custom_call.1} parent=47 // pred_region
          %326 = dma.done %s319, 1024
        $region52: #{tpu_custom_call.1} parent=47 // pred_fallthru
          _
        // Predicated region
        $region53: #{tpu_custom_call.1} parent=47 // pred_check
          %p327 = pneg %p69
        $region54: #{tpu_custom_call.1} parent=47 // pred_check_branch
          %329 = sbr.rel (%p327) target = $region56
        $region55: #{tpu_custom_call.1} parent=47 // pred_region
          %330 = dma.done [#allocation8], 98304
        $region56: #{tpu_custom_call.1} parent=47 // pred_fallthru
          _
        // Predicated region
        $region57: #{tpu_custom_call.1} parent=47 // pred_check
          %p331 = pneg %p90
        $region58: #{tpu_custom_call.1} parent=47 // pred_check_branch
          %333 = sbr.rel (%p331) target = $region60
        $region59: #{tpu_custom_call.1} parent=47 // pred_region
          %334 = dma.done [#allocation8], 64
        $region60: #{tpu_custom_call.1} parent=47 // pred_fallthru
          _
        // Predicated region
        $region61: #{tpu_custom_call.1} parent=47 // pred_check
          %p335 = pneg %p111
        $region62: #{tpu_custom_call.1} parent=47 // pred_check_branch
          %337 = sbr.rel (%p335) target = $region64
        $region63: #{tpu_custom_call.1} parent=47 // pred_region
          %338 = dma.done [#allocation11], 64
        $region64: #{tpu_custom_call.1} parent=47 // pred_fallthru
          _
        // Predicated region
        $region65: #{tpu_custom_call.1} parent=47 // pred_check
          %p339 = pneg %p132
        $region66: #{tpu_custom_call.1} parent=47 // pred_check_branch
          %341 = sbr.rel (%p339) target = $region68
        $region67: #{tpu_custom_call.1} parent=47 // pred_region
          %342 = dma.done [#allocation11], 98304
        $region68: #{tpu_custom_call.1} parent=47 // pred_fallthru
          _
        // Predicated region
        $region69: #{tpu_custom_call.1} parent=47 // pred_check
          %p343 = pneg %p153
        $region70: #{tpu_custom_call.1} parent=47 // pred_check_branch
          %345 = sbr.rel (%p343) target = $region72
        $region71: #{tpu_custom_call.1} parent=47 // pred_region
          %346 = dma.done [#allocation14], 64
        $region72: #{tpu_custom_call.1} parent=47 // pred_fallthru
          _
        // Predicated region
        $region73: #{tpu_custom_call.1} parent=47 // pred_check
          %p347 = pneg %p174
        $region74: #{tpu_custom_call.1} parent=47 // pred_check_branch
          %349 = sbr.rel (%p347) target = $region76
        $region75: #{tpu_custom_call.1} parent=47 // pred_region
          %350 = dma.done [#allocation14], 64
        $region76: #{tpu_custom_call.1} parent=47 // pred_fallthru
          _
        %s351 = sand.u32 %s35, 1
        %s352 = scalar_lea.sflag [#allocation5], %s351
        %s353 = sand.u32 %s35, 1
        %s354 = smul.addr %s353, 64
        %s355 = scalar_lea.vmem [#allocation4], %s354
        %p356 = pneg %p48
        %p357 = pneg %p45
        %p358 = pneg %p69
        %p359 = pneg %p66
        %p360 = pneg %p90
        %p361 = pneg %p87
        %p362 = pneg %p111
        %p363 = pneg %p108
        %p364 = pneg %p132
        %p365 = pneg %p129
        %p366 = pneg %p153
        %p367 = pneg %p150
        %p368 = pneg %p174
        %p369 = pneg %p171
        %p370 = pneg %p200
        %p371 = pneg %p197
        %s372 = sand.u32 %s187, 1
        %s373 = scalar_lea.sflag [#allocation6], %s372
        %s374 = sand.u32 %s187, 1
        %s375 = smul.addr %s374, 64
        %s376 = scalar_lea.vmem [#allocation16], %s375
        %s377 = smul.u32 2, %s27
        %s378 = smul.u32 2, %s27
        %v379 = vld [vmem:[%s322] sm:$0xff]
        %v380 = vld [vmem:[%s322 + $0x8] sm:$0xff]
        %v381 = vld [vmem:[%s322 + $0x10] sm:$0xff]
        %v382 = vld [vmem:[%s322 + $0x18] sm:$0xff]
        %v383 = vld [vmem:[%s322 + $0x20] sm:$0xff]
        %v384 = vld [vmem:[%s322 + $0x28] sm:$0xff]
        %v385 = vld [vmem:[%s322 + $0x30] sm:$0xff]
        %v386 = vld [vmem:[%s322 + $0x38] sm:$0xff]
        %v387 = vlaneseq
        %vm388 = vcmp.ge.s32.totalorder %v387, 0
        %vm389 = vcmp.lt.s32.totalorder %v387, 512
        %vm390 = vmand %vm388, %vm389
        %391 = vst.msk [vmem:[#allocation2] ss:$8 sm:$0xf] %vm390, 0.0
        %392 = vst.msk [vmem:[#allocation2] ss:$8 sm:$0x0] %vm390, 0.0
        %s393 = scalar_lea.vmem [#allocation2], 64
        %394 = vst.msk [vmem:[%s393] ss:$8 sm:$0xf] %vm390, 0.0
        %395 = vst.msk [vmem:[%s393] ss:$8 sm:$0x0] %vm390, 0.0
        %s396 = scalar_lea.vmem [#allocation2], 33
        %397 = vst.msk [vmem:[%s396] ss:$8 sm:$0xf] %vm390, 0.0
        %398 = vst.msk [vmem:[%s396] ss:$8 sm:$0x0] %vm390, 0.0
        %s399 = scalar_lea.vmem [#allocation2], 97
        %400 = vst.msk [vmem:[%s399] ss:$8 sm:$0xf] %vm390, 0.0
        %401 = vst.msk [vmem:[%s399] ss:$8 sm:$0x0] %vm390, 0.0
        %402 = vst.msk [vmem:[#allocation3] ss:$8 sm:$0xf] %vm390, 0.0
        %403 = vst.msk [vmem:[#allocation3] ss:$8 sm:$0x0] %vm390, 0.0
        %s404 = scalar_lea.vmem [#allocation3], 64
        %405 = vst.msk [vmem:[%s404] ss:$8 sm:$0xf] %vm390, 0.0
        %406 = vst.msk [vmem:[%s404] ss:$8 sm:$0x0] %vm390, 0.0
        %s407 = scalar_lea.vmem [#allocation3], 33
        %408 = vst.msk [vmem:[%s407] ss:$8 sm:$0xf] %vm390, 0.0
        %409 = vst.msk [vmem:[%s407] ss:$8 sm:$0x0] %vm390, 0.0
        %s410 = scalar_lea.vmem [#allocation3], 97
        %411 = vst.msk [vmem:[%s410] ss:$8 sm:$0xf] %vm390, 0.0
        %412 = vst.msk [vmem:[%s410] ss:$8 sm:$0x0] %vm390, 0.0
        %v421 = vrot.slane %v379, 7
        %v422 = vrot.slane %v380, 7
        %v423 = vrot.slane %v381, 7
        %v424 = vrot.slane %v382, 7
        %v425 = vrot.slane %v383, 7
        %v426 = vrot.slane %v384, 7
        %v427 = vrot.slane %v385, 7
        %v428 = vrot.slane %v386, 7
        %437 = vst [vmem:[#allocation2] sm:$0xfe] %v421
        %438 = vst [vmem:[#allocation2 + $0x8] sm:$0xfe] %v422
        %439 = vst [vmem:[#allocation2 + $0x10] sm:$0xfe] %v423
        %440 = vst [vmem:[#allocation2 + $0x18] sm:$0xfe] %v424
        %441 = vst [vmem:[#allocation2 + $0x20] sm:$0x1] %v421
        %442 = vst [vmem:[#allocation2 + $0x28] sm:$0x1] %v422
        %443 = vst [vmem:[#allocation2 + $0x30] sm:$0x1] %v423
        %444 = vst [vmem:[#allocation2 + $0x38] sm:$0x1] %v424
        %445 = vst [vmem:[#allocation2 + $0x40] sm:$0xfe] %v425
        %446 = vst [vmem:[#allocation2 + $0x48] sm:$0xfe] %v426
        %447 = vst [vmem:[#allocation2 + $0x50] sm:$0xfe] %v427
        %448 = vst [vmem:[#allocation2 + $0x58] sm:$0xfe] %v428
        %449 = vst [vmem:[#allocation2 + $0x60] sm:$0x1] %v425
        %450 = vst [vmem:[#allocation2 + $0x68] sm:$0x1] %v426
        %451 = vst [vmem:[#allocation2 + $0x70] sm:$0x1] %v427
        %452 = vst [vmem:[#allocation2 + $0x78] sm:$0x1] %v428
        %v453 = vld [vmem:[#allocation2] sm:$0xff]
        %v454 = vld [vmem:[#allocation2 + $0x8] sm:$0xff]
        %v455 = vld [vmem:[#allocation2 + $0x10] sm:$0xff]
        %v456 = vld [vmem:[#allocation2 + $0x18] sm:$0xff]
        %v457 = vld [vmem:[#allocation2 + $0x40] sm:$0xff]
        %v458 = vld [vmem:[#allocation2 + $0x48] sm:$0xff]
        %v459 = vld [vmem:[#allocation2 + $0x50] sm:$0xff]
        %v460 = vld [vmem:[#allocation2 + $0x58] sm:$0xff]
        %v461 = vld [vmem:[#allocation7] sm:$0xff]
        %v462 = vld [vmem:[#allocation7 + $0x8] sm:$0xff]
        %v463 = vld [vmem:[#allocation7 + $0x10] sm:$0xff]
        %v464 = vld [vmem:[#allocation7 + $0x18] sm:$0xff]
        %v465 = vld [vmem:[#allocation7 + $0x20] sm:$0xff]
        %v466 = vld [vmem:[#allocation7 + $0x28] sm:$0xff]
        %v467 = vld [vmem:[#allocation7 + $0x30] sm:$0xff]
        %v468 = vld [vmem:[#allocation7 + $0x38] sm:$0xff]
        %v469 = vld [vmem:[#allocation7 + $0x40] sm:$0xff]
        %v470 = vld [vmem:[#allocation7 + $0x48] sm:$0xff]
        %v471 = vld [vmem:[#allocation7 + $0x50] sm:$0xff]
        %v472 = vld [vmem:[#allocation7 + $0x58] sm:$0xff]
        %v473 = vld [vmem:[#allocation7 + $0x60] sm:$0xff]
        %v474 = vld [vmem:[#allocation7 + $0x68] sm:$0xff]
        %v475 = vld [vmem:[#allocation7 + $0x70] sm:$0xff]
        %v476 = vld [vmem:[#allocation7 + $0x78] sm:$0xff]
        %v477 = vld [vmem:[#allocation7 + $0x80] sm:$0xff]
        %v478 = vld [vmem:[#allocation7 + $0x88] sm:$0xff]
        %v479 = vld [vmem:[#allocation7 + $0x90] sm:$0xff]
        %v480 = vld [vmem:[#allocation7 + $0x98] sm:$0xff]
        %v481 = vld [vmem:[#allocation7 + $0xa0] sm:$0xff]
        %v482 = vld [vmem:[#allocation7 + $0xa8] sm:$0xff]
        %v483 = vld [vmem:[#allocation7 + $0xb0] sm:$0xff]
        %v484 = vld [vmem:[#allocation7 + $0xb8] sm:$0xff]
        %v485 = vld [vmem:[#allocation7 + $0xc0] sm:$0xff]
        %v486 = vld [vmem:[#allocation7 + $0xc8] sm:$0xff]
        %v487 = vld [vmem:[#allocation7 + $0xd0] sm:$0xff]
        %v488 = vld [vmem:[#allocation7 + $0xd8] sm:$0xff]
        %v489 = vld [vmem:[#allocation7 + $0xe0] sm:$0xff]
        %v490 = vld [vmem:[#allocation7 + $0xe8] sm:$0xff]
        %v491 = vld [vmem:[#allocation7 + $0xf0] sm:$0xff]
        %v492 = vld [vmem:[#allocation7 + $0xf8] sm:$0xff]
        %v493 = vld [vmem:[#allocation7 + $0x100] sm:$0xff]
        %v494 = vld [vmem:[#allocation7 + $0x108] sm:$0xff]
        %v495 = vld [vmem:[#allocation7 + $0x110] sm:$0xff]
        %v496 = vld [vmem:[#allocation7 + $0x118] sm:$0xff]
        %v497 = vld [vmem:[#allocation7 + $0x120] sm:$0xff]
        %v498 = vld [vmem:[#allocation7 + $0x128] sm:$0xff]
        %v499 = vld [vmem:[#allocation7 + $0x130] sm:$0xff]
        %v500 = vld [vmem:[#allocation7 + $0x138] sm:$0xff]
        %v501 = vld [vmem:[#allocation7 + $0x140] sm:$0xff]
        %v502 = vld [vmem:[#allocation7 + $0x148] sm:$0xff]
        %v503 = vld [vmem:[#allocation7 + $0x150] sm:$0xff]
        %v504 = vld [vmem:[#allocation7 + $0x158] sm:$0xff]
        %v505 = vld [vmem:[#allocation7 + $0x160] sm:$0xff]
        %v506 = vld [vmem:[#allocation7 + $0x168] sm:$0xff]
        %v507 = vld [vmem:[#allocation7 + $0x170] sm:$0xff]
        %v508 = vld [vmem:[#allocation7 + $0x178] sm:$0xff]
        %v509 = vld [vmem:[#allocation7 + $0x180] sm:$0xff]
        %v510 = vld [vmem:[#allocation7 + $0x188] sm:$0xff]
        %v511 = vld [vmem:[#allocation7 + $0x190] sm:$0xff]
        %v512 = vld [vmem:[#allocation7 + $0x198] sm:$0xff]
        %v513 = vld [vmem:[#allocation7 + $0x1a0] sm:$0xff]
        %v514 = vld [vmem:[#allocation7 + $0x1a8] sm:$0xff]
        %v515 = vld [vmem:[#allocation7 + $0x1b0] sm:$0xff]
        %v516 = vld [vmem:[#allocation7 + $0x1b8] sm:$0xff]
        %v517 = vld [vmem:[#allocation7 + $0x1c0] sm:$0xff]
        %v518 = vld [vmem:[#allocation7 + $0x1c8] sm:$0xff]
        %v519 = vld [vmem:[#allocation7 + $0x1d0] sm:$0xff]
        %v520 = vld [vmem:[#allocation7 + $0x1d8] sm:$0xff]
        %v521 = vld [vmem:[#allocation7 + $0x1e0] sm:$0xff]
        %v522 = vld [vmem:[#allocation7 + $0x1e8] sm:$0xff]
        %v523 = vld [vmem:[#allocation7 + $0x1f0] sm:$0xff]
        %v524 = vld [vmem:[#allocation7 + $0x1f8] sm:$0xff]
        %v525 = vld [vmem:[#allocation7 + $0x200] sm:$0xff]
        %v526 = vld [vmem:[#allocation7 + $0x208] sm:$0xff]
        %v527 = vld [vmem:[#allocation7 + $0x210] sm:$0xff]
        %v528 = vld [vmem:[#allocation7 + $0x218] sm:$0xff]
        %v529 = vld [vmem:[#allocation7 + $0x220] sm:$0xff]
        %v530 = vld [vmem:[#allocation7 + $0x228] sm:$0xff]
        %v531 = vld [vmem:[#allocation7 + $0x230] sm:$0xff]
        %v532 = vld [vmem:[#allocation7 + $0x238] sm:$0xff]
        %v533 = vld [vmem:[#allocation7 + $0x240] sm:$0xff]
        %v534 = vld [vmem:[#allocation7 + $0x248] sm:$0xff]
        %v535 = vld [vmem:[#allocation7 + $0x250] sm:$0xff]
        %v536 = vld [vmem:[#allocation7 + $0x258] sm:$0xff]
        %v537 = vld [vmem:[#allocation7 + $0x260] sm:$0xff]
        %v538 = vld [vmem:[#allocation7 + $0x268] sm:$0xff]
        %v539 = vld [vmem:[#allocation7 + $0x270] sm:$0xff]
        %v540 = vld [vmem:[#allocation7 + $0x278] sm:$0xff]
        %v541 = vld [vmem:[#allocation7 + $0x280] sm:$0xff]
        %v542 = vld [vmem:[#allocation7 + $0x288] sm:$0xff]
        %v543 = vld [vmem:[#allocation7 + $0x290] sm:$0xff]
        %v544 = vld [vmem:[#allocation7 + $0x298] sm:$0xff]
        %v545 = vld [vmem:[#allocation7 + $0x2a0] sm:$0xff]
        %v546 = vld [vmem:[#allocation7 + $0x2a8] sm:$0xff]
        %v547 = vld [vmem:[#allocation7 + $0x2b0] sm:$0xff]
        %v548 = vld [vmem:[#allocation7 + $0x2b8] sm:$0xff]
        %v549 = vld [vmem:[#allocation7 + $0x2c0] sm:$0xff]
        %v550 = vld [vmem:[#allocation7 + $0x2c8] sm:$0xff]
        %v551 = vld [vmem:[#allocation7 + $0x2d0] sm:$0xff]
        %v552 = vld [vmem:[#allocation7 + $0x2d8] sm:$0xff]
        %v553 = vld [vmem:[#allocation7 + $0x2e0] sm:$0xff]
        %v554 = vld [vmem:[#allocation7 + $0x2e8] sm:$0xff]
        %v555 = vld [vmem:[#allocation7 + $0x2f0] sm:$0xff]
        %v556 = vld [vmem:[#allocation7 + $0x2f8] sm:$0xff]
        %v557 = vld [vmem:[#allocation7 + $0x300] sm:$0xff]
        %v558 = vld [vmem:[#allocation7 + $0x308] sm:$0xff]
        %v559 = vld [vmem:[#allocation7 + $0x310] sm:$0xff]
        %v560 = vld [vmem:[#allocation7 + $0x318] sm:$0xff]
        %v561 = vld [vmem:[#allocation7 + $0x320] sm:$0xff]
        %v562 = vld [vmem:[#allocation7 + $0x328] sm:$0xff]
        %v563 = vld [vmem:[#allocation7 + $0x330] sm:$0xff]
        %v564 = vld [vmem:[#allocation7 + $0x338] sm:$0xff]
        %v565 = vld [vmem:[#allocation7 + $0x340] sm:$0xff]
        %v566 = vld [vmem:[#allocation7 + $0x348] sm:$0xff]
        %v567 = vld [vmem:[#allocation7 + $0x350] sm:$0xff]
        %v568 = vld [vmem:[#allocation7 + $0x358] sm:$0xff]
        %v569 = vld [vmem:[#allocation7 + $0x360] sm:$0xff]
        %v570 = vld [vmem:[#allocation7 + $0x368] sm:$0xff]
        %v571 = vld [vmem:[#allocation7 + $0x370] sm:$0xff]
        %v572 = vld [vmem:[#allocation7 + $0x378] sm:$0xff]
        %v573 = vld [vmem:[#allocation7 + $0x380] sm:$0xff]
        %v574 = vld [vmem:[#allocation7 + $0x388] sm:$0xff]
        %v575 = vld [vmem:[#allocation7 + $0x390] sm:$0xff]
        %v576 = vld [vmem:[#allocation7 + $0x398] sm:$0xff]
        %v577 = vld [vmem:[#allocation7 + $0x3a0] sm:$0xff]
        %v578 = vld [vmem:[#allocation7 + $0x3a8] sm:$0xff]
        %v579 = vld [vmem:[#allocation7 + $0x3b0] sm:$0xff]
        %v580 = vld [vmem:[#allocation7 + $0x3b8] sm:$0xff]
        %v581 = vld [vmem:[#allocation7 + $0x3c0] sm:$0xff]
        %v582 = vld [vmem:[#allocation7 + $0x3c8] sm:$0xff]
        %v583 = vld [vmem:[#allocation7 + $0x3d0] sm:$0xff]
        %v584 = vld [vmem:[#allocation7 + $0x3d8] sm:$0xff]
        %v585 = vld [vmem:[#allocation7 + $0x3e0] sm:$0xff]
        %v586 = vld [vmem:[#allocation7 + $0x3e8] sm:$0xff]
        %v587 = vld [vmem:[#allocation7 + $0x3f0] sm:$0xff]
        %v588 = vld [vmem:[#allocation7 + $0x3f8] sm:$0xff]
        %v589 = vld [vmem:[#allocation7 + $0x400] sm:$0xff]
        %v590 = vld [vmem:[#allocation7 + $0x408] sm:$0xff]
        %v591 = vld [vmem:[#allocation7 + $0x410] sm:$0xff]
        %v592 = vld [vmem:[#allocation7 + $0x418] sm:$0xff]
        %v593 = vld [vmem:[#allocation7 + $0x420] sm:$0xff]
        %v594 = vld [vmem:[#allocation7 + $0x428] sm:$0xff]
        %v595 = vld [vmem:[#allocation7 + $0x430] sm:$0xff]
        %v596 = vld [vmem:[#allocation7 + $0x438] sm:$0xff]
        %v597 = vld [vmem:[#allocation7 + $0x440] sm:$0xff]
        %v598 = vld [vmem:[#allocation7 + $0x448] sm:$0xff]
        %v599 = vld [vmem:[#allocation7 + $0x450] sm:$0xff]
        %v600 = vld [vmem:[#allocation7 + $0x458] sm:$0xff]
        %v601 = vld [vmem:[#allocation7 + $0x460] sm:$0xff]
        %v602 = vld [vmem:[#allocation7 + $0x468] sm:$0xff]
        %v603 = vld [vmem:[#allocation7 + $0x470] sm:$0xff]
        %v604 = vld [vmem:[#allocation7 + $0x478] sm:$0xff]
        %v605 = vld [vmem:[#allocation7 + $0x480] sm:$0xff]
        %v606 = vld [vmem:[#allocation7 + $0x488] sm:$0xff]
        %v607 = vld [vmem:[#allocation7 + $0x490] sm:$0xff]
        %v608 = vld [vmem:[#allocation7 + $0x498] sm:$0xff]
        %v609 = vld [vmem:[#allocation7 + $0x4a0] sm:$0xff]
        %v610 = vld [vmem:[#allocation7 + $0x4a8] sm:$0xff]
        %v611 = vld [vmem:[#allocation7 + $0x4b0] sm:$0xff]
        %v612 = vld [vmem:[#allocation7 + $0x4b8] sm:$0xff]
        %v613 = vld [vmem:[#allocation7 + $0x4c0] sm:$0xff]
        %v614 = vld [vmem:[#allocation7 + $0x4c8] sm:$0xff]
        %v615 = vld [vmem:[#allocation7 + $0x4d0] sm:$0xff]
        %v616 = vld [vmem:[#allocation7 + $0x4d8] sm:$0xff]
        %v617 = vld [vmem:[#allocation7 + $0x4e0] sm:$0xff]
        %v618 = vld [vmem:[#allocation7 + $0x4e8] sm:$0xff]
        %v619 = vld [vmem:[#allocation7 + $0x4f0] sm:$0xff]
        %v620 = vld [vmem:[#allocation7 + $0x4f8] sm:$0xff]
        %v621 = vld [vmem:[#allocation7 + $0x500] sm:$0xff]
        %v622 = vld [vmem:[#allocation7 + $0x508] sm:$0xff]
        %v623 = vld [vmem:[#allocation7 + $0x510] sm:$0xff]
        %v624 = vld [vmem:[#allocation7 + $0x518] sm:$0xff]
        %v625 = vld [vmem:[#allocation7 + $0x520] sm:$0xff]
        %v626 = vld [vmem:[#allocation7 + $0x528] sm:$0xff]
        %v627 = vld [vmem:[#allocation7 + $0x530] sm:$0xff]
        %v628 = vld [vmem:[#allocation7 + $0x538] sm:$0xff]
        %v629 = vld [vmem:[#allocation7 + $0x540] sm:$0xff]
        %v630 = vld [vmem:[#allocation7 + $0x548] sm:$0xff]
        %v631 = vld [vmem:[#allocation7 + $0x550] sm:$0xff]
        %v632 = vld [vmem:[#allocation7 + $0x558] sm:$0xff]
        %v633 = vld [vmem:[#allocation7 + $0x560] sm:$0xff]
        %v634 = vld [vmem:[#allocation7 + $0x568] sm:$0xff]
        %v635 = vld [vmem:[#allocation7 + $0x570] sm:$0xff]
        %v636 = vld [vmem:[#allocation7 + $0x578] sm:$0xff]
        %v637 = vld [vmem:[#allocation7 + $0x580] sm:$0xff]
        %v638 = vld [vmem:[#allocation7 + $0x588] sm:$0xff]
        %v639 = vld [vmem:[#allocation7 + $0x590] sm:$0xff]
        %v640 = vld [vmem:[#allocation7 + $0x598] sm:$0xff]
        %v641 = vld [vmem:[#allocation7 + $0x5a0] sm:$0xff]
        %v642 = vld [vmem:[#allocation7 + $0x5a8] sm:$0xff]
        %v643 = vld [vmem:[#allocation7 + $0x5b0] sm:$0xff]
        %v644 = vld [vmem:[#allocation7 + $0x5b8] sm:$0xff]
        %v645 = vld [vmem:[#allocation7 + $0x5c0] sm:$0xff]
        %v646 = vld [vmem:[#allocation7 + $0x5c8] sm:$0xff]
        %v647 = vld [vmem:[#allocation7 + $0x5d0] sm:$0xff]
        %v648 = vld [vmem:[#allocation7 + $0x5d8] sm:$0xff]
        %v649 = vld [vmem:[#allocation7 + $0x5e0] sm:$0xff]
        %v650 = vld [vmem:[#allocation7 + $0x5e8] sm:$0xff]
        %v651 = vld [vmem:[#allocation7 + $0x5f0] sm:$0xff]
        %v652 = vld [vmem:[#allocation7 + $0x5f8] sm:$0xff]
        %v653 = vld [vmem:[#allocation7 + $0x600] sm:$0xff]
        %v654 = vld [vmem:[#allocation7 + $0x608] sm:$0xff]
        %v655 = vld [vmem:[#allocation7 + $0x610] sm:$0xff]
        %v656 = vld [vmem:[#allocation7 + $0x618] sm:$0xff]
        %v657 = vld [vmem:[#allocation7 + $0x620] sm:$0xff]
        %v658 = vld [vmem:[#allocation7 + $0x628] sm:$0xff]
        %v659 = vld [vmem:[#allocation7 + $0x630] sm:$0xff]
        %v660 = vld [vmem:[#allocation7 + $0x638] sm:$0xff]
        %v661 = vld [vmem:[#allocation7 + $0x640] sm:$0xff]
        %v662 = vld [vmem:[#allocation7 + $0x648] sm:$0xff]
        %v663 = vld [vmem:[#allocation7 + $0x650] sm:$0xff]
        %v664 = vld [vmem:[#allocation7 + $0x658] sm:$0xff]
        %v665 = vld [vmem:[#allocation7 + $0x660] sm:$0xff]
        %v666 = vld [vmem:[#allocation7 + $0x668] sm:$0xff]
        %v667 = vld [vmem:[#allocation7 + $0x670] sm:$0xff]
        %v668 = vld [vmem:[#allocation7 + $0x678] sm:$0xff]
        %v669 = vld [vmem:[#allocation7 + $0x680] sm:$0xff]
        %v670 = vld [vmem:[#allocation7 + $0x688] sm:$0xff]
        %v671 = vld [vmem:[#allocation7 + $0x690] sm:$0xff]
        %v672 = vld [vmem:[#allocation7 + $0x698] sm:$0xff]
        %v673 = vld [vmem:[#allocation7 + $0x6a0] sm:$0xff]
        %v674 = vld [vmem:[#allocation7 + $0x6a8] sm:$0xff]
        %v675 = vld [vmem:[#allocation7 + $0x6b0] sm:$0xff]
        %v676 = vld [vmem:[#allocation7 + $0x6b8] sm:$0xff]
        %v677 = vld [vmem:[#allocation7 + $0x6c0] sm:$0xff]
        %v678 = vld [vmem:[#allocation7 + $0x6c8] sm:$0xff]
        %v679 = vld [vmem:[#allocation7 + $0x6d0] sm:$0xff]
        %v680 = vld [vmem:[#allocation7 + $0x6d8] sm:$0xff]
        %v681 = vld [vmem:[#allocation7 + $0x6e0] sm:$0xff]
        %v682 = vld [vmem:[#allocation7 + $0x6e8] sm:$0xff]
        %v683 = vld [vmem:[#allocation7 + $0x6f0] sm:$0xff]
        %v684 = vld [vmem:[#allocation7 + $0x6f8] sm:$0xff]
        %v685 = vld [vmem:[#allocation7 + $0x700] sm:$0xff]
        %v686 = vld [vmem:[#allocation7 + $0x708] sm:$0xff]
        %v687 = vld [vmem:[#allocation7 + $0x710] sm:$0xff]
        %v688 = vld [vmem:[#allocation7 + $0x718] sm:$0xff]
        %v689 = vld [vmem:[#allocation7 + $0x720] sm:$0xff]
        %v690 = vld [vmem:[#allocation7 + $0x728] sm:$0xff]
        %v691 = vld [vmem:[#allocation7 + $0x730] sm:$0xff]
        %v692 = vld [vmem:[#allocation7 + $0x738] sm:$0xff]
        %v693 = vld [vmem:[#allocation7 + $0x740] sm:$0xff]
        %v694 = vld [vmem:[#allocation7 + $0x748] sm:$0xff]
        %v695 = vld [vmem:[#allocation7 + $0x750] sm:$0xff]
        %v696 = vld [vmem:[#allocation7 + $0x758] sm:$0xff]
        %v697 = vld [vmem:[#allocation7 + $0x760] sm:$0xff]
        %v698 = vld [vmem:[#allocation7 + $0x768] sm:$0xff]
        %v699 = vld [vmem:[#allocation7 + $0x770] sm:$0xff]
        %v700 = vld [vmem:[#allocation7 + $0x778] sm:$0xff]
        %v701 = vld [vmem:[#allocation7 + $0x780] sm:$0xff]
        %v702 = vld [vmem:[#allocation7 + $0x788] sm:$0xff]
        %v703 = vld [vmem:[#allocation7 + $0x790] sm:$0xff]
        %v704 = vld [vmem:[#allocation7 + $0x798] sm:$0xff]
        %v705 = vld [vmem:[#allocation7 + $0x7a0] sm:$0xff]
        %v706 = vld [vmem:[#allocation7 + $0x7a8] sm:$0xff]
        %v707 = vld [vmem:[#allocation7 + $0x7b0] sm:$0xff]
        %v708 = vld [vmem:[#allocation7 + $0x7b8] sm:$0xff]
        %v709 = vld [vmem:[#allocation7 + $0x7c0] sm:$0xff]
        %v710 = vld [vmem:[#allocation7 + $0x7c8] sm:$0xff]
        %v711 = vld [vmem:[#allocation7 + $0x7d0] sm:$0xff]
        %v712 = vld [vmem:[#allocation7 + $0x7d8] sm:$0xff]
        %v713 = vld [vmem:[#allocation7 + $0x7e0] sm:$0xff]
        %v714 = vld [vmem:[#allocation7 + $0x7e8] sm:$0xff]
        %v715 = vld [vmem:[#allocation7 + $0x7f0] sm:$0xff]
        %v716 = vld [vmem:[#allocation7 + $0x7f8] sm:$0xff]
        %v717 = vld [vmem:[#allocation2] sm:$0xfe]
        %v718 = vld [vmem:[#allocation2 + $0x8] sm:$0xfe]
        %v719 = vld [vmem:[#allocation2 + $0x10] sm:$0xfe]
        %v720 = vld [vmem:[#allocation2 + $0x18] sm:$0xfe]
        %v721 = vld [vmem:[#allocation2 + $0x20] sm:$0x1]
        %v722 = vld [vmem:[#allocation2 + $0x28] sm:$0x1]
        %v723 = vld [vmem:[#allocation2 + $0x30] sm:$0x1]
        %v724 = vld [vmem:[#allocation2 + $0x38] sm:$0x1]
        %v725 = vld [vmem:[#allocation2 + $0x40] sm:$0xfe]
        %v726 = vld [vmem:[#allocation2 + $0x48] sm:$0xfe]
        %v727 = vld [vmem:[#allocation2 + $0x50] sm:$0xfe]
        %v728 = vld [vmem:[#allocation2 + $0x58] sm:$0xfe]
        %v729 = vld [vmem:[#allocation2 + $0x60] sm:$0x1]
        %v730 = vld [vmem:[#allocation2 + $0x68] sm:$0x1]
        %v731 = vld [vmem:[#allocation2 + $0x70] sm:$0x1]
        %v732 = vld [vmem:[#allocation2 + $0x78] sm:$0x1]
        %vm749 = vcmask 1046528
        %v750 = vrot.slane %v717, 1
        %v751 = vrot.slane %v721, 1
        %v752 = vsel %vm749, %v750, %v751
        %v753 = vrot.slane %v718, 1
        %v754 = vrot.slane %v722, 1
        %v755 = vsel %vm749, %v753, %v754
        %v756 = vrot.slane %v719, 1
        %v757 = vrot.slane %v723, 1
        %v758 = vsel %vm749, %v756, %v757
        %v759 = vrot.slane %v720, 1
        %v760 = vrot.slane %v724, 1
        %v761 = vsel %vm749, %v759, %v760
        %v762 = vrot.slane %v725, 1
        %v763 = vrot.slane %v729, 1
        %v764 = vsel %vm749, %v762, %v763
        %v765 = vrot.slane %v726, 1
        %v766 = vrot.slane %v730, 1
        %v767 = vsel %vm749, %v765, %v766
        %v768 = vrot.slane %v727, 1
        %v769 = vrot.slane %v731, 1
        %v770 = vsel %vm749, %v768, %v769
        %v771 = vrot.slane %v728, 1
        %v772 = vrot.slane %v732, 1
        %v773 = vsel %vm749, %v771, %v772
        %s782 = scalar_lea.vmem [#allocation7], 2048
        %v783 = vld [vmem:[%s782] sm:$0xff]
        %v784 = vld [vmem:[%s782 + $0x8] sm:$0xff]
        %v785 = vld [vmem:[%s782 + $0x10] sm:$0xff]
        %v786 = vld [vmem:[%s782 + $0x18] sm:$0xff]
        %v787 = vld [vmem:[%s782 + $0x20] sm:$0xff]
        %v788 = vld [vmem:[%s782 + $0x28] sm:$0xff]
        %v789 = vld [vmem:[%s782 + $0x30] sm:$0xff]
        %v790 = vld [vmem:[%s782 + $0x38] sm:$0xff]
        %v791 = vld [vmem:[%s782 + $0x40] sm:$0xff]
        %v792 = vld [vmem:[%s782 + $0x48] sm:$0xff]
        %v793 = vld [vmem:[%s782 + $0x50] sm:$0xff]
        %v794 = vld [vmem:[%s782 + $0x58] sm:$0xff]
        %v795 = vld [vmem:[%s782 + $0x60] sm:$0xff]
        %v796 = vld [vmem:[%s782 + $0x68] sm:$0xff]
        %v797 = vld [vmem:[%s782 + $0x70] sm:$0xff]
        %v798 = vld [vmem:[%s782 + $0x78] sm:$0xff]
        %v799 = vld [vmem:[%s782 + $0x80] sm:$0xff]
        %v800 = vld [vmem:[%s782 + $0x88] sm:$0xff]
        %v801 = vld [vmem:[%s782 + $0x90] sm:$0xff]
        %v802 = vld [vmem:[%s782 + $0x98] sm:$0xff]
        %v803 = vld [vmem:[%s782 + $0xa0] sm:$0xff]
        %v804 = vld [vmem:[%s782 + $0xa8] sm:$0xff]
        %v805 = vld [vmem:[%s782 + $0xb0] sm:$0xff]
        %v806 = vld [vmem:[%s782 + $0xb8] sm:$0xff]
        %v807 = vld [vmem:[%s782 + $0xc0] sm:$0xff]
        %v808 = vld [vmem:[%s782 + $0xc8] sm:$0xff]
        %v809 = vld [vmem:[%s782 + $0xd0] sm:$0xff]
        %v810 = vld [vmem:[%s782 + $0xd8] sm:$0xff]
        %v811 = vld [vmem:[%s782 + $0xe0] sm:$0xff]
        %v812 = vld [vmem:[%s782 + $0xe8] sm:$0xff]
        %v813 = vld [vmem:[%s782 + $0xf0] sm:$0xff]
        %v814 = vld [vmem:[%s782 + $0xf8] sm:$0xff]
        %v815 = vld [vmem:[%s782 + $0x100] sm:$0xff]
        %v816 = vld [vmem:[%s782 + $0x108] sm:$0xff]
        %v817 = vld [vmem:[%s782 + $0x110] sm:$0xff]
        %v818 = vld [vmem:[%s782 + $0x118] sm:$0xff]
        %v819 = vld [vmem:[%s782 + $0x120] sm:$0xff]
        %v820 = vld [vmem:[%s782 + $0x128] sm:$0xff]
        %v821 = vld [vmem:[%s782 + $0x130] sm:$0xff]
        %v822 = vld [vmem:[%s782 + $0x138] sm:$0xff]
        %v823 = vld [vmem:[%s782 + $0x140] sm:$0xff]
        %v824 = vld [vmem:[%s782 + $0x148] sm:$0xff]
        %v825 = vld [vmem:[%s782 + $0x150] sm:$0xff]
        %v826 = vld [vmem:[%s782 + $0x158] sm:$0xff]
        %v827 = vld [vmem:[%s782 + $0x160] sm:$0xff]
        %v828 = vld [vmem:[%s782 + $0x168] sm:$0xff]
        %v829 = vld [vmem:[%s782 + $0x170] sm:$0xff]
        %v830 = vld [vmem:[%s782 + $0x178] sm:$0xff]
        %v831 = vld [vmem:[%s782 + $0x180] sm:$0xff]
        %v832 = vld [vmem:[%s782 + $0x188] sm:$0xff]
        %v833 = vld [vmem:[%s782 + $0x190] sm:$0xff]
        %v834 = vld [vmem:[%s782 + $0x198] sm:$0xff]
        %v835 = vld [vmem:[%s782 + $0x1a0] sm:$0xff]
        %v836 = vld [vmem:[%s782 + $0x1a8] sm:$0xff]
        %v837 = vld [vmem:[%s782 + $0x1b0] sm:$0xff]
        %v838 = vld [vmem:[%s782 + $0x1b8] sm:$0xff]
        %v839 = vld [vmem:[%s782 + $0x1c0] sm:$0xff]
        %v840 = vld [vmem:[%s782 + $0x1c8] sm:$0xff]
        %v841 = vld [vmem:[%s782 + $0x1d0] sm:$0xff]
        %v842 = vld [vmem:[%s782 + $0x1d8] sm:$0xff]
        %v843 = vld [vmem:[%s782 + $0x1e0] sm:$0xff]
        %v844 = vld [vmem:[%s782 + $0x1e8] sm:$0xff]
        %v845 = vld [vmem:[%s782 + $0x1f0] sm:$0xff]
        %v846 = vld [vmem:[%s782 + $0x1f8] sm:$0xff]
        %v847 = vld [vmem:[%s782 + $0x200] sm:$0xff]
        %v848 = vld [vmem:[%s782 + $0x208] sm:$0xff]
        %v849 = vld [vmem:[%s782 + $0x210] sm:$0xff]
        %v850 = vld [vmem:[%s782 + $0x218] sm:$0xff]
        %v851 = vld [vmem:[%s782 + $0x220] sm:$0xff]
        %v852 = vld [vmem:[%s782 + $0x228] sm:$0xff]
        %v853 = vld [vmem:[%s782 + $0x230] sm:$0xff]
        %v854 = vld [vmem:[%s782 + $0x238] sm:$0xff]
        %v855 = vld [vmem:[%s782 + $0x240] sm:$0xff]
        %v856 = vld [vmem:[%s782 + $0x248] sm:$0xff]
        %v857 = vld [vmem:[%s782 + $0x250] sm:$0xff]
        %v858 = vld [vmem:[%s782 + $0x258] sm:$0xff]
        %v859 = vld [vmem:[%s782 + $0x260] sm:$0xff]
        %v860 = vld [vmem:[%s782 + $0x268] sm:$0xff]
        %v861 = vld [vmem:[%s782 + $0x270] sm:$0xff]
        %v862 = vld [vmem:[%s782 + $0x278] sm:$0xff]
        %v863 = vld [vmem:[%s782 + $0x280] sm:$0xff]
        %v864 = vld [vmem:[%s782 + $0x288] sm:$0xff]
        %v865 = vld [vmem:[%s782 + $0x290] sm:$0xff]
        %v866 = vld [vmem:[%s782 + $0x298] sm:$0xff]
        %v867 = vld [vmem:[%s782 + $0x2a0] sm:$0xff]
        %v868 = vld [vmem:[%s782 + $0x2a8] sm:$0xff]
        %v869 = vld [vmem:[%s782 + $0x2b0] sm:$0xff]
        %v870 = vld [vmem:[%s782 + $0x2b8] sm:$0xff]
        %v871 = vld [vmem:[%s782 + $0x2c0] sm:$0xff]
        %v872 = vld [vmem:[%s782 + $0x2c8] sm:$0xff]
        %v873 = vld [vmem:[%s782 + $0x2d0] sm:$0xff]
        %v874 = vld [vmem:[%s782 + $0x2d8] sm:$0xff]
        %v875 = vld [vmem:[%s782 + $0x2e0] sm:$0xff]
        %v876 = vld [vmem:[%s782 + $0x2e8] sm:$0xff]
        %v877 = vld [vmem:[%s782 + $0x2f0] sm:$0xff]
        %v878 = vld [vmem:[%s782 + $0x2f8] sm:$0xff]
        %v879 = vld [vmem:[%s782 + $0x300] sm:$0xff]
        %v880 = vld [vmem:[%s782 + $0x308] sm:$0xff]
        %v881 = vld [vmem:[%s782 + $0x310] sm:$0xff]
        %v882 = vld [vmem:[%s782 + $0x318] sm:$0xff]
        %v883 = vld [vmem:[%s782 + $0x320] sm:$0xff]
        %v884 = vld [vmem:[%s782 + $0x328] sm:$0xff]
        %v885 = vld [vmem:[%s782 + $0x330] sm:$0xff]
        %v886 = vld [vmem:[%s782 + $0x338] sm:$0xff]
        %v887 = vld [vmem:[%s782 + $0x340] sm:$0xff]
        %v888 = vld [vmem:[%s782 + $0x348] sm:$0xff]
        %v889 = vld [vmem:[%s782 + $0x350] sm:$0xff]
        %v890 = vld [vmem:[%s782 + $0x358] sm:$0xff]
        %v891 = vld [vmem:[%s782 + $0x360] sm:$0xff]
        %v892 = vld [vmem:[%s782 + $0x368] sm:$0xff]
        %v893 = vld [vmem:[%s782 + $0x370] sm:$0xff]
        %v894 = vld [vmem:[%s782 + $0x378] sm:$0xff]
        %v895 = vld [vmem:[%s782 + $0x380] sm:$0xff]
        %v896 = vld [vmem:[%s782 + $0x388] sm:$0xff]
        %v897 = vld [vmem:[%s782 + $0x390] sm:$0xff]
        %v898 = vld [vmem:[%s782 + $0x398] sm:$0xff]
        %v899 = vld [vmem:[%s782 + $0x3a0] sm:$0xff]
        %v900 = vld [vmem:[%s782 + $0x3a8] sm:$0xff]
        %v901 = vld [vmem:[%s782 + $0x3b0] sm:$0xff]
        %v902 = vld [vmem:[%s782 + $0x3b8] sm:$0xff]
        %v903 = vld [vmem:[%s782 + $0x3c0] sm:$0xff]
        %v904 = vld [vmem:[%s782 + $0x3c8] sm:$0xff]
        %v905 = vld [vmem:[%s782 + $0x3d0] sm:$0xff]
        %v906 = vld [vmem:[%s782 + $0x3d8] sm:$0xff]
        %v907 = vld [vmem:[%s782 + $0x3e0] sm:$0xff]
        %v908 = vld [vmem:[%s782 + $0x3e8] sm:$0xff]
        %v909 = vld [vmem:[%s782 + $0x3f0] sm:$0xff]
        %v910 = vld [vmem:[%s782 + $0x3f8] sm:$0xff]
        %v911 = vld [vmem:[%s782 + $0x400] sm:$0xff]
        %v912 = vld [vmem:[%s782 + $0x408] sm:$0xff]
        %v913 = vld [vmem:[%s782 + $0x410] sm:$0xff]
        %v914 = vld [vmem:[%s782 + $0x418] sm:$0xff]
        %v915 = vld [vmem:[%s782 + $0x420] sm:$0xff]
        %v916 = vld [vmem:[%s782 + $0x428] sm:$0xff]
        %v917 = vld [vmem:[%s782 + $0x430] sm:$0xff]
        %v918 = vld [vmem:[%s782 + $0x438] sm:$0xff]
        %v919 = vld [vmem:[%s782 + $0x440] sm:$0xff]
        %v920 = vld [vmem:[%s782 + $0x448] sm:$0xff]
        %v921 = vld [vmem:[%s782 + $0x450] sm:$0xff]
        %v922 = vld [vmem:[%s782 + $0x458] sm:$0xff]
        %v923 = vld [vmem:[%s782 + $0x460] sm:$0xff]
        %v924 = vld [vmem:[%s782 + $0x468] sm:$0xff]
        %v925 = vld [vmem:[%s782 + $0x470] sm:$0xff]
        %v926 = vld [vmem:[%s782 + $0x478] sm:$0xff]
        %v927 = vld [vmem:[%s782 + $0x480] sm:$0xff]
        %v928 = vld [vmem:[%s782 + $0x488] sm:$0xff]
        %v929 = vld [vmem:[%s782 + $0x490] sm:$0xff]
        %v930 = vld [vmem:[%s782 + $0x498] sm:$0xff]
        %v931 = vld [vmem:[%s782 + $0x4a0] sm:$0xff]
        %v932 = vld [vmem:[%s782 + $0x4a8] sm:$0xff]
        %v933 = vld [vmem:[%s782 + $0x4b0] sm:$0xff]
        %v934 = vld [vmem:[%s782 + $0x4b8] sm:$0xff]
        %v935 = vld [vmem:[%s782 + $0x4c0] sm:$0xff]
        %v936 = vld [vmem:[%s782 + $0x4c8] sm:$0xff]
        %v937 = vld [vmem:[%s782 + $0x4d0] sm:$0xff]
        %v938 = vld [vmem:[%s782 + $0x4d8] sm:$0xff]
        %v939 = vld [vmem:[%s782 + $0x4e0] sm:$0xff]
        %v940 = vld [vmem:[%s782 + $0x4e8] sm:$0xff]
        %v941 = vld [vmem:[%s782 + $0x4f0] sm:$0xff]
        %v942 = vld [vmem:[%s782 + $0x4f8] sm:$0xff]
        %v943 = vld [vmem:[%s782 + $0x500] sm:$0xff]
        %v944 = vld [vmem:[%s782 + $0x508] sm:$0xff]
        %v945 = vld [vmem:[%s782 + $0x510] sm:$0xff]
        %v946 = vld [vmem:[%s782 + $0x518] sm:$0xff]
        %v947 = vld [vmem:[%s782 + $0x520] sm:$0xff]
        %v948 = vld [vmem:[%s782 + $0x528] sm:$0xff]
        %v949 = vld [vmem:[%s782 + $0x530] sm:$0xff]
        %v950 = vld [vmem:[%s782 + $0x538] sm:$0xff]
        %v951 = vld [vmem:[%s782 + $0x540] sm:$0xff]
        %v952 = vld [vmem:[%s782 + $0x548] sm:$0xff]
        %v953 = vld [vmem:[%s782 + $0x550] sm:$0xff]
        %v954 = vld [vmem:[%s782 + $0x558] sm:$0xff]
        %v955 = vld [vmem:[%s782 + $0x560] sm:$0xff]
        %v956 = vld [vmem:[%s782 + $0x568] sm:$0xff]
        %v957 = vld [vmem:[%s782 + $0x570] sm:$0xff]
        %v958 = vld [vmem:[%s782 + $0x578] sm:$0xff]
        %v959 = vld [vmem:[%s782 + $0x580] sm:$0xff]
        %v960 = vld [vmem:[%s782 + $0x588] sm:$0xff]
        %v961 = vld [vmem:[%s782 + $0x590] sm:$0xff]
        %v962 = vld [vmem:[%s782 + $0x598] sm:$0xff]
        %v963 = vld [vmem:[%s782 + $0x5a0] sm:$0xff]
        %v964 = vld [vmem:[%s782 + $0x5a8] sm:$0xff]
        %v965 = vld [vmem:[%s782 + $0x5b0] sm:$0xff]
        %v966 = vld [vmem:[%s782 + $0x5b8] sm:$0xff]
        %v967 = vld [vmem:[%s782 + $0x5c0] sm:$0xff]
        %v968 = vld [vmem:[%s782 + $0x5c8] sm:$0xff]
        %v969 = vld [vmem:[%s782 + $0x5d0] sm:$0xff]
        %v970 = vld [vmem:[%s782 + $0x5d8] sm:$0xff]
        %v971 = vld [vmem:[%s782 + $0x5e0] sm:$0xff]
        %v972 = vld [vmem:[%s782 + $0x5e8] sm:$0xff]
        %v973 = vld [vmem:[%s782 + $0x5f0] sm:$0xff]
        %v974 = vld [vmem:[%s782 + $0x5f8] sm:$0xff]
        %v975 = vld [vmem:[%s782 + $0x600] sm:$0xff]
        %v976 = vld [vmem:[%s782 + $0x608] sm:$0xff]
        %v977 = vld [vmem:[%s782 + $0x610] sm:$0xff]
        %v978 = vld [vmem:[%s782 + $0x618] sm:$0xff]
        %v979 = vld [vmem:[%s782 + $0x620] sm:$0xff]
        %v980 = vld [vmem:[%s782 + $0x628] sm:$0xff]
        %v981 = vld [vmem:[%s782 + $0x630] sm:$0xff]
        %v982 = vld [vmem:[%s782 + $0x638] sm:$0xff]
        %v983 = vld [vmem:[%s782 + $0x640] sm:$0xff]
        %v984 = vld [vmem:[%s782 + $0x648] sm:$0xff]
        %v985 = vld [vmem:[%s782 + $0x650] sm:$0xff]
        %v986 = vld [vmem:[%s782 + $0x658] sm:$0xff]
        %v987 = vld [vmem:[%s782 + $0x660] sm:$0xff]
        %v988 = vld [vmem:[%s782 + $0x668] sm:$0xff]
        %v989 = vld [vmem:[%s782 + $0x670] sm:$0xff]
        %v990 = vld [vmem:[%s782 + $0x678] sm:$0xff]
        %v991 = vld [vmem:[%s782 + $0x680] sm:$0xff]
        %v992 = vld [vmem:[%s782 + $0x688] sm:$0xff]
        %v993 = vld [vmem:[%s782 + $0x690] sm:$0xff]
        %v994 = vld [vmem:[%s782 + $0x698] sm:$0xff]
        %v995 = vld [vmem:[%s782 + $0x6a0] sm:$0xff]
        %v996 = vld [vmem:[%s782 + $0x6a8] sm:$0xff]
        %v997 = vld [vmem:[%s782 + $0x6b0] sm:$0xff]
        %v998 = vld [vmem:[%s782 + $0x6b8] sm:$0xff]
        %v999 = vld [vmem:[%s782 + $0x6c0] sm:$0xff]
        %v1000 = vld [vmem:[%s782 + $0x6c8] sm:$0xff]
        %v1001 = vld [vmem:[%s782 + $0x6d0] sm:$0xff]
        %v1002 = vld [vmem:[%s782 + $0x6d8] sm:$0xff]
        %v1003 = vld [vmem:[%s782 + $0x6e0] sm:$0xff]
        %v1004 = vld [vmem:[%s782 + $0x6e8] sm:$0xff]
        %v1005 = vld [vmem:[%s782 + $0x6f0] sm:$0xff]
        %v1006 = vld [vmem:[%s782 + $0x6f8] sm:$0xff]
        %v1007 = vld [vmem:[%s782 + $0x700] sm:$0xff]
        %v1008 = vld [vmem:[%s782 + $0x708] sm:$0xff]
        %v1009 = vld [vmem:[%s782 + $0x710] sm:$0xff]
        %v1010 = vld [vmem:[%s782 + $0x718] sm:$0xff]
        %v1011 = vld [vmem:[%s782 + $0x720] sm:$0xff]
        %v1012 = vld [vmem:[%s782 + $0x728] sm:$0xff]
        %v1013 = vld [vmem:[%s782 + $0x730] sm:$0xff]
        %v1014 = vld [vmem:[%s782 + $0x738] sm:$0xff]
        %v1015 = vld [vmem:[%s782 + $0x740] sm:$0xff]
        %v1016 = vld [vmem:[%s782 + $0x748] sm:$0xff]
        %v1017 = vld [vmem:[%s782 + $0x750] sm:$0xff]
        %v1018 = vld [vmem:[%s782 + $0x758] sm:$0xff]
        %v1019 = vld [vmem:[%s782 + $0x760] sm:$0xff]
        %v1020 = vld [vmem:[%s782 + $0x768] sm:$0xff]
        %v1021 = vld [vmem:[%s782 + $0x770] sm:$0xff]
        %v1022 = vld [vmem:[%s782 + $0x778] sm:$0xff]
        %v1023 = vld [vmem:[%s782 + $0x780] sm:$0xff]
        %v1024 = vld [vmem:[%s782 + $0x788] sm:$0xff]
        %v1025 = vld [vmem:[%s782 + $0x790] sm:$0xff]
        %v1026 = vld [vmem:[%s782 + $0x798] sm:$0xff]
        %v1027 = vld [vmem:[%s782 + $0x7a0] sm:$0xff]
        %v1028 = vld [vmem:[%s782 + $0x7a8] sm:$0xff]
        %v1029 = vld [vmem:[%s782 + $0x7b0] sm:$0xff]
        %v1030 = vld [vmem:[%s782 + $0x7b8] sm:$0xff]
        %v1031 = vld [vmem:[%s782 + $0x7c0] sm:$0xff]
        %v1032 = vld [vmem:[%s782 + $0x7c8] sm:$0xff]
        %v1033 = vld [vmem:[%s782 + $0x7d0] sm:$0xff]
        %v1034 = vld [vmem:[%s782 + $0x7d8] sm:$0xff]
        %v1035 = vld [vmem:[%s782 + $0x7e0] sm:$0xff]
        %v1036 = vld [vmem:[%s782 + $0x7e8] sm:$0xff]
        %v1037 = vld [vmem:[%s782 + $0x7f0] sm:$0xff]
        %v1038 = vld [vmem:[%s782 + $0x7f8] sm:$0xff]
        %1039 = vmatprep.subr.mxu0 %v784
        %1040 = vmatpush1.msra.mxu0 %v783
        %1041 = vmatprep.subr.mxu0 %v788
        %1042 = vmatpush1.msra.mxu0 %v787
        %1043 = vmatprep.subr.mxu0 %v792
        %1044 = vmatpush1.msra.mxu0 %v791
        %1045 = vmatprep.subr.mxu0 %v796
        %1046 = vmatpush1.msra.mxu0 %v795
        %1047 = vmatprep.subr.mxu0 %v800
        %1048 = vmatpush1.msra.mxu0 %v799
        %1049 = vmatprep.subr.mxu0 %v804
        %1050 = vmatpush1.msra.mxu0 %v803
        %1051 = vmatprep.subr.mxu0 %v808
        %1052 = vmatpush1.msra.mxu0 %v807
        %1053 = vmatprep.subr.mxu0 %v812
        %1054 = vmatpush1.msra.mxu0 %v811
        %1055 = vmatprep.subr.mxu0 %v816
        %1056 = vmatpush1.msra.mxu0 %v815
        %1057 = vmatprep.subr.mxu0 %v820
        %1058 = vmatpush1.msra.mxu0 %v819
        %1059 = vmatprep.subr.mxu0 %v824
        %1060 = vmatpush1.msra.mxu0 %v823
        %1061 = vmatprep.subr.mxu0 %v828
        %1062 = vmatpush1.msra.mxu0 %v827
        %1063 = vmatprep.subr.mxu0 %v832
        %1064 = vmatpush1.msra.mxu0 %v831
        %1065 = vmatprep.subr.mxu0 %v836
        %1066 = vmatpush1.msra.mxu0 %v835
        %1067 = vmatprep.subr.mxu0 %v840
        %1068 = vmatpush1.msra.mxu0 %v839
        %1069 = vmatprep.subr.mxu0 %v844
        %1070 = vmatpush1.msra.mxu0 %v843
        %1071 = vmatprep.subr.mxu0 %v848
        %1072 = vmatpush1.msra.mxu0 %v847
        %1073 = vmatprep.subr.mxu0 %v852
        %1074 = vmatpush1.msra.mxu0 %v851
        %1075 = vmatprep.subr.mxu0 %v856
        %1076 = vmatpush1.msra.mxu0 %v855
        %1077 = vmatprep.subr.mxu0 %v860
        %1078 = vmatpush1.msra.mxu0 %v859
        %1079 = vmatprep.subr.mxu0 %v864
        %1080 = vmatpush1.msra.mxu0 %v863
        %1081 = vmatprep.subr.mxu0 %v868
        %1082 = vmatpush1.msra.mxu0 %v867
        %1083 = vmatprep.subr.mxu0 %v872
        %1084 = vmatpush1.msra.mxu0 %v871
        %1085 = vmatprep.subr.mxu0 %v876
        %1086 = vmatpush1.msra.mxu0 %v875
        %1087 = vmatprep.subr.mxu0 %v880
        %1088 = vmatpush1.msra.mxu0 %v879
        %1089 = vmatprep.subr.mxu0 %v884
        %1090 = vmatpush1.msra.mxu0 %v883
        %1091 = vmatprep.subr.mxu0 %v888
        %1092 = vmatpush1.msra.mxu0 %v887
        %1093 = vmatprep.subr.mxu0 %v892
        %1094 = vmatpush1.msra.mxu0 %v891
        %1095 = vmatprep.subr.mxu0 %v896
        %1096 = vmatpush1.msra.mxu0 %v895
        %1097 = vmatprep.subr.mxu0 %v900
        %1098 = vmatpush1.msra.mxu0 %v899
        %1099 = vmatprep.subr.mxu0 %v904
        %1100 = vmatpush1.msra.mxu0 %v903
        %1101 = vmatprep.subr.mxu0 %v908
        %1102 = vmatpush1.msra.mxu0 %v907
        %1103 = vmatprep.mubr.f32.mxu0 %v755
        %1104 = vmatmul.mubr.f32.gmra.mrb[0].mxu0 %v752
        %v1105 = vpop.f32.mrb[0].mxu0
        %v1106 = vadd.f32 0.0, %v1105
        %v1107 = vpop.f32.mrb[0].mxu0
        %v1108 = vadd.f32 0.0, %v1107
        %1109 = vmatprep.mubr.f32.mxu0 %v767
        %1110 = vmatmul.mubr.f32.gmra.mrb[0].mxu0 %v764
        %v1111 = vpop.f32.mrb[0].mxu0
        %v1112 = vadd.f32 0.0, %v1111
        %v1113 = vpop.f32.mrb[0].mxu0
        %v1114 = vadd.f32 0.0, %v1113
        %1115 = vdwg.mxu0
        %1116 = vmatprep.subr.mxu0 %v912
        %1117 = vmatpush1.msra.mxu0 %v911
        %1118 = vmatprep.subr.mxu0 %v916
        %1119 = vmatpush1.msra.mxu0 %v915
        %1120 = vmatprep.subr.mxu0 %v920
        %1121 = vmatpush1.msra.mxu0 %v919
        %1122 = vmatprep.subr.mxu0 %v924
        %1123 = vmatpush1.msra.mxu0 %v923
        %1124 = vmatprep.subr.mxu0 %v928
        %1125 = vmatpush1.msra.mxu0 %v927
        %1126 = vmatprep.subr.mxu0 %v932
        %1127 = vmatpush1.msra.mxu0 %v931
        %1128 = vmatprep.subr.mxu0 %v936
        %1129 = vmatpush1.msra.mxu0 %v935
        %1130 = vmatprep.subr.mxu0 %v940
        %1131 = vmatpush1.msra.mxu0 %v939
        %1132 = vmatprep.subr.mxu0 %v944
        %1133 = vmatpush1.msra.mxu0 %v943
        %1134 = vmatprep.subr.mxu0 %v948
        %1135 = vmatpush1.msra.mxu0 %v947
        %1136 = vmatprep.subr.mxu0 %v952
        %1137 = vmatpush1.msra.mxu0 %v951
        %1138 = vmatprep.subr.mxu0 %v956
        %1139 = vmatpush1.msra.mxu0 %v955
        %1140 = vmatprep.subr.mxu0 %v960
        %1141 = vmatpush1.msra.mxu0 %v959
        %1142 = vmatprep.subr.mxu0 %v964
        %1143 = vmatpush1.msra.mxu0 %v963
        %1144 = vmatprep.subr.mxu0 %v968
        %1145 = vmatpush1.msra.mxu0 %v967
        %1146 = vmatprep.subr.mxu0 %v972
        %1147 = vmatpush1.msra.mxu0 %v971
        %1148 = vmatprep.subr.mxu0 %v976
        %1149 = vmatpush1.msra.mxu0 %v975
        %1150 = vmatprep.subr.mxu0 %v980
        %1151 = vmatpush1.msra.mxu0 %v979
        %1152 = vmatprep.subr.mxu0 %v984
        %1153 = vmatpush1.msra.mxu0 %v983
        %1154 = vmatprep.subr.mxu0 %v988
        %1155 = vmatpush1.msra.mxu0 %v987
        %1156 = vmatprep.subr.mxu0 %v992
        %1157 = vmatpush1.msra.mxu0 %v991
        %1158 = vmatprep.subr.mxu0 %v996
        %1159 = vmatpush1.msra.mxu0 %v995
        %1160 = vmatprep.subr.mxu0 %v1000
        %1161 = vmatpush1.msra.mxu0 %v999
        %1162 = vmatprep.subr.mxu0 %v1004
        %1163 = vmatpush1.msra.mxu0 %v1003
        %1164 = vmatprep.subr.mxu0 %v1008
        %1165 = vmatpush1.msra.mxu0 %v1007
        %1166 = vmatprep.subr.mxu0 %v1012
        %1167 = vmatpush1.msra.mxu0 %v1011
        %1168 = vmatprep.subr.mxu0 %v1016
        %1169 = vmatpush1.msra.mxu0 %v1015
        %1170 = vmatprep.subr.mxu0 %v1020
        %1171 = vmatpush1.msra.mxu0 %v1019
        %1172 = vmatprep.subr.mxu0 %v1024
        %1173 = vmatpush1.msra.mxu0 %v1023
        %1174 = vmatprep.subr.mxu0 %v1028
        %1175 = vmatpush1.msra.mxu0 %v1027
        %1176 = vmatprep.subr.mxu0 %v1032
        %1177 = vmatpush1.msra.mxu0 %v1031
        %1178 = vmatprep.subr.mxu0 %v1036
        %1179 = vmatpush1.msra.mxu0 %v1035
        %1180 = vmatprep.mubr.f32.mxu0 %v761
        %1181 = vmatmul.mubr.f32.gmra.mrb[0].mxu0 %v758
        %v1182 = vpop.f32.mrb[0].mxu0
        %v1183 = vadd.f32 %v1106, %v1182
        %v1184 = vpop.f32.mrb[0].mxu0
        %v1185 = vadd.f32 %v1108, %v1184
        %1186 = vmatprep.mubr.f32.mxu0 %v773
        %1187 = vmatmul.mubr.f32.gmra.mrb[0].mxu0 %v770
        %v1188 = vpop.f32.mrb[0].mxu0
        %v1189 = vadd.f32 %v1112, %v1188
        %v1190 = vpop.f32.mrb[0].mxu0
        %v1191 = vadd.f32 %v1114, %v1190
        %1192 = vdwg.mxu0
        %1193 = vmatprep.subr.mxu0 %v786
        %1194 = vmatpush1.msra.mxu0 %v785
        %1195 = vmatprep.subr.mxu0 %v790
        %1196 = vmatpush1.msra.mxu0 %v789
        %1197 = vmatprep.subr.mxu0 %v794
        %1198 = vmatpush1.msra.mxu0 %v793
        %1199 = vmatprep.subr.mxu0 %v798
        %1200 = vmatpush1.msra.mxu0 %v797
        %1201 = vmatprep.subr.mxu0 %v802
        %1202 = vmatpush1.msra.mxu0 %v801
        %1203 = vmatprep.subr.mxu0 %v806
        %1204 = vmatpush1.msra.mxu0 %v805
        %1205 = vmatprep.subr.mxu0 %v810
        %1206 = vmatpush1.msra.mxu0 %v809
        %1207 = vmatprep.subr.mxu0 %v814
        %1208 = vmatpush1.msra.mxu0 %v813
        %1209 = vmatprep.subr.mxu0 %v818
        %1210 = vmatpush1.msra.mxu0 %v817
        %1211 = vmatprep.subr.mxu0 %v822
        %1212 = vmatpush1.msra.mxu0 %v821
        %1213 = vmatprep.subr.mxu0 %v826
        %1214 = vmatpush1.msra.mxu0 %v825
        %1215 = vmatprep.subr.mxu0 %v830
        %1216 = vmatpush1.msra.mxu0 %v829
        %1217 = vmatprep.subr.mxu0 %v834
        %1218 = vmatpush1.msra.mxu0 %v833
        %1219 = vmatprep.subr.mxu0 %v838
        %1220 = vmatpush1.msra.mxu0 %v837
        %1221 = vmatprep.subr.mxu0 %v842
        %1222 = vmatpush1.msra.mxu0 %v841
        %1223 = vmatprep.subr.mxu0 %v846
        %1224 = vmatpush1.msra.mxu0 %v845
        %1225 = vmatprep.subr.mxu0 %v850
        %1226 = vmatpush1.msra.mxu0 %v849
        %1227 = vmatprep.subr.mxu0 %v854
        %1228 = vmatpush1.msra.mxu0 %v853
        %1229 = vmatprep.subr.mxu0 %v858
        %1230 = vmatpush1.msra.mxu0 %v857
        %1231 = vmatprep.subr.mxu0 %v862
        %1232 = vmatpush1.msra.mxu0 %v861
        %1233 = vmatprep.subr.mxu0 %v866
        %1234 = vmatpush1.msra.mxu0 %v865
        %1235 = vmatprep.subr.mxu0 %v870
        %1236 = vmatpush1.msra.mxu0 %v869
        %1237 = vmatprep.subr.mxu0 %v874
        %1238 = vmatpush1.msra.mxu0 %v873
        %1239 = vmatprep.subr.mxu0 %v878
        %1240 = vmatpush1.msra.mxu0 %v877
        %1241 = vmatprep.subr.mxu0 %v882
        %1242 = vmatpush1.msra.mxu0 %v881
        %1243 = vmatprep.subr.mxu0 %v886
        %1244 = vmatpush1.msra.mxu0 %v885
        %1245 = vmatprep.subr.mxu0 %v890
        %1246 = vmatpush1.msra.mxu0 %v889
        %1247 = vmatprep.subr.mxu0 %v894
        %1248 = vmatpush1.msra.mxu0 %v893
        %1249 = vmatprep.subr.mxu0 %v898
        %1250 = vmatpush1.msra.mxu0 %v897
        %1251 = vmatprep.subr.mxu0 %v902
        %1252 = vmatpush1.msra.mxu0 %v901
        %1253 = vmatprep.subr.mxu0 %v906
        %1254 = vmatpush1.msra.mxu0 %v905
        %1255 = vmatprep.subr.mxu0 %v910
        %1256 = vmatpush1.msra.mxu0 %v909
        %1257 = vmatprep.mubr.f32.mxu0 %v755
        %1258 = vmatmul.mubr.f32.gmra.mrb[0].mxu0 %v752
        %v1259 = vpop.f32.mrb[0].mxu0
        %v1260 = vadd.f32 0.0, %v1259
        %v1261 = vpop.f32.mrb[0].mxu0
        %v1262 = vadd.f32 0.0, %v1261
        %1263 = vmatprep.mubr.f32.mxu0 %v767
        %1264 = vmatmul.mubr.f32.gmra.mrb[0].mxu0 %v764
        %v1265 = vpop.f32.mrb[0].mxu0
        %v1266 = vadd.f32 0.0, %v1265
        %v1267 = vpop.f32.mrb[0].mxu0
        %v1268 = vadd.f32 0.0, %v1267
        %1269 = vdwg.mxu0
        %1270 = vmatprep.subr.mxu0 %v914
        %1271 = vmatpush1.msra.mxu0 %v913
        %1272 = vmatprep.subr.mxu0 %v918
        %1273 = vmatpush1.msra.mxu0 %v917
        %1274 = vmatprep.subr.mxu0 %v922
        %1275 = vmatpush1.msra.mxu0 %v921
        %1276 = vmatprep.subr.mxu0 %v926
        %1277 = vmatpush1.msra.mxu0 %v925
        %1278 = vmatprep.subr.mxu0 %v930
        %1279 = vmatpush1.msra.mxu0 %v929
        %1280 = vmatprep.subr.mxu0 %v934
        %1281 = vmatpush1.msra.mxu0 %v933
        %1282 = vmatprep.subr.mxu0 %v938
        %1283 = vmatpush1.msra.mxu0 %v937
        %1284 = vmatprep.subr.mxu0 %v942
        %1285 = vmatpush1.msra.mxu0 %v941
        %1286 = vmatprep.subr.mxu0 %v946
        %1287 = vmatpush1.msra.mxu0 %v945
        %1288 = vmatprep.subr.mxu0 %v950
        %1289 = vmatpush1.msra.mxu0 %v949
        %1290 = vmatprep.subr.mxu0 %v954
        %1291 = vmatpush1.msra.mxu0 %v953
        %1292 = vmatprep.subr.mxu0 %v958
        %1293 = vmatpush1.msra.mxu0 %v957
        %1294 = vmatprep.subr.mxu0 %v962
        %1295 = vmatpush1.msra.mxu0 %v961
        %1296 = vmatprep.subr.mxu0 %v966
        %1297 = vmatpush1.msra.mxu0 %v965
        %1298 = vmatprep.subr.mxu0 %v970
        %1299 = vmatpush1.msra.mxu0 %v969
        %1300 = vmatprep.subr.mxu0 %v974
        %1301 = vmatpush1.msra.mxu0 %v973
        %1302 = vmatprep.subr.mxu0 %v978
        %1303 = vmatpush1.msra.mxu0 %v977
        %1304 = vmatprep.subr.mxu0 %v982
        %1305 = vmatpush1.msra.mxu0 %v981
        %1306 = vmatprep.subr.mxu0 %v986
        %1307 = vmatpush1.msra.mxu0 %v985
        %1308 = vmatprep.subr.mxu0 %v990
        %1309 = vmatpush1.msra.mxu0 %v989
        %1310 = vmatprep.subr.mxu0 %v994
        %1311 = vmatpush1.msra.mxu0 %v993
        %1312 = vmatprep.subr.mxu0 %v998
        %1313 = vmatpush1.msra.mxu0 %v997
        %1314 = vmatprep.subr.mxu0 %v1002
        %1315 = vmatpush1.msra.mxu0 %v1001
        %1316 = vmatprep.subr.mxu0 %v1006
        %1317 = vmatpush1.msra.mxu0 %v1005
        %1318 = vmatprep.subr.mxu0 %v1010
        %1319 = vmatpush1.msra.mxu0 %v1009
        %1320 = vmatprep.subr.mxu0 %v1014
        %1321 = vmatpush1.msra.mxu0 %v1013
        %1322 = vmatprep.subr.mxu0 %v1018
        %1323 = vmatpush1.msra.mxu0 %v1017
        %1324 = vmatprep.subr.mxu0 %v1022
        %1325 = vmatpush1.msra.mxu0 %v1021
        %1326 = vmatprep.subr.mxu0 %v1026
        %1327 = vmatpush1.msra.mxu0 %v1025
        %1328 = vmatprep.subr.mxu0 %v1030
        %1329 = vmatpush1.msra.mxu0 %v1029
        %1330 = vmatprep.subr.mxu0 %v1034
        %1331 = vmatpush1.msra.mxu0 %v1033
        %1332 = vmatprep.subr.mxu0 %v1038
        %1333 = vmatpush1.msra.mxu0 %v1037
        %1334 = vmatprep.mubr.f32.mxu0 %v761
        %1335 = vmatmul.mubr.f32.gmra.mrb[0].mxu0 %v758
        %v1336 = vpop.f32.mrb[0].mxu0
        %v1337 = vadd.f32 %v1260, %v1336
        %v1338 = vpop.f32.mrb[0].mxu0
        %v1339 = vadd.f32 %v1262, %v1338
        %1340 = vmatprep.mubr.f32.mxu0 %v773
        %1341 = vmatmul.mubr.f32.gmra.mrb[0].mxu0 %v770
        %v1342 = vpop.f32.mrb[0].mxu0
        %v1343 = vadd.f32 %v1266, %v1342
        %v1344 = vpop.f32.mrb[0].mxu0
        %v1345 = vadd.f32 %v1268, %v1344
        %1346 = vdwg.mxu0
        %1347 = vmatprep.subr.mxu0 %v462
        %1348 = vmatpush1.msra.mxu0 %v461
        %1349 = vmatprep.subr.mxu0 %v466
        %1350 = vmatpush1.msra.mxu0 %v465
        %1351 = vmatprep.subr.mxu0 %v470
        %1352 = vmatpush1.msra.mxu0 %v469
        %1353 = vmatprep.subr.mxu0 %v474
        %1354 = vmatpush1.msra.mxu0 %v473
        %1355 = vmatprep.subr.mxu0 %v478
        %1356 = vmatpush1.msra.mxu0 %v477
        %1357 = vmatprep.subr.mxu0 %v482
        %1358 = vmatpush1.msra.mxu0 %v481
        %1359 = vmatprep.subr.mxu0 %v486
        %1360 = vmatpush1.msra.mxu0 %v485
        %1361 = vmatprep.subr.mxu0 %v490
        %1362 = vmatpush1.msra.mxu0 %v489
        %1363 = vmatprep.subr.mxu0 %v494
        %1364 = vmatpush1.msra.mxu0 %v493
        %1365 = vmatprep.subr.mxu0 %v498
        %1366 = vmatpush1.msra.mxu0 %v497
        %1367 = vmatprep.subr.mxu0 %v502
        %1368 = vmatpush1.msra.mxu0 %v501
        %1369 = vmatprep.subr.mxu0 %v506
        %1370 = vmatpush1.msra.mxu0 %v505
        %1371 = vmatprep.subr.mxu0 %v510
        %1372 = vmatpush1.msra.mxu0 %v509
        %1373 = vmatprep.subr.mxu0 %v514
        %1374 = vmatpush1.msra.mxu0 %v513
        %1375 = vmatprep.subr.mxu0 %v518
        %1376 = vmatpush1.msra.mxu0 %v517
        %1377 = vmatprep.subr.mxu0 %v522
        %1378 = vmatpush1.msra.mxu0 %v521
        %1379 = vmatprep.subr.mxu0 %v526
        %1380 = vmatpush1.msra.mxu0 %v525
        %1381 = vmatprep.subr.mxu0 %v530
        %1382 = vmatpush1.msra.mxu0 %v529
        %1383 = vmatprep.subr.mxu0 %v534
        %1384 = vmatpush1.msra.mxu0 %v533
        %1385 = vmatprep.subr.mxu0 %v538
        %1386 = vmatpush1.msra.mxu0 %v537
        %1387 = vmatprep.subr.mxu0 %v542
        %1388 = vmatpush1.msra.mxu0 %v541
        %1389 = vmatprep.subr.mxu0 %v546
        %1390 = vmatpush1.msra.mxu0 %v545
        %1391 = vmatprep.subr.mxu0 %v550
        %1392 = vmatpush1.msra.mxu0 %v549
        %1393 = vmatprep.subr.mxu0 %v554
        %1394 = vmatpush1.msra.mxu0 %v553
        %1395 = vmatprep.subr.mxu0 %v558
        %1396 = vmatpush1.msra.mxu0 %v557
        %1397 = vmatprep.subr.mxu0 %v562
        %1398 = vmatpush1.msra.mxu0 %v561
        %1399 = vmatprep.subr.mxu0 %v566
        %1400 = vmatpush1.msra.mxu0 %v565
        %1401 = vmatprep.subr.mxu0 %v570
        %1402 = vmatpush1.msra.mxu0 %v569
        %1403 = vmatprep.subr.mxu0 %v574
        %1404 = vmatpush1.msra.mxu0 %v573
        %1405 = vmatprep.subr.mxu0 %v578
        %1406 = vmatpush1.msra.mxu0 %v577
        %1407 = vmatprep.subr.mxu0 %v582
        %1408 = vmatpush1.msra.mxu0 %v581
        %1409 = vmatprep.subr.mxu0 %v586
        %1410 = vmatpush1.msra.mxu0 %v585
        %1411 = vmatprep.mubr.f32.mxu0 %v454
        %1412 = vmatmul.mubr.f32.gmra.mrb[0].mxu0 %v453
        %v1413 = vpop.f32.mrb[0].mxu0
        %v1414 = vadd.f32 %v1183, %v1413
        %v1415 = vpop.f32.mrb[0].mxu0
        %v1416 = vadd.f32 %v1185, %v1415
        %1417 = vmatprep.mubr.f32.mxu0 %v458
        %1418 = vmatmul.mubr.f32.gmra.mrb[0].mxu0 %v457
        %v1419 = vpop.f32.mrb[0].mxu0
        %v1420 = vadd.f32 %v1189, %v1419
        %v1421 = vpop.f32.mrb[0].mxu0
        %v1422 = vadd.f32 %v1191, %v1421
        %1423 = vdwg.mxu0
        %1424 = vmatprep.subr.mxu0 %v590
        %1425 = vmatpush1.msra.mxu0 %v589
        %1426 = vmatprep.subr.mxu0 %v594
        %1427 = vmatpush1.msra.mxu0 %v593
        %1428 = vmatprep.subr.mxu0 %v598
        %1429 = vmatpush1.msra.mxu0 %v597
        %1430 = vmatprep.subr.mxu0 %v602
        %1431 = vmatpush1.msra.mxu0 %v601
        %1432 = vmatprep.subr.mxu0 %v606
        %1433 = vmatpush1.msra.mxu0 %v605
        %1434 = vmatprep.subr.mxu0 %v610
        %1435 = vmatpush1.msra.mxu0 %v609
        %1436 = vmatprep.subr.mxu0 %v614
        %1437 = vmatpush1.msra.mxu0 %v613
        %1438 = vmatprep.subr.mxu0 %v618
        %1439 = vmatpush1.msra.mxu0 %v617
        %1440 = vmatprep.subr.mxu0 %v622
        %1441 = vmatpush1.msra.mxu0 %v621
        %1442 = vmatprep.subr.mxu0 %v626
        %1443 = vmatpush1.msra.mxu0 %v625
        %1444 = vmatprep.subr.mxu0 %v630
        %1445 = vmatpush1.msra.mxu0 %v629
        %1446 = vmatprep.subr.mxu0 %v634
        %1447 = vmatpush1.msra.mxu0 %v633
        %1448 = vmatprep.subr.mxu0 %v638
        %1449 = vmatpush1.msra.mxu0 %v637
        %1450 = vmatprep.subr.mxu0 %v642
        %1451 = vmatpush1.msra.mxu0 %v641
        %1452 = vmatprep.subr.mxu0 %v646
        %1453 = vmatpush1.msra.mxu0 %v645
        %1454 = vmatprep.subr.mxu0 %v650
        %1455 = vmatpush1.msra.mxu0 %v649
        %1456 = vmatprep.subr.mxu0 %v654
        %1457 = vmatpush1.msra.mxu0 %v653
        %1458 = vmatprep.subr.mxu0 %v658
        %1459 = vmatpush1.msra.mxu0 %v657
        %1460 = vmatprep.subr.mxu0 %v662
        %1461 = vmatpush1.msra.mxu0 %v661
        %1462 = vmatprep.subr.mxu0 %v666
        %1463 = vmatpush1.msra.mxu0 %v665
        %1464 = vmatprep.subr.mxu0 %v670
        %1465 = vmatpush1.msra.mxu0 %v669
        %1466 = vmatprep.subr.mxu0 %v674
        %1467 = vmatpush1.msra.mxu0 %v673
        %1468 = vmatprep.subr.mxu0 %v678
        %1469 = vmatpush1.msra.mxu0 %v677
        %1470 = vmatprep.subr.mxu0 %v682
        %1471 = vmatpush1.msra.mxu0 %v681
        %1472 = vmatprep.subr.mxu0 %v686
        %1473 = vmatpush1.msra.mxu0 %v685
        %1474 = vmatprep.subr.mxu0 %v690
        %1475 = vmatpush1.msra.mxu0 %v689
        %1476 = vmatprep.subr.mxu0 %v694
        %1477 = vmatpush1.msra.mxu0 %v693
        %1478 = vmatprep.subr.mxu0 %v698
        %1479 = vmatpush1.msra.mxu0 %v697
        %1480 = vmatprep.subr.mxu0 %v702
        %1481 = vmatpush1.msra.mxu0 %v701
        %1482 = vmatprep.subr.mxu0 %v706
        %1483 = vmatpush1.msra.mxu0 %v705
        %1484 = vmatprep.subr.mxu0 %v710
        %1485 = vmatpush1.msra.mxu0 %v709
        %1486 = vmatprep.subr.mxu0 %v714
        %1487 = vmatpush1.msra.mxu0 %v713
        %1488 = vmatprep.mubr.f32.mxu0 %v456
        %1489 = vmatmul.mubr.f32.gmra.mrb[0].mxu0 %v455
        %v1490 = vpop.f32.mrb[0].mxu0
        %v1491 = vadd.f32 %v1414, %v1490
        %v1492 = vpop.f32.mrb[0].mxu0
        %v1493 = vadd.f32 %v1416, %v1492
        %1494 = vmatprep.mubr.f32.mxu0 %v460
        %1495 = vmatmul.mubr.f32.gmra.mrb[0].mxu0 %v459
        %v1496 = vpop.f32.mrb[0].mxu0
        %v1497 = vadd.f32 %v1420, %v1496
        %v1498 = vpop.f32.mrb[0].mxu0
        %v1499 = vadd.f32 %v1422, %v1498
        %1500 = vdwg.mxu0
        %1501 = vmatprep.subr.mxu0 %v464
        %1502 = vmatpush1.msra.mxu0 %v463
        %1503 = vmatprep.subr.mxu0 %v468
        %1504 = vmatpush1.msra.mxu0 %v467
        %1505 = vmatprep.subr.mxu0 %v472
        %1506 = vmatpush1.msra.mxu0 %v471
        %1507 = vmatprep.subr.mxu0 %v476
        %1508 = vmatpush1.msra.mxu0 %v475
        %1509 = vmatprep.subr.mxu0 %v480
        %1510 = vmatpush1.msra.mxu0 %v479
        %1511 = vmatprep.subr.mxu0 %v484
        %1512 = vmatpush1.msra.mxu0 %v483
        %1513 = vmatprep.subr.mxu0 %v488
        %1514 = vmatpush1.msra.mxu0 %v487
        %1515 = vmatprep.subr.mxu0 %v492
        %1516 = vmatpush1.msra.mxu0 %v491
        %1517 = vmatprep.subr.mxu0 %v496
        %1518 = vmatpush1.msra.mxu0 %v495
        %1519 = vmatprep.subr.mxu0 %v500
        %1520 = vmatpush1.msra.mxu0 %v499
        %1521 = vmatprep.subr.mxu0 %v504
        %1522 = vmatpush1.msra.mxu0 %v503
        %1523 = vmatprep.subr.mxu0 %v508
        %1524 = vmatpush1.msra.mxu0 %v507
        %1525 = vmatprep.subr.mxu0 %v512
        %1526 = vmatpush1.msra.mxu0 %v511
        %1527 = vmatprep.subr.mxu0 %v516
        %1528 = vmatpush1.msra.mxu0 %v515
        %1529 = vmatprep.subr.mxu0 %v520
        %1530 = vmatpush1.msra.mxu0 %v519
        %1531 = vmatprep.subr.mxu0 %v524
        %1532 = vmatpush1.msra.mxu0 %v523
        %1533 = vmatprep.subr.mxu0 %v528
        %1534 = vmatpush1.msra.mxu0 %v527
        %1535 = vmatprep.subr.mxu0 %v532
        %1536 = vmatpush1.msra.mxu0 %v531
        %1537 = vmatprep.subr.mxu0 %v536
        %1538 = vmatpush1.msra.mxu0 %v535
        %1539 = vmatprep.subr.mxu0 %v540
        %1540 = vmatpush1.msra.mxu0 %v539
        %1541 = vmatprep.subr.mxu0 %v544
        %1542 = vmatpush1.msra.mxu0 %v543
        %1543 = vmatprep.subr.mxu0 %v548
        %1544 = vmatpush1.msra.mxu0 %v547
        %1545 = vmatprep.subr.mxu0 %v552
        %1546 = vmatpush1.msra.mxu0 %v551
        %1547 = vmatprep.subr.mxu0 %v556
        %1548 = vmatpush1.msra.mxu0 %v555
        %1549 = vmatprep.subr.mxu0 %v560
        %1550 = vmatpush1.msra.mxu0 %v559
        %1551 = vmatprep.subr.mxu0 %v564
        %1552 = vmatpush1.msra.mxu0 %v563
        %1553 = vmatprep.subr.mxu0 %v568
        %1554 = vmatpush1.msra.mxu0 %v567
        %1555 = vmatprep.subr.mxu0 %v572
        %1556 = vmatpush1.msra.mxu0 %v571
        %1557 = vmatprep.subr.mxu0 %v576
        %1558 = vmatpush1.msra.mxu0 %v575
        %1559 = vmatprep.subr.mxu0 %v580
        %1560 = vmatpush1.msra.mxu0 %v579
        %1561 = vmatprep.subr.mxu0 %v584
        %1562 = vmatpush1.msra.mxu0 %v583
        %1563 = vmatprep.subr.mxu0 %v588
        %1564 = vmatpush1.msra.mxu0 %v587
        %1565 = vmatprep.mubr.f32.mxu0 %v454
        %1566 = vmatmul.mubr.f32.gmra.mrb[0].mxu0 %v453
        %v1567 = vpop.f32.mrb[0].mxu0
        %v1568 = vadd.f32 %v1337, %v1567
        %v1569 = vpop.f32.mrb[0].mxu0
        %v1570 = vadd.f32 %v1339, %v1569
        %1571 = vmatprep.mubr.f32.mxu0 %v458
        %1572 = vmatmul.mubr.f32.gmra.mrb[0].mxu0 %v457
        %v1573 = vpop.f32.mrb[0].mxu0
        %v1574 = vadd.f32 %v1343, %v1573
        %v1575 = vpop.f32.mrb[0].mxu0
        %v1576 = vadd.f32 %v1345, %v1575
        %1577 = vdwg.mxu0
        %1578 = vmatprep.subr.mxu0 %v592
        %1579 = vmatpush1.msra.mxu0 %v591
        %1580 = vmatprep.subr.mxu0 %v596
        %1581 = vmatpush1.msra.mxu0 %v595
        %1582 = vmatprep.subr.mxu0 %v600
        %1583 = vmatpush1.msra.mxu0 %v599
        %1584 = vmatprep.subr.mxu0 %v604
        %1585 = vmatpush1.msra.mxu0 %v603
        %1586 = vmatprep.subr.mxu0 %v608
        %1587 = vmatpush1.msra.mxu0 %v607
        %1588 = vmatprep.subr.mxu0 %v612
        %1589 = vmatpush1.msra.mxu0 %v611
        %1590 = vmatprep.subr.mxu0 %v616
        %1591 = vmatpush1.msra.mxu0 %v615
        %1592 = vmatprep.subr.mxu0 %v620
        %1593 = vmatpush1.msra.mxu0 %v619
        %1594 = vmatprep.subr.mxu0 %v624
        %1595 = vmatpush1.msra.mxu0 %v623
        %1596 = vmatprep.subr.mxu0 %v628
        %1597 = vmatpush1.msra.mxu0 %v627
        %1598 = vmatprep.subr.mxu0 %v632
        %1599 = vmatpush1.msra.mxu0 %v631
        %1600 = vmatprep.subr.mxu0 %v636
        %1601 = vmatpush1.msra.mxu0 %v635
        %1602 = vmatprep.subr.mxu0 %v640
        %1603 = vmatpush1.msra.mxu0 %v639
        %1604 = vmatprep.subr.mxu0 %v644
        %1605 = vmatpush1.msra.mxu0 %v643
        %1606 = vmatprep.subr.mxu0 %v648
        %1607 = vmatpush1.msra.mxu0 %v647
        %1608 = vmatprep.subr.mxu0 %v652
        %1609 = vmatpush1.msra.mxu0 %v651
        %1610 = vmatprep.subr.mxu0 %v656
        %1611 = vmatpush1.msra.mxu0 %v655
        %1612 = vmatprep.subr.mxu0 %v660
        %1613 = vmatpush1.msra.mxu0 %v659
        %1614 = vmatprep.subr.mxu0 %v664
        %1615 = vmatpush1.msra.mxu0 %v663
        %1616 = vmatprep.subr.mxu0 %v668
        %1617 = vmatpush1.msra.mxu0 %v667
        %1618 = vmatprep.subr.mxu0 %v672
        %1619 = vmatpush1.msra.mxu0 %v671
        %1620 = vmatprep.subr.mxu0 %v676
        %1621 = vmatpush1.msra.mxu0 %v675
        %1622 = vmatprep.subr.mxu0 %v680
        %1623 = vmatpush1.msra.mxu0 %v679
        %1624 = vmatprep.subr.mxu0 %v684
        %1625 = vmatpush1.msra.mxu0 %v683
        %1626 = vmatprep.subr.mxu0 %v688
        %1627 = vmatpush1.msra.mxu0 %v687
        %1628 = vmatprep.subr.mxu0 %v692
        %1629 = vmatpush1.msra.mxu0 %v691
        %1630 = vmatprep.subr.mxu0 %v696
        %1631 = vmatpush1.msra.mxu0 %v695
        %1632 = vmatprep.subr.mxu0 %v700
        %1633 = vmatpush1.msra.mxu0 %v699
        %1634 = vmatprep.subr.mxu0 %v704
        %1635 = vmatpush1.msra.mxu0 %v703
        %1636 = vmatprep.subr.mxu0 %v708
        %1637 = vmatpush1.msra.mxu0 %v707
        %1638 = vmatprep.subr.mxu0 %v712
        %1639 = vmatpush1.msra.mxu0 %v711
        %1640 = vmatprep.subr.mxu0 %v716
        %1641 = vmatpush1.msra.mxu0 %v715
        %1642 = vmatprep.mubr.f32.mxu0 %v456
        %1643 = vmatmul.mubr.f32.gmra.mrb[0].mxu0 %v455
        %v1644 = vpop.f32.mrb[0].mxu0
        %v1645 = vadd.f32 %v1568, %v1644
        %v1646 = vpop.f32.mrb[0].mxu0
        %v1647 = vadd.f32 %v1570, %v1646
        %1648 = vmatprep.mubr.f32.mxu0 %v460
        %1649 = vmatmul.mubr.f32.gmra.mrb[0].mxu0 %v459
        %v1650 = vpop.f32.mrb[0].mxu0
        %v1651 = vadd.f32 %v1574, %v1650
        %v1652 = vpop.f32.mrb[0].mxu0
        %v1653 = vadd.f32 %v1576, %v1652
        %1654 = vdwg.mxu0
        %v1655 = vld [vmem:[#allocation2] sm:$0xfc]
        %v1656 = vld [vmem:[#allocation2 + $0x8] sm:$0xfc]
        %v1657 = vld [vmem:[#allocation2 + $0x10] sm:$0xfc]
        %v1658 = vld [vmem:[#allocation2 + $0x18] sm:$0xfc]
        %v1659 = vld [vmem:[#allocation2 + $0x20] sm:$0x3]
        %v1660 = vld [vmem:[#allocation2 + $0x28] sm:$0x3]
        %v1661 = vld [vmem:[#allocation2 + $0x30] sm:$0x3]
        %v1662 = vld [vmem:[#allocation2 + $0x38] sm:$0x3]
        %v1663 = vld [vmem:[#allocation2 + $0x40] sm:$0xfc]
        %v1664 = vld [vmem:[#allocation2 + $0x48] sm:$0xfc]
        %v1665 = vld [vmem:[#allocation2 + $0x50] sm:$0xfc]
        %v1666 = vld [vmem:[#allocation2 + $0x58] sm:$0xfc]
        %v1667 = vld [vmem:[#allocation2 + $0x60] sm:$0x3]
        %v1668 = vld [vmem:[#allocation2 + $0x68] sm:$0x3]
        %v1669 = vld [vmem:[#allocation2 + $0x70] sm:$0x3]
        %v1670 = vld [vmem:[#allocation2 + $0x78] sm:$0x3]
        %vm1687 = vcmask 1045504
        %v1688 = vrot.slane %v1655, 2
        %v1689 = vrot.slane %v1659, 2
        %v1690 = vsel %vm1687, %v1688, %v1689
        %v1691 = vrot.slane %v1656, 2
        %v1692 = vrot.slane %v1660, 2
        %v1693 = vsel %vm1687, %v1691, %v1692
        %v1694 = vrot.slane %v1657, 2
        %v1695 = vrot.slane %v1661, 2
        %v1696 = vsel %vm1687, %v1694, %v1695
        %v1697 = vrot.slane %v1658, 2
        %v1698 = vrot.slane %v1662, 2
        %v1699 = vsel %vm1687, %v1697, %v1698
        %v1700 = vrot.slane %v1663, 2
        %v1701 = vrot.slane %v1667, 2
        %v1702 = vsel %vm1687, %v1700, %v1701
        %v1703 = vrot.slane %v1664, 2
        %v1704 = vrot.slane %v1668, 2
        %v1705 = vsel %vm1687, %v1703, %v1704
        %v1706 = vrot.slane %v1665, 2
        %v1707 = vrot.slane %v1669, 2
        %v1708 = vsel %vm1687, %v1706, %v1707
        %v1709 = vrot.slane %v1666, 2
        %v1710 = vrot.slane %v1670, 2
        %v1711 = vsel %vm1687, %v1709, %v1710
        %s1720 = scalar_lea.vmem [#allocation7], 4096
        %v1721 = vld [vmem:[%s1720] sm:$0xff]
        %v1722 = vld [vmem:[%s1720 + $0x8] sm:$0xff]
        %v1723 = vld [vmem:[%s1720 + $0x10] sm:$0xff]
        %v1724 = vld [vmem:[%s1720 + $0x18] sm:$0xff]
        %v1725 = vld [vmem:[%s1720 + $0x20] sm:$0xff]
        %v1726 = vld [vmem:[%s1720 + $0x28] sm:$0xff]
        %v1727 = vld [vmem:[%s1720 + $0x30] sm:$0xff]
        %v1728 = vld [vmem:[%s1720 + $0x38] sm:$0xff]
        %v1729 = vld [vmem:[%s1720 + $0x40] sm:$0xff]
        %v1730 = vld [vmem:[%s1720 + $0x48] sm:$0xff]
        %v1731 = vld [vmem:[%s1720 + $0x50] sm:$0xff]
        %v1732 = vld [vmem:[%s1720 + $0x58] sm:$0xff]
        %v1733 = vld [vmem:[%s1720 + $0x60] sm:$0xff]
        %v1734 = vld [vmem:[%s1720 + $0x68] sm:$0xff]
        %v1735 = vld [vmem:[%s1720 + $0x70] sm:$0xff]
        %v1736 = vld [vmem:[%s1720 + $0x78] sm:$0xff]
        %v1737 = vld [vmem:[%s1720 + $0x80] sm:$0xff]
        %v1738 = vld [vmem:[%s1720 + $0x88] sm:$0xff]
        %v1739 = vld [vmem:[%s1720 + $0x90] sm:$0xff]
        %v1740 = vld [vmem:[%s1720 + $0x98] sm:$0xff]
        %v1741 = vld [vmem:[%s1720 + $0xa0] sm:$0xff]
        %v1742 = vld [vmem:[%s1720 + $0xa8] sm:$0xff]
        %v1743 = vld [vmem:[%s1720 + $0xb0] sm:$0xff]
        %v1744 = vld [vmem:[%s1720 + $0xb8] sm:$0xff]
        %v1745 = vld [vmem:[%s1720 + $0xc0] sm:$0xff]
        %v1746 = vld [vmem:[%s1720 + $0xc8] sm:$0xff]
        %v1747 = vld [vmem:[%s1720 + $0xd0] sm:$0xff]
        %v1748 = vld [vmem:[%s1720 + $0xd8] sm:$0xff]
        %v1749 = vld [vmem:[%s1720 + $0xe0] sm:$0xff]
        %v1750 = vld [vmem:[%s1720 + $0xe8] sm:$0xff]
        %v1751 = vld [vmem:[%s1720 + $0xf0] sm:$0xff]
        %v1752 = vld [vmem:[%s1720 + $0xf8] sm:$0xff]
        %v1753 = vld [vmem:[%s1720 + $0x100] sm:$0xff]
        %v1754 = vld [vmem:[%s1720 + $0x108] sm:$0xff]
        %v1755 = vld [vmem:[%s1720 + $0x110] sm:$0xff]
        %v1756 = vld [vmem:[%s1720 + $0x118] sm:$0xff]
        %v1757 = vld [vmem:[%s1720 + $0x120] sm:$0xff]
        %v1758 = vld [vmem:[%s1720 + $0x128] sm:$0xff]
        %v1759 = vld [vmem:[%s1720 + $0x130] sm:$0xff]
        %v1760 = vld [vmem:[%s1720 + $0x138] sm:$0xff]
        %v1761 = vld [vmem:[%s1720 + $0x140] sm:$0xff]
        %v1762 = vld [vmem:[%s1720 + $0x148] sm:$0xff]
        %v1763 = vld [vmem:[%s1720 + $0x150] sm:$0xff]
        %v1764 = vld [vmem:[%s1720 + $0x158] sm:$0xff]
        %v1765 = vld [vmem:[%s1720 + $0x160] sm:$0xff]
        %v1766 = vld [vmem:[%s1720 + $0x168] sm:$0xff]
        %v1767 = vld [vmem:[%s1720 + $0x170] sm:$0xff]
        %v1768 = vld [vmem:[%s1720 + $0x178] sm:$0xff]
        %v1769 = vld [vmem:[%s1720 + $0x180] sm:$0xff]
        %v1770 = vld [vmem:[%s1720 + $0x188] sm:$0xff]
        %v1771 = vld [vmem:[%s1720 + $0x190] sm:$0xff]
        %v1772 = vld [vmem:[%s1720 + $0x198] sm:$0xff]
        %v1773 = vld [vmem:[%s1720 + $0x1a0] sm:$0xff]
        %v1774 = vld [vmem:[%s1720 + $0x1a8] sm:$0xff]
        %v1775 = vld [vmem:[%s1720 + $0x1b0] sm:$0xff]
        %v1776 = vld [vmem:[%s1720 + $0x1b8] sm:$0xff]
        %v1777 = vld [vmem:[%s1720 + $0x1c0] sm:$0xff]
        %v1778 = vld [vmem:[%s1720 + $0x1c8] sm:$0xff]
        %v1779 = vld [vmem:[%s1720 + $0x1d0] sm:$0xff]
        %v1780 = vld [vmem:[%s1720 + $0x1d8] sm:$0xff]
        %v1781 = vld [vmem:[%s1720 + $0x1e0] sm:$0xff]
        %v1782 = vld [vmem:[%s1720 + $0x1e8] sm:$0xff]
        %v1783 = vld [vmem:[%s1720 + $0x1f0] sm:$0xff]
        %v1784 = vld [vmem:[%s1720 + $0x1f8] sm:$0xff]
        %v1785 = vld [vmem:[%s1720 + $0x200] sm:$0xff]
        %v1786 = vld [vmem:[%s1720 + $0x208] sm:$0xff]
        %v1787 = vld [vmem:[%s1720 + $0x210] sm:$0xff]
        %v1788 = vld [vmem:[%s1720 + $0x218] sm:$0xff]
        %v1789 = vld [vmem:[%s1720 + $0x220] sm:$0xff]
        %v1790 = vld [vmem:[%s1720 + $0x228] sm:$0xff]
        %v1791 = vld [vmem:[%s1720 + $0x230] sm:$0xff]
        %v1792 = vld [vmem:[%s1720 + $0x238] sm:$0xff]
        %v1793 = vld [vmem:[%s1720 + $0x240] sm:$0xff]
        %v1794 = vld [vmem:[%s1720 + $0x248] sm:$0xff]
        %v1795 = vld [vmem:[%s1720 + $0x250] sm:$0xff]
        %v1796 = vld [vmem:[%s1720 + $0x258] sm:$0xff]
        %v1797 = vld [vmem:[%s1720 + $0x260] sm:$0xff]
        %v1798 = vld [vmem:[%s1720 + $0x268] sm:$0xff]
        %v1799 = vld [vmem:[%s1720 + $0x270] sm:$0xff]
        %v1800 = vld [vmem:[%s1720 + $0x278] sm:$0xff]
        %v1801 = vld [vmem:[%s1720 + $0x280] sm:$0xff]
        %v1802 = vld [vmem:[%s1720 + $0x288] sm:$0xff]
        %v1803 = vld [vmem:[%s1720 + $0x290] sm:$0xff]
        %v1804 = vld [vmem:[%s1720 + $0x298] sm:$0xff]
        %v1805 = vld [vmem:[%s1720 + $0x2a0] sm:$0xff]
        %v1806 = vld [vmem:[%s1720 + $0x2a8] sm:$0xff]
        %v1807 = vld [vmem:[%s1720 + $0x2b0] sm:$0xff]
        %v1808 = vld [vmem:[%s1720 + $0x2b8] sm:$0xff]
        %v1809 = vld [vmem:[%s1720 + $0x2c0] sm:$0xff]
        %v1810 = vld [vmem:[%s1720 + $0x2c8] sm:$0xff]
        %v1811 = vld [vmem:[%s1720 + $0x2d0] sm:$0xff]
        %v1812 = vld [vmem:[%s1720 + $0x2d8] sm:$0xff]
        %v1813 = vld [vmem:[%s1720 + $0x2e0] sm:$0xff]
        %v1814 = vld [vmem:[%s1720 + $0x2e8] sm:$0xff]
        %v1815 = vld [vmem:[%s1720 + $0x2f0] sm:$0xff]
        %v1816 = vld [vmem:[%s1720 + $0x2f8] sm:$0xff]
        %v1817 = vld [vmem:[%s1720 + $0x300] sm:$0xff]
        %v1818 = vld [vmem:[%s1720 + $0x308] sm:$0xff]
        %v1819 = vld [vmem:[%s1720 + $0x310] sm:$0xff]
        %v1820 = vld [vmem:[%s1720 + $0x318] sm:$0xff]
        %v1821 = vld [vmem:[%s1720 + $0x320] sm:$0xff]
        %v1822 = vld [vmem:[%s1720 + $0x328] sm:$0xff]
        %v1823 = vld [vmem:[%s1720 + $0x330] sm:$0xff]
        %v1824 = vld [vmem:[%s1720 + $0x338] sm:$0xff]
        %v1825 = vld [vmem:[%s1720 + $0x340] sm:$0xff]
        %v1826 = vld [vmem:[%s1720 + $0x348] sm:$0xff]
        %v1827 = vld [vmem:[%s1720 + $0x350] sm:$0xff]
        %v1828 = vld [vmem:[%s1720 + $0x358] sm:$0xff]
        %v1829 = vld [vmem:[%s1720 + $0x360] sm:$0xff]
        %v1830 = vld [vmem:[%s1720 + $0x368] sm:$0xff]
        %v1831 = vld [vmem:[%s1720 + $0x370] sm:$0xff]
        %v1832 = vld [vmem:[%s1720 + $0x378] sm:$0xff]
        %v1833 = vld [vmem:[%s1720 + $0x380] sm:$0xff]
        %v1834 = vld [vmem:[%s1720 + $0x388] sm:$0xff]
        %v1835 = vld [vmem:[%s1720 + $0x390] sm:$0xff]
        %v1836 = vld [vmem:[%s1720 + $0x398] sm:$0xff]
        %v1837 = vld [vmem:[%s1720 + $0x3a0] sm:$0xff]
        %v1838 = vld [vmem:[%s1720 + $0x3a8] sm:$0xff]
        %v1839 = vld [vmem:[%s1720 + $0x3b0] sm:$0xff]
        %v1840 = vld [vmem:[%s1720 + $0x3b8] sm:$0xff]
        %v1841 = vld [vmem:[%s1720 + $0x3c0] sm:$0xff]
        %v1842 = vld [vmem:[%s1720 + $0x3c8] sm:$0xff]
        %v1843 = vld [vmem:[%s1720 + $0x3d0] sm:$0xff]
        %v1844 = vld [vmem:[%s1720 + $0x3d8] sm:$0xff]
        %v1845 = vld [vmem:[%s1720 + $0x3e0] sm:$0xff]
        %v1846 = vld [vmem:[%s1720 + $0x3e8] sm:$0xff]
        %v1847 = vld [vmem:[%s1720 + $0x3f0] sm:$0xff]
        %v1848 = vld [vmem:[%s1720 + $0x3f8] sm:$0xff]
        %v1849 = vld [vmem:[%s1720 + $0x400] sm:$0xff]
        %v1850 = vld [vmem:[%s1720 + $0x408] sm:$0xff]
        %v1851 = vld [vmem:[%s1720 + $0x410] sm:$0xff]
        %v1852 = vld [vmem:[%s1720 + $0x418] sm:$0xff]
        %v1853 = vld [vmem:[%s1720 + $0x420] sm:$0xff]
        %v1854 = vld [vmem:[%s1720 + $0x428] sm:$0xff]
        %v1855 = vld [vmem:[%s1720 + $0x430] sm:$0xff]
        %v1856 = vld [vmem:[%s1720 + $0x438] sm:$0xff]
        %v1857 = vld [vmem:[%s1720 + $0x440] sm:$0xff]
        %v1858 = vld [vmem:[%s1720 + $0x448] sm:$0xff]
        %v1859 = vld [vmem:[%s1720 + $0x450] sm:$0xff]
        %v1860 = vld [vmem:[%s1720 + $0x458] sm:$0xff]
        %v1861 = vld [vmem:[%s1720 + $0x460] sm:$0xff]
        %v1862 = vld [vmem:[%s1720 + $0x468] sm:$0xff]
        %v1863 = vld [vmem:[%s1720 + $0x470] sm:$0xff]
        %v1864 = vld [vmem:[%s1720 + $0x478] sm:$0xff]
        %v1865 = vld [vmem:[%s1720 + $0x480] sm:$0xff]
        %v1866 = vld [vmem:[%s1720 + $0x488] sm:$0xff]
        %v1867 = vld [vmem:[%s1720 + $0x490] sm:$0xff]
        %v1868 = vld [vmem:[%s1720 + $0x498] sm:$0xff]
        %v1869 = vld [vmem:[%s1720 + $0x4a0] sm:$0xff]
        %v1870 = vld [vmem:[%s1720 + $0x4a8] sm:$0xff]
        %v1871 = vld [vmem:[%s1720 + $0x4b0] sm:$0xff]
        %v1872 = vld [vmem:[%s1720 + $0x4b8] sm:$0xff]
        %v1873 = vld [vmem:[%s1720 + $0x4c0] sm:$0xff]
        %v1874 = vld [vmem:[%s1720 + $0x4c8] sm:$0xff]
        %v1875 = vld [vmem:[%s1720 + $0x4d0] sm:$0xff]
        %v1876 = vld [vmem:[%s1720 + $0x4d8] sm:$0xff]
        %v1877 = vld [vmem:[%s1720 + $0x4e0] sm:$0xff]
        %v1878 = vld [vmem:[%s1720 + $0x4e8] sm:$0xff]
        %v1879 = vld [vmem:[%s1720 + $0x4f0] sm:$0xff]
        %v1880 = vld [vmem:[%s1720 + $0x4f8] sm:$0xff]
        %v1881 = vld [vmem:[%s1720 + $0x500] sm:$0xff]
        %v1882 = vld [vmem:[%s1720 + $0x508] sm:$0xff]
        %v1883 = vld [vmem:[%s1720 + $0x510] sm:$0xff]
        %v1884 = vld [vmem:[%s1720 + $0x518] sm:$0xff]
        %v1885 = vld [vmem:[%s1720 + $0x520] sm:$0xff]
        %v1886 = vld [vmem:[%s1720 + $0x528] sm:$0xff]
        %v1887 = vld [vmem:[%s1720 + $0x530] sm:$0xff]
        %v1888 = vld [vmem:[%s1720 + $0x538] sm:$0xff]
        %v1889 = vld [vmem:[%s1720 + $0x540] sm:$0xff]
        %v1890 = vld [vmem:[%s1720 + $0x548] sm:$0xff]
        %v1891 = vld [vmem:[%s1720 + $0x550] sm:$0xff]
        %v1892 = vld [vmem:[%s1720 + $0x558] sm:$0xff]
        %v1893 = vld [vmem:[%s1720 + $0x560] sm:$0xff]
        %v1894 = vld [vmem:[%s1720 + $0x568] sm:$0xff]
        %v1895 = vld [vmem:[%s1720 + $0x570] sm:$0xff]
        %v1896 = vld [vmem:[%s1720 + $0x578] sm:$0xff]
        %v1897 = vld [vmem:[%s1720 + $0x580] sm:$0xff]
        %v1898 = vld [vmem:[%s1720 + $0x588] sm:$0xff]
        %v1899 = vld [vmem:[%s1720 + $0x590] sm:$0xff]
        %v1900 = vld [vmem:[%s1720 + $0x598] sm:$0xff]
        %v1901 = vld [vmem:[%s1720 + $0x5a0] sm:$0xff]
        %v1902 = vld [vmem:[%s1720 + $0x5a8] sm:$0xff]
        %v1903 = vld [vmem:[%s1720 + $0x5b0] sm:$0xff]
        %v1904 = vld [vmem:[%s1720 + $0x5b8] sm:$0xff]
        %v1905 = vld [vmem:[%s1720 + $0x5c0] sm:$0xff]
        %v1906 = vld [vmem:[%s1720 + $0x5c8] sm:$0xff]
        %v1907 = vld [vmem:[%s1720 + $0x5d0] sm:$0xff]
        %v1908 = vld [vmem:[%s1720 + $0x5d8] sm:$0xff]
        %v1909 = vld [vmem:[%s1720 + $0x5e0] sm:$0xff]
        %v1910 = vld [vmem:[%s1720 + $0x5e8] sm:$0xff]
        %v1911 = vld [vmem:[%s1720 + $0x5f0] sm:$0xff]
        %v1912 = vld [vmem:[%s1720 + $0x5f8] sm:$0xff]
        %v1913 = vld [vmem:[%s1720 + $0x600] sm:$0xff]
        %v1914 = vld [vmem:[%s1720 + $0x608] sm:$0xff]
        %v1915 = vld [vmem:[%s1720 + $0x610] sm:$0xff]
        %v1916 = vld [vmem:[%s1720 + $0x618] sm:$0xff]
        %v1917 = vld [vmem:[%s1720 + $0x620] sm:$0xff]
        %v1918 = vld [vmem:[%s1720 + $0x628] sm:$0xff]
        %v1919 = vld [vmem:[%s1720 + $0x630] sm:$0xff]
        %v1920 = vld [vmem:[%s1720 + $0x638] sm:$0xff]
        %v1921 = vld [vmem:[%s1720 + $0x640] sm:$0xff]
        %v1922 = vld [vmem:[%s1720 + $0x648] sm:$0xff]
        %v1923 = vld [vmem:[%s1720 + $0x650] sm:$0xff]
        %v1924 = vld [vmem:[%s1720 + $0x658] sm:$0xff]
        %v1925 = vld [vmem:[%s1720 + $0x660] sm:$0xff]
        %v1926 = vld [vmem:[%s1720 + $0x668] sm:$0xff]
        %v1927 = vld [vmem:[%s1720 + $0x670] sm:$0xff]
        %v1928 = vld [vmem:[%s1720 + $0x678] sm:$0xff]
        %v1929 = vld [vmem:[%s1720 + $0x680] sm:$0xff]
        %v1930 = vld [vmem:[%s1720 + $0x688] sm:$0xff]
        %v1931 = vld [vmem:[%s1720 + $0x690] sm:$0xff]
        %v1932 = vld [vmem:[%s1720 + $0x698] sm:$0xff]
        %v1933 = vld [vmem:[%s1720 + $0x6a0] sm:$0xff]
        %v1934 = vld [vmem:[%s1720 + $0x6a8] sm:$0xff]
        %v1935 = vld [vmem:[%s1720 + $0x6b0] sm:$0xff]
        %v1936 = vld [vmem:[%s1720 + $0x6b8] sm:$0xff]
        %v1937 = vld [vmem:[%s1720 + $0x6c0] sm:$0xff]
        %v1938 = vld [vmem:[%s1720 + $0x6c8] sm:$0xff]
        %v1939 = vld [vmem:[%s1720 + $0x6d0] sm:$0xff]
        %v1940 = vld [vmem:[%s1720 + $0x6d8] sm:$0xff]
        %v1941 = vld [vmem:[%s1720 + $0x6e0] sm:$0xff]
        %v1942 = vld [vmem:[%s1720 + $0x6e8] sm:$0xff]
        %v1943 = vld [vmem:[%s1720 + $0x6f0] sm:$0xff]
        %v1944 = vld [vmem:[%s1720 + $0x6f8] sm:$0xff]
        %v1945 = vld [vmem:[%s1720 + $0x700] sm:$0xff]
        %v1946 = vld [vmem:[%s1720 + $0x708] sm:$0xff]
        %v1947 = vld [vmem:[%s1720 + $0x710] sm:$0xff]
        %v1948 = vld [vmem:[%s1720 + $0x718] sm:$0xff]
        %v1949 = vld [vmem:[%s1720 + $0x720] sm:$0xff]
        %v1950 = vld [vmem:[%s1720 + $0x728] sm:$0xff]
        %v1951 = vld [vmem:[%s1720 + $0x730] sm:$0xff]
        %v1952 = vld [vmem:[%s1720 + $0x738] sm:$0xff]
        %v1953 = vld [vmem:[%s1720 + $0x740] sm:$0xff]
        %v1954 = vld [vmem:[%s1720 + $0x748] sm:$0xff]
        %v1955 = vld [vmem:[%s1720 + $0x750] sm:$0xff]
        %v1956 = vld [vmem:[%s1720 + $0x758] sm:$0xff]
        %v1957 = vld [vmem:[%s1720 + $0x760] sm:$0xff]
        %v1958 = vld [vmem:[%s1720 + $0x768] sm:$0xff]
        %v1959 = vld [vmem:[%s1720 + $0x770] sm:$0xff]
        %v1960 = vld [vmem:[%s1720 + $0x778] sm:$0xff]
        %v1961 = vld [vmem:[%s1720 + $0x780] sm:$0xff]
        %v1962 = vld [vmem:[%s1720 + $0x788] sm:$0xff]
        %v1963 = vld [vmem:[%s1720 + $0x790] sm:$0xff]
        %v1964 = vld [vmem:[%s1720 + $0x798] sm:$0xff]
        %v1965 = vld [vmem:[%s1720 + $0x7a0] sm:$0xff]
        %v1966 = vld [vmem:[%s1720 + $0x7a8] sm:$0xff]
        %v1967 = vld [vmem:[%s1720 + $0x7b0] sm:$0xff]
        %v1968 = vld [vmem:[%s1720 + $0x7b8] sm:$0xff]
        %v1969 = vld [vmem:[%s1720 + $0x7c0] sm:$0xff]
        %v1970 = vld [vmem:[%s1720 + $0x7c8] sm:$0xff]
        %v1971 = vld [vmem:[%s1720 + $0x7d0] sm:$0xff]
        %v1972 = vld [vmem:[%s1720 + $0x7d8] sm:$0xff]
        %v1973 = vld [vmem:[%s1720 + $0x7e0] sm:$0xff]
        %v1974 = vld [vmem:[%s1720 + $0x7e8] sm:$0xff]
        %v1975 = vld [vmem:[%s1720 + $0x7f0] sm:$0xff]
        %v1976 = vld [vmem:[%s1720 + $0x7f8] sm:$0xff]
        %1977 = vmatprep.subr.mxu0 %v1722
        %1978 = vmatpush1.msra.mxu0 %v1721
        %1979 = vmatprep.subr.mxu0 %v1726
        %1980 = vmatpush1.msra.mxu0 %v1725
        %1981 = vmatprep.subr.mxu0 %v1730
        %1982 = vmatpush1.msra.mxu0 %v1729
        %1983 = vmatprep.subr.mxu0 %v1734
        %1984 = vmatpush1.msra.mxu0 %v1733
        %1985 = vmatprep.subr.mxu0 %v1738
        %1986 = vmatpush1.msra.mxu0 %v1737
        %1987 = vmatprep.subr.mxu0 %v1742
        %1988 = vmatpush1.msra.mxu0 %v1741
        %1989 = vmatprep.subr.mxu0 %v1746
        %1990 = vmatpush1.msra.mxu0 %v1745
        %1991 = vmatprep.subr.mxu0 %v1750
        %1992 = vmatpush1.msra.mxu0 %v1749
        %1993 = vmatprep.subr.mxu0 %v1754
        %1994 = vmatpush1.msra.mxu0 %v1753
        %1995 = vmatprep.subr.mxu0 %v1758
        %1996 = vmatpush1.msra.mxu0 %v1757
        %1997 = vmatprep.subr.mxu0 %v1762
        %1998 = vmatpush1.msra.mxu0 %v1761
        %1999 = vmatprep.subr.mxu0 %v1766
        %2000 = vmatpush1.msra.mxu0 %v1765
        %2001 = vmatprep.subr.mxu0 %v1770
        %2002 = vmatpush1.msra.mxu0 %v1769
        %2003 = vmatprep.subr.mxu0 %v1774
        %2004 = vmatpush1.msra.mxu0 %v1773
        %2005 = vmatprep.subr.mxu0 %v1778
        %2006 = vmatpush1.msra.mxu0 %v1777
        %2007 = vmatprep.subr.mxu0 %v1782
        %2008 = vmatpush1.msra.mxu0 %v1781
        %2009 = vmatprep.subr.mxu0 %v1786
        %2010 = vmatpush1.msra.mxu0 %v1785
        %2011 = vmatprep.subr.mxu0 %v1790
        %2012 = vmatpush1.msra.mxu0 %v1789
        %2013 = vmatprep.subr.mxu0 %v1794
        %2014 = vmatpush1.msra.mxu0 %v1793
        %2015 = vmatprep.subr.mxu0 %v1798
        %2016 = vmatpush1.msra.mxu0 %v1797
        %2017 = vmatprep.subr.mxu0 %v1802
        %2018 = vmatpush1.msra.mxu0 %v1801
        %2019 = vmatprep.subr.mxu0 %v1806
        %2020 = vmatpush1.msra.mxu0 %v1805
        %2021 = vmatprep.subr.mxu0 %v1810
        %2022 = vmatpush1.msra.mxu0 %v1809
        %2023 = vmatprep.subr.mxu0 %v1814
        %2024 = vmatpush1.msra.mxu0 %v1813
        %2025 = vmatprep.subr.mxu0 %v1818
        %2026 = vmatpush1.msra.mxu0 %v1817
        %2027 = vmatprep.subr.mxu0 %v1822
        %2028 = vmatpush1.msra.mxu0 %v1821
        %2029 = vmatprep.subr.mxu0 %v1826
        %2030 = vmatpush1.msra.mxu0 %v1825
        %2031 = vmatprep.subr.mxu0 %v1830
        %2032 = vmatpush1.msra.mxu0 %v1829
        %2033 = vmatprep.subr.mxu0 %v1834
        %2034 = vmatpush1.msra.mxu0 %v1833
        %2035 = vmatprep.subr.mxu0 %v1838
        %2036 = vmatpush1.msra.mxu0 %v1837
        %2037 = vmatprep.subr.mxu0 %v1842
        %2038 = vmatpush1.msra.mxu0 %v1841
        %2039 = vmatprep.subr.mxu0 %v1846
        %2040 = vmatpush1.msra.mxu0 %v1845
        %2041 = vmatprep.mubr.f32.mxu0 %v1693
        %2042 = vmatmul.mubr.f32.gmra.mrb[0].mxu0 %v1690
        %v2043 = vpop.f32.mrb[0].mxu0
        %v2044 = vadd.f32 0.0, %v2043
        %v2045 = vpop.f32.mrb[0].mxu0
        %v2046 = vadd.f32 0.0, %v2045
        %2047 = vmatprep.mubr.f32.mxu0 %v1705
        %2048 = vmatmul.mubr.f32.gmra.mrb[0].mxu0 %v1702
        %v2049 = vpop.f32.mrb[0].mxu0
        %v2050 = vadd.f32 0.0, %v2049
        %v2051 = vpop.f32.mrb[0].mxu0
        %v2052 = vadd.f32 0.0, %v2051
        %2053 = vdwg.mxu0
        %2054 = vmatprep.subr.mxu0 %v1850
        %2055 = vmatpush1.msra.mxu0 %v1849
        %2056 = vmatprep.subr.mxu0 %v1854
        %2057 = vmatpush1.msra.mxu0 %v1853
        %2058 = vmatprep.subr.mxu0 %v1858
        %2059 = vmatpush1.msra.mxu0 %v1857
        %2060 = vmatprep.subr.mxu0 %v1862
        %2061 = vmatpush1.msra.mxu0 %v1861
        %2062 = vmatprep.subr.mxu0 %v1866
        %2063 = vmatpush1.msra.mxu0 %v1865
        %2064 = vmatprep.subr.mxu0 %v1870
        %2065 = vmatpush1.msra.mxu0 %v1869
        %2066 = vmatprep.subr.mxu0 %v1874
        %2067 = vmatpush1.msra.mxu0 %v1873
        %2068 = vmatprep.subr.mxu0 %v1878
        %2069 = vmatpush1.msra.mxu0 %v1877
        %2070 = vmatprep.subr.mxu0 %v1882
        %2071 = vmatpush1.msra.mxu0 %v1881
        %2072 = vmatprep.subr.mxu0 %v1886
        %2073 = vmatpush1.msra.mxu0 %v1885
        %2074 = vmatprep.subr.mxu0 %v1890
        %2075 = vmatpush1.msra.mxu0 %v1889
        %2076 = vmatprep.subr.mxu0 %v1894
        %2077 = vmatpush1.msra.mxu0 %v1893
        %2078 = vmatprep.subr.mxu0 %v1898
        %2079 = vmatpush1.msra.mxu0 %v1897
        %2080 = vmatprep.subr.mxu0 %v1902
        %2081 = vmatpush1.msra.mxu0 %v1901
        %2082 = vmatprep.subr.mxu0 %v1906
        %2083 = vmatpush1.msra.mxu0 %v1905
        %2084 = vmatprep.subr.mxu0 %v1910
        %2085 = vmatpush1.msra.mxu0 %v1909
        %2086 = vmatprep.subr.mxu0 %v1914
        %2087 = vmatpush1.msra.mxu0 %v1913
        %2088 = vmatprep.subr.mxu0 %v1918
        %2089 = vmatpush1.msra.mxu0 %v1917
        %2090 = vmatprep.subr.mxu0 %v1922
        %2091 = vmatpush1.msra.mxu0 %v1921
        %2092 = vmatprep.subr.mxu0 %v1926
        %2093 = vmatpush1.msra.mxu0 %v1925
        %2094 = vmatprep.subr.mxu0 %v1930
        %2095 = vmatpush1.msra.mxu0 %v1929
        %2096 = vmatprep.subr.mxu0 %v1934
        %2097 = vmatpush1.msra.mxu0 %v1933
        %2098 = vmatprep.subr.mxu0 %v1938
        %2099 = vmatpush1.msra.mxu0 %v1937
        %2100 = vmatprep.subr.mxu0 %v1942
        %2101 = vmatpush1.msra.mxu0 %v1941
        %2102 = vmatprep.subr.mxu0 %v1946
        %2103 = vmatpush1.msra.mxu0 %v1945
        %2104 = vmatprep.subr.mxu0 %v1950
        %2105 = vmatpush1.msra.mxu0 %v1949
        %2106 = vmatprep.subr.mxu0 %v1954
        %2107 = vmatpush1.msra.mxu0 %v1953
        %2108 = vmatprep.subr.mxu0 %v1958
        %2109 = vmatpush1.msra.mxu0 %v1957
        %2110 = vmatprep.subr.mxu0 %v1962
        %2111 = vmatpush1.msra.mxu0 %v1961
        %2112 = vmatprep.subr.mxu0 %v1966
        %2113 = vmatpush1.msra.mxu0 %v1965
        %2114 = vmatprep.subr.mxu0 %v1970
        %2115 = vmatpush1.msra.mxu0 %v1969
        %2116 = vmatprep.subr.mxu0 %v1974
        %2117 = vmatpush1.msra.mxu0 %v1973
        %2118 = vmatprep.mubr.f32.mxu0 %v1699
        %2119 = vmatmul.mubr.f32.gmra.mrb[0].mxu0 %v1696
        %v2120 = vpop.f32.mrb[0].mxu0
        %v2121 = vadd.f32 %v2044, %v2120
        %v2122 = vpop.f32.mrb[0].mxu0
        %v2123 = vadd.f32 %v2046, %v2122
        %2124 = vmatprep.mubr.f32.mxu0 %v1711
        %2125 = vmatmul.mubr.f32.gmra.mrb[0].mxu0 %v1708
        %v2126 = vpop.f32.mrb[0].mxu0
        %v2127 = vadd.f32 %v2050, %v2126
        %v2128 = vpop.f32.mrb[0].mxu0
        %v2129 = vadd.f32 %v2052, %v2128
        %2130 = vdwg.mxu0
        %2131 = vmatprep.subr.mxu0 %v1724
        %2132 = vmatpush1.msra.mxu0 %v1723
        %2133 = vmatprep.subr.mxu0 %v1728
        %2134 = vmatpush1.msra.mxu0 %v1727
        %2135 = vmatprep.subr.mxu0 %v1732
        %2136 = vmatpush1.msra.mxu0 %v1731
        %2137 = vmatprep.subr.mxu0 %v1736
        %2138 = vmatpush1.msra.mxu0 %v1735
        %2139 = vmatprep.subr.mxu0 %v1740
        %2140 = vmatpush1.msra.mxu0 %v1739
        %2141 = vmatprep.subr.mxu0 %v1744
        %2142 = vmatpush1.msra.mxu0 %v1743
        %2143 = vmatprep.subr.mxu0 %v1748
        %2144 = vmatpush1.msra.mxu0 %v1747
        %2145 = vmatprep.subr.mxu0 %v1752
        %2146 = vmatpush1.msra.mxu0 %v1751
        %2147 = vmatprep.subr.mxu0 %v1756
        %2148 = vmatpush1.msra.mxu0 %v1755
        %2149 = vmatprep.subr.mxu0 %v1760
        %2150 = vmatpush1.msra.mxu0 %v1759
        %2151 = vmatprep.subr.mxu0 %v1764
        %2152 = vmatpush1.msra.mxu0 %v1763
        %2153 = vmatprep.subr.mxu0 %v1768
        %2154 = vmatpush1.msra.mxu0 %v1767
        %2155 = vmatprep.subr.mxu0 %v1772
        %2156 = vmatpush1.msra.mxu0 %v1771
        %2157 = vmatprep.subr.mxu0 %v1776
        %2158 = vmatpush1.msra.mxu0 %v1775
        %2159 = vmatprep.subr.mxu0 %v1780
        %2160 = vmatpush1.msra.mxu0 %v1779
        %2161 = vmatprep.subr.mxu0 %v1784
        %2162 = vmatpush1.msra.mxu0 %v1783
        %2163 = vmatprep.subr.mxu0 %v1788
        %2164 = vmatpush1.msra.mxu0 %v1787
        %2165 = vmatprep.subr.mxu0 %v1792
        %2166 = vmatpush1.msra.mxu0 %v1791
        %2167 = vmatprep.subr.mxu0 %v1796
        %2168 = vmatpush1.msra.mxu0 %v1795
        %2169 = vmatprep.subr.mxu0 %v1800
        %2170 = vmatpush1.msra.mxu0 %v1799
        %2171 = vmatprep.subr.mxu0 %v1804
        %2172 = vmatpush1.msra.mxu0 %v1803
        %2173 = vmatprep.subr.mxu0 %v1808
        %2174 = vmatpush1.msra.mxu0 %v1807
        %2175 = vmatprep.subr.mxu0 %v1812
        %2176 = vmatpush1.msra.mxu0 %v1811
        %2177 = vmatprep.subr.mxu0 %v1816
        %2178 = vmatpush1.msra.mxu0 %v1815
        %2179 = vmatprep.subr.mxu0 %v1820
        %2180 = vmatpush1.msra.mxu0 %v1819
        %2181 = vmatprep.subr.mxu0 %v1824
        %2182 = vmatpush1.msra.mxu0 %v1823
        %2183 = vmatprep.subr.mxu0 %v1828
        %2184 = vmatpush1.msra.mxu0 %v1827
        %2185 = vmatprep.subr.mxu0 %v1832
        %2186 = vmatpush1.msra.mxu0 %v1831
        %2187 = vmatprep.subr.mxu0 %v1836
        %2188 = vmatpush1.msra.mxu0 %v1835
        %2189 = vmatprep.subr.mxu0 %v1840
        %2190 = vmatpush1.msra.mxu0 %v1839
        %2191 = vmatprep.subr.mxu0 %v1844
        %2192 = vmatpush1.msra.mxu0 %v1843
        %2193 = vmatprep.subr.mxu0 %v1848
        %2194 = vmatpush1.msra.mxu0 %v1847
        %2195 = vmatprep.mubr.f32.mxu0 %v1693
        %2196 = vmatmul.mubr.f32.gmra.mrb[0].mxu0 %v1690
        %v2197 = vpop.f32.mrb[0].mxu0
        %v2198 = vadd.f32 0.0, %v2197
        %v2199 = vpop.f32.mrb[0].mxu0
        %v2200 = vadd.f32 0.0, %v2199
        %2201 = vmatprep.mubr.f32.mxu0 %v1705
        %2202 = vmatmul.mubr.f32.gmra.mrb[0].mxu0 %v1702
        %v2203 = vpop.f32.mrb[0].mxu0
        %v2204 = vadd.f32 0.0, %v2203
        %v2205 = vpop.f32.mrb[0].mxu0
        %v2206 = vadd.f32 0.0, %v2205
        %2207 = vdwg.mxu0
        %2208 = vmatprep.subr.mxu0 %v1852
        %2209 = vmatpush1.msra.mxu0 %v1851
        %2210 = vmatprep.subr.mxu0 %v1856
        %2211 = vmatpush1.msra.mxu0 %v1855
        %2212 = vmatprep.subr.mxu0 %v1860
        %2213 = vmatpush1.msra.mxu0 %v1859
        %2214 = vmatprep.subr.mxu0 %v1864
        %2215 = vmatpush1.msra.mxu0 %v1863
        %2216 = vmatprep.subr.mxu0 %v1868
        %2217 = vmatpush1.msra.mxu0 %v1867
        %2218 = vmatprep.subr.mxu0 %v1872
        %2219 = vmatpush1.msra.mxu0 %v1871
        %2220 = vmatprep.subr.mxu0 %v1876
        %2221 = vmatpush1.msra.mxu0 %v1875
        %2222 = vmatprep.subr.mxu0 %v1880
        %2223 = vmatpush1.msra.mxu0 %v1879
        %2224 = vmatprep.subr.mxu0 %v1884
        %2225 = vmatpush1.msra.mxu0 %v1883
        %2226 = vmatprep.subr.mxu0 %v1888
        %2227 = vmatpush1.msra.mxu0 %v1887
        %2228 = vmatprep.subr.mxu0 %v1892
        %2229 = vmatpush1.msra.mxu0 %v1891
        %2230 = vmatprep.subr.mxu0 %v1896
        %2231 = vmatpush1.msra.mxu0 %v1895
        %2232 = vmatprep.subr.mxu0 %v1900
        %2233 = vmatpush1.msra.mxu0 %v1899
        %2234 = vmatprep.subr.mxu0 %v1904
        %2235 = vmatpush1.msra.mxu0 %v1903
        %2236 = vmatprep.subr.mxu0 %v1908
        %2237 = vmatpush1.msra.mxu0 %v1907
        %2238 = vmatprep.subr.mxu0 %v1912
        %2239 = vmatpush1.msra.mxu0 %v1911
        %2240 = vmatprep.subr.mxu0 %v1916
        %2241 = vmatpush1.msra.mxu0 %v1915
        %2242 = vmatprep.subr.mxu0 %v1920
        %2243 = vmatpush1.msra.mxu0 %v1919
        %2244 = vmatprep.subr.mxu0 %v1924
        %2245 = vmatpush1.msra.mxu0 %v1923
        %2246 = vmatprep.subr.mxu0 %v1928
        %2247 = vmatpush1.msra.mxu0 %v1927
        %2248 = vmatprep.subr.mxu0 %v1932
        %2249 = vmatpush1.msra.mxu0 %v1931
        %2250 = vmatprep.subr.mxu0 %v1936
        %2251 = vmatpush1.msra.mxu0 %v1935
        %2252 = vmatprep.subr.mxu0 %v1940
        %2253 = vmatpush1.msra.mxu0 %v1939
        %2254 = vmatprep.subr.mxu0 %v1944
        %2255 = vmatpush1.msra.mxu0 %v1943
        %2256 = vmatprep.subr.mxu0 %v1948
        %2257 = vmatpush1.msra.mxu0 %v1947
        %2258 = vmatprep.subr.mxu0 %v1952
        %2259 = vmatpush1.msra.mxu0 %v1951
        %2260 = vmatprep.subr.mxu0 %v1956
        %2261 = vmatpush1.msra.mxu0 %v1955
        %2262 = vmatprep.subr.mxu0 %v1960
        %2263 = vmatpush1.msra.mxu0 %v1959
        %2264 = vmatprep.subr.mxu0 %v1964
        %2265 = vmatpush1.msra.mxu0 %v1963
        %2266 = vmatprep.subr.mxu0 %v1968
        %2267 = vmatpush1.msra.mxu0 %v1967
        %2268 = vmatprep.subr.mxu0 %v1972
        %2269 = vmatpush1.msra.mxu0 %v1971
        %2270 = vmatprep.subr.mxu0 %v1976
        %2271 = vmatpush1.msra.mxu0 %v1975
        %2272 = vmatprep.mubr.f32.mxu0 %v1699
        %2273 = vmatmul.mubr.f32.gmra.mrb[0].mxu0 %v1696
        %v2274 = vpop.f32.mrb[0].mxu0
        %v2275 = vadd.f32 %v2198, %v2274
        %v2276 = vpop.f32.mrb[0].mxu0
        %v2277 = vadd.f32 %v2200, %v2276
        %2278 = vmatprep.mubr.f32.mxu0 %v1711
        %2279 = vmatmul.mubr.f32.gmra.mrb[0].mxu0 %v1708
        %v2280 = vpop.f32.mrb[0].mxu0
        %v2281 = vadd.f32 %v2204, %v2280
        %v2282 = vpop.f32.mrb[0].mxu0
        %v2283 = vadd.f32 %v2206, %v2282
        %2284 = vdwg.mxu0
        %v2285 = vadd.f32 %v1491, %v2121
        %v2286 = vadd.f32 %v1493, %v2123
        %v2287 = vadd.f32 %v1645, %v2275
        %v2288 = vadd.f32 %v1647, %v2277
        %v2289 = vadd.f32 %v1497, %v2127
        %v2290 = vadd.f32 %v1499, %v2129
        %v2291 = vadd.f32 %v1651, %v2281
        %v2292 = vadd.f32 %v1653, %v2283
        %v2293 = vld [vmem:[#allocation9] sm:$0xf]
        %v2295 = vlaneseq
        %v2296 = vshrl.u32 %v2295, 7
        %v2297 = vsub.s32 0, %v2296
        %v2298 = vrot.slane %v2293, %v2297
        %v2299 = vlaneseq
        %v2300 = vshrl.u32 %v2299, 7
        %v2301 = vsub.s32 1, %v2300
        %v2302 = vrot.slane %v2293, %v2301
        %v2303 = vlaneseq
        %v2304 = vshrl.u32 %v2303, 7
        %v2305 = vsub.s32 2, %v2304
        %v2306 = vrot.slane %v2293, %v2305
        %v2307 = vlaneseq
        %v2308 = vshrl.u32 %v2307, 7
        %v2309 = vsub.s32 3, %v2308
        %v2310 = vrot.slane %v2293, %v2309
        %v2315 = vmul.f32 %v2285, %v2298
        %v2316 = vmul.f32 %v2286, %v2302
        %v2317 = vmul.f32 %v2287, %v2306
        %v2318 = vmul.f32 %v2288, %v2310
        %v2319 = vmul.f32 %v2289, %v2298
        %v2320 = vmul.f32 %v2290, %v2302
        %v2321 = vmul.f32 %v2291, %v2306
        %v2322 = vmul.f32 %v2292, %v2310
        %v2323 = vld [vmem:[#allocation10] sm:$0xf]
        %v2325 = vlaneseq
        %v2326 = vshrl.u32 %v2325, 7
        %v2327 = vsub.s32 0, %v2326
        %v2328 = vrot.slane %v2323, %v2327
        %v2329 = vlaneseq
        %v2330 = vshrl.u32 %v2329, 7
        %v2331 = vsub.s32 1, %v2330
        %v2332 = vrot.slane %v2323, %v2331
        %v2333 = vlaneseq
        %v2334 = vshrl.u32 %v2333, 7
        %v2335 = vsub.s32 2, %v2334
        %v2336 = vrot.slane %v2323, %v2335
        %v2337 = vlaneseq
        %v2338 = vshrl.u32 %v2337, 7
        %v2339 = vsub.s32 3, %v2338
        %v2340 = vrot.slane %v2323, %v2339
        %v2345 = vadd.f32 %v2315, %v2328
        %v2346 = vadd.f32 %v2316, %v2332
        %v2347 = vadd.f32 %v2317, %v2336
        %v2348 = vadd.f32 %v2318, %v2340
        %v2349 = vadd.f32 %v2319, %v2328
        %v2350 = vadd.f32 %v2320, %v2332
        %v2351 = vadd.f32 %v2321, %v2336
        %v2352 = vadd.f32 %v2322, %v2340
        %v2353 = vmax.f32 %v2345, 0.0
        %v2354 = vmax.f32 %v2346, 0.0
        %v2355 = vmax.f32 %v2347, 0.0
        %v2356 = vmax.f32 %v2348, 0.0
        %v2357 = vmax.f32 %v2349, 0.0
        %v2358 = vmax.f32 %v2350, 0.0
        %v2359 = vmax.f32 %v2351, 0.0
        %v2360 = vmax.f32 %v2352, 0.0
        %v2369 = vrot.slane %v2353, 7
        %v2370 = vrot.slane %v2354, 7
        %v2371 = vrot.slane %v2355, 7
        %v2372 = vrot.slane %v2356, 7
        %v2373 = vrot.slane %v2357, 7
        %v2374 = vrot.slane %v2358, 7
        %v2375 = vrot.slane %v2359, 7
        %v2376 = vrot.slane %v2360, 7
        %2385 = vst [vmem:[#allocation3] sm:$0xfe] %v2369
        %2386 = vst [vmem:[#allocation3 + $0x8] sm:$0xfe] %v2370
        %2387 = vst [vmem:[#allocation3 + $0x10] sm:$0xfe] %v2371
        %2388 = vst [vmem:[#allocation3 + $0x18] sm:$0xfe] %v2372
        %2389 = vst [vmem:[#allocation3 + $0x20] sm:$0x1] %v2369
        %2390 = vst [vmem:[#allocation3 + $0x28] sm:$0x1] %v2370
        %2391 = vst [vmem:[#allocation3 + $0x30] sm:$0x1] %v2371
        %2392 = vst [vmem:[#allocation3 + $0x38] sm:$0x1] %v2372
        %2393 = vst [vmem:[#allocation3 + $0x40] sm:$0xfe] %v2373
        %2394 = vst [vmem:[#allocation3 + $0x48] sm:$0xfe] %v2374
        %2395 = vst [vmem:[#allocation3 + $0x50] sm:$0xfe] %v2375
        %2396 = vst [vmem:[#allocation3 + $0x58] sm:$0xfe] %v2376
        %2397 = vst [vmem:[#allocation3 + $0x60] sm:$0x1] %v2373
        %2398 = vst [vmem:[#allocation3 + $0x68] sm:$0x1] %v2374
        %2399 = vst [vmem:[#allocation3 + $0x70] sm:$0x1] %v2375
        %2400 = vst [vmem:[#allocation3 + $0x78] sm:$0x1] %v2376
        %v2401 = vld [vmem:[#allocation3] sm:$0xff]
        %v2402 = vld [vmem:[#allocation3 + $0x8] sm:$0xff]
        %v2403 = vld [vmem:[#allocation3 + $0x10] sm:$0xff]
        %v2404 = vld [vmem:[#allocation3 + $0x18] sm:$0xff]
        %v2405 = vld [vmem:[#allocation3 + $0x40] sm:$0xff]
        %v2406 = vld [vmem:[#allocation3 + $0x48] sm:$0xff]
        %v2407 = vld [vmem:[#allocation3 + $0x50] sm:$0xff]
        %v2408 = vld [vmem:[#allocation3 + $0x58] sm:$0xff]
        %v2409 = vld [vmem:[#allocation12] sm:$0xff]
        %v2410 = vld [vmem:[#allocation12 + $0x8] sm:$0xff]
        %v2411 = vld [vmem:[#allocation12 + $0x10] sm:$0xff]
        %v2412 = vld [vmem:[#allocation12 + $0x18] sm:$0xff]
        %v2413 = vld [vmem:[#allocation12 + $0x20] sm:$0xff]
        %v2414 = vld [vmem:[#allocation12 + $0x28] sm:$0xff]
        %v2415 = vld [vmem:[#allocation12 + $0x30] sm:$0xff]
        %v2416 = vld [vmem:[#allocation12 + $0x38] sm:$0xff]
        %v2417 = vld [vmem:[#allocation12 + $0x40] sm:$0xff]
        %v2418 = vld [vmem:[#allocation12 + $0x48] sm:$0xff]
        %v2419 = vld [vmem:[#allocation12 + $0x50] sm:$0xff]
        %v2420 = vld [vmem:[#allocation12 + $0x58] sm:$0xff]
        %v2421 = vld [vmem:[#allocation12 + $0x60] sm:$0xff]
        %v2422 = vld [vmem:[#allocation12 + $0x68] sm:$0xff]
        %v2423 = vld [vmem:[#allocation12 + $0x70] sm:$0xff]
        %v2424 = vld [vmem:[#allocation12 + $0x78] sm:$0xff]
        %v2425 = vld [vmem:[#allocation12 + $0x80] sm:$0xff]
        %v2426 = vld [vmem:[#allocation12 + $0x88] sm:$0xff]
        %v2427 = vld [vmem:[#allocation12 + $0x90] sm:$0xff]
        %v2428 = vld [vmem:[#allocation12 + $0x98] sm:$0xff]
        %v2429 = vld [vmem:[#allocation12 + $0xa0] sm:$0xff]
        %v2430 = vld [vmem:[#allocation12 + $0xa8] sm:$0xff]
        %v2431 = vld [vmem:[#allocation12 + $0xb0] sm:$0xff]
        %v2432 = vld [vmem:[#allocation12 + $0xb8] sm:$0xff]
        %v2433 = vld [vmem:[#allocation12 + $0xc0] sm:$0xff]
        %v2434 = vld [vmem:[#allocation12 + $0xc8] sm:$0xff]
        %v2435 = vld [vmem:[#allocation12 + $0xd0] sm:$0xff]
        %v2436 = vld [vmem:[#allocation12 + $0xd8] sm:$0xff]
        %v2437 = vld [vmem:[#allocation12 + $0xe0] sm:$0xff]
        %v2438 = vld [vmem:[#allocation12 + $0xe8] sm:$0xff]
        %v2439 = vld [vmem:[#allocation12 + $0xf0] sm:$0xff]
        %v2440 = vld [vmem:[#allocation12 + $0xf8] sm:$0xff]
        %v2441 = vld [vmem:[#allocation12 + $0x100] sm:$0xff]
        %v2442 = vld [vmem:[#allocation12 + $0x108] sm:$0xff]
        %v2443 = vld [vmem:[#allocation12 + $0x110] sm:$0xff]
        %v2444 = vld [vmem:[#allocation12 + $0x118] sm:$0xff]
        %v2445 = vld [vmem:[#allocation12 + $0x120] sm:$0xff]
        %v2446 = vld [vmem:[#allocation12 + $0x128] sm:$0xff]
        %v2447 = vld [vmem:[#allocation12 + $0x130] sm:$0xff]
        %v2448 = vld [vmem:[#allocation12 + $0x138] sm:$0xff]
        %v2449 = vld [vmem:[#allocation12 + $0x140] sm:$0xff]
        %v2450 = vld [vmem:[#allocation12 + $0x148] sm:$0xff]
        %v2451 = vld [vmem:[#allocation12 + $0x150] sm:$0xff]
        %v2452 = vld [vmem:[#allocation12 + $0x158] sm:$0xff]
        %v2453 = vld [vmem:[#allocation12 + $0x160] sm:$0xff]
        %v2454 = vld [vmem:[#allocation12 + $0x168] sm:$0xff]
        %v2455 = vld [vmem:[#allocation12 + $0x170] sm:$0xff]
        %v2456 = vld [vmem:[#allocation12 + $0x178] sm:$0xff]
        %v2457 = vld [vmem:[#allocation12 + $0x180] sm:$0xff]
        %v2458 = vld [vmem:[#allocation12 + $0x188] sm:$0xff]
        %v2459 = vld [vmem:[#allocation12 + $0x190] sm:$0xff]
        %v2460 = vld [vmem:[#allocation12 + $0x198] sm:$0xff]
        %v2461 = vld [vmem:[#allocation12 + $0x1a0] sm:$0xff]
        %v2462 = vld [vmem:[#allocation12 + $0x1a8] sm:$0xff]
        %v2463 = vld [vmem:[#allocation12 + $0x1b0] sm:$0xff]
        %v2464 = vld [vmem:[#allocation12 + $0x1b8] sm:$0xff]
        %v2465 = vld [vmem:[#allocation12 + $0x1c0] sm:$0xff]
        %v2466 = vld [vmem:[#allocation12 + $0x1c8] sm:$0xff]
        %v2467 = vld [vmem:[#allocation12 + $0x1d0] sm:$0xff]
        %v2468 = vld [vmem:[#allocation12 + $0x1d8] sm:$0xff]
        %v2469 = vld [vmem:[#allocation12 + $0x1e0] sm:$0xff]
        %v2470 = vld [vmem:[#allocation12 + $0x1e8] sm:$0xff]
        %v2471 = vld [vmem:[#allocation12 + $0x1f0] sm:$0xff]
        %v2472 = vld [vmem:[#allocation12 + $0x1f8] sm:$0xff]
        %v2473 = vld [vmem:[#allocation12 + $0x200] sm:$0xff]
        %v2474 = vld [vmem:[#allocation12 + $0x208] sm:$0xff]
        %v2475 = vld [vmem:[#allocation12 + $0x210] sm:$0xff]
        %v2476 = vld [vmem:[#allocation12 + $0x218] sm:$0xff]
        %v2477 = vld [vmem:[#allocation12 + $0x220] sm:$0xff]
        %v2478 = vld [vmem:[#allocation12 + $0x228] sm:$0xff]
        %v2479 = vld [vmem:[#allocation12 + $0x230] sm:$0xff]
        %v2480 = vld [vmem:[#allocation12 + $0x238] sm:$0xff]
        %v2481 = vld [vmem:[#allocation12 + $0x240] sm:$0xff]
        %v2482 = vld [vmem:[#allocation12 + $0x248] sm:$0xff]
        %v2483 = vld [vmem:[#allocation12 + $0x250] sm:$0xff]
        %v2484 = vld [vmem:[#allocation12 + $0x258] sm:$0xff]
        %v2485 = vld [vmem:[#allocation12 + $0x260] sm:$0xff]
        %v2486 = vld [vmem:[#allocation12 + $0x268] sm:$0xff]
        %v2487 = vld [vmem:[#allocation12 + $0x270] sm:$0xff]
        %v2488 = vld [vmem:[#allocation12 + $0x278] sm:$0xff]
        %v2489 = vld [vmem:[#allocation12 + $0x280] sm:$0xff]
        %v2490 = vld [vmem:[#allocation12 + $0x288] sm:$0xff]
        %v2491 = vld [vmem:[#allocation12 + $0x290] sm:$0xff]
        %v2492 = vld [vmem:[#allocation12 + $0x298] sm:$0xff]
        %v2493 = vld [vmem:[#allocation12 + $0x2a0] sm:$0xff]
        %v2494 = vld [vmem:[#allocation12 + $0x2a8] sm:$0xff]
        %v2495 = vld [vmem:[#allocation12 + $0x2b0] sm:$0xff]
        %v2496 = vld [vmem:[#allocation12 + $0x2b8] sm:$0xff]
        %v2497 = vld [vmem:[#allocation12 + $0x2c0] sm:$0xff]
        %v2498 = vld [vmem:[#allocation12 + $0x2c8] sm:$0xff]
        %v2499 = vld [vmem:[#allocation12 + $0x2d0] sm:$0xff]
        %v2500 = vld [vmem:[#allocation12 + $0x2d8] sm:$0xff]
        %v2501 = vld [vmem:[#allocation12 + $0x2e0] sm:$0xff]
        %v2502 = vld [vmem:[#allocation12 + $0x2e8] sm:$0xff]
        %v2503 = vld [vmem:[#allocation12 + $0x2f0] sm:$0xff]
        %v2504 = vld [vmem:[#allocation12 + $0x2f8] sm:$0xff]
        %v2505 = vld [vmem:[#allocation12 + $0x300] sm:$0xff]
        %v2506 = vld [vmem:[#allocation12 + $0x308] sm:$0xff]
        %v2507 = vld [vmem:[#allocation12 + $0x310] sm:$0xff]
        %v2508 = vld [vmem:[#allocation12 + $0x318] sm:$0xff]
        %v2509 = vld [vmem:[#allocation12 + $0x320] sm:$0xff]
        %v2510 = vld [vmem:[#allocation12 + $0x328] sm:$0xff]
        %v2511 = vld [vmem:[#allocation12 + $0x330] sm:$0xff]
        %v2512 = vld [vmem:[#allocation12 + $0x338] sm:$0xff]
        %v2513 = vld [vmem:[#allocation12 + $0x340] sm:$0xff]
        %v2514 = vld [vmem:[#allocation12 + $0x348] sm:$0xff]
        %v2515 = vld [vmem:[#allocation12 + $0x350] sm:$0xff]
        %v2516 = vld [vmem:[#allocation12 + $0x358] sm:$0xff]
        %v2517 = vld [vmem:[#allocation12 + $0x360] sm:$0xff]
        %v2518 = vld [vmem:[#allocation12 + $0x368] sm:$0xff]
        %v2519 = vld [vmem:[#allocation12 + $0x370] sm:$0xff]
        %v2520 = vld [vmem:[#allocation12 + $0x378] sm:$0xff]
        %v2521 = vld [vmem:[#allocation12 + $0x380] sm:$0xff]
        %v2522 = vld [vmem:[#allocation12 + $0x388] sm:$0xff]
        %v2523 = vld [vmem:[#allocation12 + $0x390] sm:$0xff]
        %v2524 = vld [vmem:[#allocation12 + $0x398] sm:$0xff]
        %v2525 = vld [vmem:[#allocation12 + $0x3a0] sm:$0xff]
        %v2526 = vld [vmem:[#allocation12 + $0x3a8] sm:$0xff]
        %v2527 = vld [vmem:[#allocation12 + $0x3b0] sm:$0xff]
        %v2528 = vld [vmem:[#allocation12 + $0x3b8] sm:$0xff]
        %v2529 = vld [vmem:[#allocation12 + $0x3c0] sm:$0xff]
        %v2530 = vld [vmem:[#allocation12 + $0x3c8] sm:$0xff]
        %v2531 = vld [vmem:[#allocation12 + $0x3d0] sm:$0xff]
        %v2532 = vld [vmem:[#allocation12 + $0x3d8] sm:$0xff]
        %v2533 = vld [vmem:[#allocation12 + $0x3e0] sm:$0xff]
        %v2534 = vld [vmem:[#allocation12 + $0x3e8] sm:$0xff]
        %v2535 = vld [vmem:[#allocation12 + $0x3f0] sm:$0xff]
        %v2536 = vld [vmem:[#allocation12 + $0x3f8] sm:$0xff]
        %v2537 = vld [vmem:[#allocation12 + $0x400] sm:$0xff]
        %v2538 = vld [vmem:[#allocation12 + $0x408] sm:$0xff]
        %v2539 = vld [vmem:[#allocation12 + $0x410] sm:$0xff]
        %v2540 = vld [vmem:[#allocation12 + $0x418] sm:$0xff]
        %v2541 = vld [vmem:[#allocation12 + $0x420] sm:$0xff]
        %v2542 = vld [vmem:[#allocation12 + $0x428] sm:$0xff]
        %v2543 = vld [vmem:[#allocation12 + $0x430] sm:$0xff]
        %v2544 = vld [vmem:[#allocation12 + $0x438] sm:$0xff]
        %v2545 = vld [vmem:[#allocation12 + $0x440] sm:$0xff]
        %v2546 = vld [vmem:[#allocation12 + $0x448] sm:$0xff]
        %v2547 = vld [vmem:[#allocation12 + $0x450] sm:$0xff]
        %v2548 = vld [vmem:[#allocation12 + $0x458] sm:$0xff]
        %v2549 = vld [vmem:[#allocation12 + $0x460] sm:$0xff]
        %v2550 = vld [vmem:[#allocation12 + $0x468] sm:$0xff]
        %v2551 = vld [vmem:[#allocation12 + $0x470] sm:$0xff]
        %v2552 = vld [vmem:[#allocation12 + $0x478] sm:$0xff]
        %v2553 = vld [vmem:[#allocation12 + $0x480] sm:$0xff]
        %v2554 = vld [vmem:[#allocation12 + $0x488] sm:$0xff]
        %v2555 = vld [vmem:[#allocation12 + $0x490] sm:$0xff]
        %v2556 = vld [vmem:[#allocation12 + $0x498] sm:$0xff]
        %v2557 = vld [vmem:[#allocation12 + $0x4a0] sm:$0xff]
        %v2558 = vld [vmem:[#allocation12 + $0x4a8] sm:$0xff]
        %v2559 = vld [vmem:[#allocation12 + $0x4b0] sm:$0xff]
        %v2560 = vld [vmem:[#allocation12 + $0x4b8] sm:$0xff]
        %v2561 = vld [vmem:[#allocation12 + $0x4c0] sm:$0xff]
        %v2562 = vld [vmem:[#allocation12 + $0x4c8] sm:$0xff]
        %v2563 = vld [vmem:[#allocation12 + $0x4d0] sm:$0xff]
        %v2564 = vld [vmem:[#allocation12 + $0x4d8] sm:$0xff]
        %v2565 = vld [vmem:[#allocation12 + $0x4e0] sm:$0xff]
        %v2566 = vld [vmem:[#allocation12 + $0x4e8] sm:$0xff]
        %v2567 = vld [vmem:[#allocation12 + $0x4f0] sm:$0xff]
        %v2568 = vld [vmem:[#allocation12 + $0x4f8] sm:$0xff]
        %v2569 = vld [vmem:[#allocation12 + $0x500] sm:$0xff]
        %v2570 = vld [vmem:[#allocation12 + $0x508] sm:$0xff]
        %v2571 = vld [vmem:[#allocation12 + $0x510] sm:$0xff]
        %v2572 = vld [vmem:[#allocation12 + $0x518] sm:$0xff]
        %v2573 = vld [vmem:[#allocation12 + $0x520] sm:$0xff]
        %v2574 = vld [vmem:[#allocation12 + $0x528] sm:$0xff]
        %v2575 = vld [vmem:[#allocation12 + $0x530] sm:$0xff]
        %v2576 = vld [vmem:[#allocation12 + $0x538] sm:$0xff]
        %v2577 = vld [vmem:[#allocation12 + $0x540] sm:$0xff]
        %v2578 = vld [vmem:[#allocation12 + $0x548] sm:$0xff]
        %v2579 = vld [vmem:[#allocation12 + $0x550] sm:$0xff]
        %v2580 = vld [vmem:[#allocation12 + $0x558] sm:$0xff]
        %v2581 = vld [vmem:[#allocation12 + $0x560] sm:$0xff]
        %v2582 = vld [vmem:[#allocation12 + $0x568] sm:$0xff]
        %v2583 = vld [vmem:[#allocation12 + $0x570] sm:$0xff]
        %v2584 = vld [vmem:[#allocation12 + $0x578] sm:$0xff]
        %v2585 = vld [vmem:[#allocation12 + $0x580] sm:$0xff]
        %v2586 = vld [vmem:[#allocation12 + $0x588] sm:$0xff]
        %v2587 = vld [vmem:[#allocation12 + $0x590] sm:$0xff]
        %v2588 = vld [vmem:[#allocation12 + $0x598] sm:$0xff]
        %v2589 = vld [vmem:[#allocation12 + $0x5a0] sm:$0xff]
        %v2590 = vld [vmem:[#allocation12 + $0x5a8] sm:$0xff]
        %v2591 = vld [vmem:[#allocation12 + $0x5b0] sm:$0xff]
        %v2592 = vld [vmem:[#allocation12 + $0x5b8] sm:$0xff]
        %v2593 = vld [vmem:[#allocation12 + $0x5c0] sm:$0xff]
        %v2594 = vld [vmem:[#allocation12 + $0x5c8] sm:$0xff]
        %v2595 = vld [vmem:[#allocation12 + $0x5d0] sm:$0xff]
        %v2596 = vld [vmem:[#allocation12 + $0x5d8] sm:$0xff]
        %v2597 = vld [vmem:[#allocation12 + $0x5e0] sm:$0xff]
        %v2598 = vld [vmem:[#allocation12 + $0x5e8] sm:$0xff]
        %v2599 = vld [vmem:[#allocation12 + $0x5f0] sm:$0xff]
        %v2600 = vld [vmem:[#allocation12 + $0x5f8] sm:$0xff]
        %v2601 = vld [vmem:[#allocation12 + $0x600] sm:$0xff]
        %v2602 = vld [vmem:[#allocation12 + $0x608] sm:$0xff]
        %v2603 = vld [vmem:[#allocation12 + $0x610] sm:$0xff]
        %v2604 = vld [vmem:[#allocation12 + $0x618] sm:$0xff]
        %v2605 = vld [vmem:[#allocation12 + $0x620] sm:$0xff]
        %v2606 = vld [vmem:[#allocation12 + $0x628] sm:$0xff]
        %v2607 = vld [vmem:[#allocation12 + $0x630] sm:$0xff]
        %v2608 = vld [vmem:[#allocation12 + $0x638] sm:$0xff]
        %v2609 = vld [vmem:[#allocation12 + $0x640] sm:$0xff]
        %v2610 = vld [vmem:[#allocation12 + $0x648] sm:$0xff]
        %v2611 = vld [vmem:[#allocation12 + $0x650] sm:$0xff]
        %v2612 = vld [vmem:[#allocation12 + $0x658] sm:$0xff]
        %v2613 = vld [vmem:[#allocation12 + $0x660] sm:$0xff]
        %v2614 = vld [vmem:[#allocation12 + $0x668] sm:$0xff]
        %v2615 = vld [vmem:[#allocation12 + $0x670] sm:$0xff]
        %v2616 = vld [vmem:[#allocation12 + $0x678] sm:$0xff]
        %v2617 = vld [vmem:[#allocation12 + $0x680] sm:$0xff]
        %v2618 = vld [vmem:[#allocation12 + $0x688] sm:$0xff]
        %v2619 = vld [vmem:[#allocation12 + $0x690] sm:$0xff]
        %v2620 = vld [vmem:[#allocation12 + $0x698] sm:$0xff]
        %v2621 = vld [vmem:[#allocation12 + $0x6a0] sm:$0xff]
        %v2622 = vld [vmem:[#allocation12 + $0x6a8] sm:$0xff]
        %v2623 = vld [vmem:[#allocation12 + $0x6b0] sm:$0xff]
        %v2624 = vld [vmem:[#allocation12 + $0x6b8] sm:$0xff]
        %v2625 = vld [vmem:[#allocation12 + $0x6c0] sm:$0xff]
        %v2626 = vld [vmem:[#allocation12 + $0x6c8] sm:$0xff]
        %v2627 = vld [vmem:[#allocation12 + $0x6d0] sm:$0xff]
        %v2628 = vld [vmem:[#allocation12 + $0x6d8] sm:$0xff]
        %v2629 = vld [vmem:[#allocation12 + $0x6e0] sm:$0xff]
        %v2630 = vld [vmem:[#allocation12 + $0x6e8] sm:$0xff]
        %v2631 = vld [vmem:[#allocation12 + $0x6f0] sm:$0xff]
        %v2632 = vld [vmem:[#allocation12 + $0x6f8] sm:$0xff]
        %v2633 = vld [vmem:[#allocation12 + $0x700] sm:$0xff]
        %v2634 = vld [vmem:[#allocation12 + $0x708] sm:$0xff]
        %v2635 = vld [vmem:[#allocation12 + $0x710] sm:$0xff]
        %v2636 = vld [vmem:[#allocation12 + $0x718] sm:$0xff]
        %v2637 = vld [vmem:[#allocation12 + $0x720] sm:$0xff]
        %v2638 = vld [vmem:[#allocation12 + $0x728] sm:$0xff]
        %v2639 = vld [vmem:[#allocation12 + $0x730] sm:$0xff]
        %v2640 = vld [vmem:[#allocation12 + $0x738] sm:$0xff]
        %v2641 = vld [vmem:[#allocation12 + $0x740] sm:$0xff]
        %v2642 = vld [vmem:[#allocation12 + $0x748] sm:$0xff]
        %v2643 = vld [vmem:[#allocation12 + $0x750] sm:$0xff]
        %v2644 = vld [vmem:[#allocation12 + $0x758] sm:$0xff]
        %v2645 = vld [vmem:[#allocation12 + $0x760] sm:$0xff]
        %v2646 = vld [vmem:[#allocation12 + $0x768] sm:$0xff]
        %v2647 = vld [vmem:[#allocation12 + $0x770] sm:$0xff]
        %v2648 = vld [vmem:[#allocation12 + $0x778] sm:$0xff]
        %v2649 = vld [vmem:[#allocation12 + $0x780] sm:$0xff]
        %v2650 = vld [vmem:[#allocation12 + $0x788] sm:$0xff]
        %v2651 = vld [vmem:[#allocation12 + $0x790] sm:$0xff]
        %v2652 = vld [vmem:[#allocation12 + $0x798] sm:$0xff]
        %v2653 = vld [vmem:[#allocation12 + $0x7a0] sm:$0xff]
        %v2654 = vld [vmem:[#allocation12 + $0x7a8] sm:$0xff]
        %v2655 = vld [vmem:[#allocation12 + $0x7b0] sm:$0xff]
        %v2656 = vld [vmem:[#allocation12 + $0x7b8] sm:$0xff]
        %v2657 = vld [vmem:[#allocation12 + $0x7c0] sm:$0xff]
        %v2658 = vld [vmem:[#allocation12 + $0x7c8] sm:$0xff]
        %v2659 = vld [vmem:[#allocation12 + $0x7d0] sm:$0xff]
        %v2660 = vld [vmem:[#allocation12 + $0x7d8] sm:$0xff]
        %v2661 = vld [vmem:[#allocation12 + $0x7e0] sm:$0xff]
        %v2662 = vld [vmem:[#allocation12 + $0x7e8] sm:$0xff]
        %v2663 = vld [vmem:[#allocation12 + $0x7f0] sm:$0xff]
        %v2664 = vld [vmem:[#allocation12 + $0x7f8] sm:$0xff]
        %v2665 = vld [vmem:[#allocation3] sm:$0xfe]
        %v2666 = vld [vmem:[#allocation3 + $0x8] sm:$0xfe]
        %v2667 = vld [vmem:[#allocation3 + $0x10] sm:$0xfe]
        %v2668 = vld [vmem:[#allocation3 + $0x18] sm:$0xfe]
        %v2669 = vld [vmem:[#allocation3 + $0x20] sm:$0x1]
        %v2670 = vld [vmem:[#allocation3 + $0x28] sm:$0x1]
        %v2671 = vld [vmem:[#allocation3 + $0x30] sm:$0x1]
        %v2672 = vld [vmem:[#allocation3 + $0x38] sm:$0x1]
        %v2673 = vld [vmem:[#allocation3 + $0x40] sm:$0xfe]
        %v2674 = vld [vmem:[#allocation3 + $0x48] sm:$0xfe]
        %v2675 = vld [vmem:[#allocation3 + $0x50] sm:$0xfe]
        %v2676 = vld [vmem:[#allocation3 + $0x58] sm:$0xfe]
        %v2677 = vld [vmem:[#allocation3 + $0x60] sm:$0x1]
        %v2678 = vld [vmem:[#allocation3 + $0x68] sm:$0x1]
        %v2679 = vld [vmem:[#allocation3 + $0x70] sm:$0x1]
        %v2680 = vld [vmem:[#allocation3 + $0x78] sm:$0x1]
        %v2697 = vrot.slane %v2665, 1
        %v2698 = vrot.slane %v2669, 1
        %v2699 = vsel %vm749, %v2697, %v2698
        %v2700 = vrot.slane %v2666, 1
        %v2701 = vrot.slane %v2670, 1
        %v2702 = vsel %vm749, %v2700, %v2701
        %v2703 = vrot.slane %v2667, 1
        %v2704 = vrot.slane %v2671, 1
        %v2705 = vsel %vm749, %v2703, %v2704
        %v2706 = vrot.slane %v2668, 1
        %v2707 = vrot.slane %v2672, 1
        %v2708 = vsel %vm749, %v2706, %v2707
        %v2709 = vrot.slane %v2673, 1
        %v2710 = vrot.slane %v2677, 1
        %v2711 = vsel %vm749, %v2709, %v2710
        %v2712 = vrot.slane %v2674, 1
        %v2713 = vrot.slane %v2678, 1
        %v2714 = vsel %vm749, %v2712, %v2713
        %v2715 = vrot.slane %v2675, 1
        %v2716 = vrot.slane %v2679, 1
        %v2717 = vsel %vm749, %v2715, %v2716
        %v2718 = vrot.slane %v2676, 1
        %v2719 = vrot.slane %v2680, 1
        %v2720 = vsel %vm749, %v2718, %v2719
        %s2729 = scalar_lea.vmem [#allocation12], 2048
        %v2730 = vld [vmem:[%s2729] sm:$0xff]
        %v2731 = vld [vmem:[%s2729 + $0x8] sm:$0xff]
        %v2732 = vld [vmem:[%s2729 + $0x10] sm:$0xff]
        %v2733 = vld [vmem:[%s2729 + $0x18] sm:$0xff]
        %v2734 = vld [vmem:[%s2729 + $0x20] sm:$0xff]
        %v2735 = vld [vmem:[%s2729 + $0x28] sm:$0xff]
        %v2736 = vld [vmem:[%s2729 + $0x30] sm:$0xff]
        %v2737 = vld [vmem:[%s2729 + $0x38] sm:$0xff]
        %v2738 = vld [vmem:[%s2729 + $0x40] sm:$0xff]
        %v2739 = vld [vmem:[%s2729 + $0x48] sm:$0xff]
        %v2740 = vld [vmem:[%s2729 + $0x50] sm:$0xff]
        %v2741 = vld [vmem:[%s2729 + $0x58] sm:$0xff]
        %v2742 = vld [vmem:[%s2729 + $0x60] sm:$0xff]
        %v2743 = vld [vmem:[%s2729 + $0x68] sm:$0xff]
        %v2744 = vld [vmem:[%s2729 + $0x70] sm:$0xff]
        %v2745 = vld [vmem:[%s2729 + $0x78] sm:$0xff]
        %v2746 = vld [vmem:[%s2729 + $0x80] sm:$0xff]
        %v2747 = vld [vmem:[%s2729 + $0x88] sm:$0xff]
        %v2748 = vld [vmem:[%s2729 + $0x90] sm:$0xff]
        %v2749 = vld [vmem:[%s2729 + $0x98] sm:$0xff]
        %v2750 = vld [vmem:[%s2729 + $0xa0] sm:$0xff]
        %v2751 = vld [vmem:[%s2729 + $0xa8] sm:$0xff]
        %v2752 = vld [vmem:[%s2729 + $0xb0] sm:$0xff]
        %v2753 = vld [vmem:[%s2729 + $0xb8] sm:$0xff]
        %v2754 = vld [vmem:[%s2729 + $0xc0] sm:$0xff]
        %v2755 = vld [vmem:[%s2729 + $0xc8] sm:$0xff]
        %v2756 = vld [vmem:[%s2729 + $0xd0] sm:$0xff]
        %v2757 = vld [vmem:[%s2729 + $0xd8] sm:$0xff]
        %v2758 = vld [vmem:[%s2729 + $0xe0] sm:$0xff]
        %v2759 = vld [vmem:[%s2729 + $0xe8] sm:$0xff]
        %v2760 = vld [vmem:[%s2729 + $0xf0] sm:$0xff]
        %v2761 = vld [vmem:[%s2729 + $0xf8] sm:$0xff]
        %v2762 = vld [vmem:[%s2729 + $0x100] sm:$0xff]
        %v2763 = vld [vmem:[%s2729 + $0x108] sm:$0xff]
        %v2764 = vld [vmem:[%s2729 + $0x110] sm:$0xff]
        %v2765 = vld [vmem:[%s2729 + $0x118] sm:$0xff]
        %v2766 = vld [vmem:[%s2729 + $0x120] sm:$0xff]
        %v2767 = vld [vmem:[%s2729 + $0x128] sm:$0xff]
        %v2768 = vld [vmem:[%s2729 + $0x130] sm:$0xff]
        %v2769 = vld [vmem:[%s2729 + $0x138] sm:$0xff]
        %v2770 = vld [vmem:[%s2729 + $0x140] sm:$0xff]
        %v2771 = vld [vmem:[%s2729 + $0x148] sm:$0xff]
        %v2772 = vld [vmem:[%s2729 + $0x150] sm:$0xff]
        %v2773 = vld [vmem:[%s2729 + $0x158] sm:$0xff]
        %v2774 = vld [vmem:[%s2729 + $0x160] sm:$0xff]
        %v2775 = vld [vmem:[%s2729 + $0x168] sm:$0xff]
        %v2776 = vld [vmem:[%s2729 + $0x170] sm:$0xff]
        %v2777 = vld [vmem:[%s2729 + $0x178] sm:$0xff]
        %v2778 = vld [vmem:[%s2729 + $0x180] sm:$0xff]
        %v2779 = vld [vmem:[%s2729 + $0x188] sm:$0xff]
        %v2780 = vld [vmem:[%s2729 + $0x190] sm:$0xff]
        %v2781 = vld [vmem:[%s2729 + $0x198] sm:$0xff]
        %v2782 = vld [vmem:[%s2729 + $0x1a0] sm:$0xff]
        %v2783 = vld [vmem:[%s2729 + $0x1a8] sm:$0xff]
        %v2784 = vld [vmem:[%s2729 + $0x1b0] sm:$0xff]
        %v2785 = vld [vmem:[%s2729 + $0x1b8] sm:$0xff]
        %v2786 = vld [vmem:[%s2729 + $0x1c0] sm:$0xff]
        %v2787 = vld [vmem:[%s2729 + $0x1c8] sm:$0xff]
        %v2788 = vld [vmem:[%s2729 + $0x1d0] sm:$0xff]
        %v2789 = vld [vmem:[%s2729 + $0x1d8] sm:$0xff]
        %v2790 = vld [vmem:[%s2729 + $0x1e0] sm:$0xff]
        %v2791 = vld [vmem:[%s2729 + $0x1e8] sm:$0xff]
        %v2792 = vld [vmem:[%s2729 + $0x1f0] sm:$0xff]
        %v2793 = vld [vmem:[%s2729 + $0x1f8] sm:$0xff]
        %v2794 = vld [vmem:[%s2729 + $0x200] sm:$0xff]
        %v2795 = vld [vmem:[%s2729 + $0x208] sm:$0xff]
        %v2796 = vld [vmem:[%s2729 + $0x210] sm:$0xff]
        %v2797 = vld [vmem:[%s2729 + $0x218] sm:$0xff]
        %v2798 = vld [vmem:[%s2729 + $0x220] sm:$0xff]
        %v2799 = vld [vmem:[%s2729 + $0x228] sm:$0xff]
        %v2800 = vld [vmem:[%s2729 + $0x230] sm:$0xff]
        %v2801 = vld [vmem:[%s2729 + $0x238] sm:$0xff]
        %v2802 = vld [vmem:[%s2729 + $0x240] sm:$0xff]
        %v2803 = vld [vmem:[%s2729 + $0x248] sm:$0xff]
        %v2804 = vld [vmem:[%s2729 + $0x250] sm:$0xff]
        %v2805 = vld [vmem:[%s2729 + $0x258] sm:$0xff]
        %v2806 = vld [vmem:[%s2729 + $0x260] sm:$0xff]
        %v2807 = vld [vmem:[%s2729 + $0x268] sm:$0xff]
        %v2808 = vld [vmem:[%s2729 + $0x270] sm:$0xff]
        %v2809 = vld [vmem:[%s2729 + $0x278] sm:$0xff]
        %v2810 = vld [vmem:[%s2729 + $0x280] sm:$0xff]
        %v2811 = vld [vmem:[%s2729 + $0x288] sm:$0xff]
        %v2812 = vld [vmem:[%s2729 + $0x290] sm:$0xff]
        %v2813 = vld [vmem:[%s2729 + $0x298] sm:$0xff]
        %v2814 = vld [vmem:[%s2729 + $0x2a0] sm:$0xff]
        %v2815 = vld [vmem:[%s2729 + $0x2a8] sm:$0xff]
        %v2816 = vld [vmem:[%s2729 + $0x2b0] sm:$0xff]
        %v2817 = vld [vmem:[%s2729 + $0x2b8] sm:$0xff]
        %v2818 = vld [vmem:[%s2729 + $0x2c0] sm:$0xff]
        %v2819 = vld [vmem:[%s2729 + $0x2c8] sm:$0xff]
        %v2820 = vld [vmem:[%s2729 + $0x2d0] sm:$0xff]
        %v2821 = vld [vmem:[%s2729 + $0x2d8] sm:$0xff]
        %v2822 = vld [vmem:[%s2729 + $0x2e0] sm:$0xff]
        %v2823 = vld [vmem:[%s2729 + $0x2e8] sm:$0xff]
        %v2824 = vld [vmem:[%s2729 + $0x2f0] sm:$0xff]
        %v2825 = vld [vmem:[%s2729 + $0x2f8] sm:$0xff]
        %v2826 = vld [vmem:[%s2729 + $0x300] sm:$0xff]
        %v2827 = vld [vmem:[%s2729 + $0x308] sm:$0xff]
        %v2828 = vld [vmem:[%s2729 + $0x310] sm:$0xff]
        %v2829 = vld [vmem:[%s2729 + $0x318] sm:$0xff]
        %v2830 = vld [vmem:[%s2729 + $0x320] sm:$0xff]
        %v2831 = vld [vmem:[%s2729 + $0x328] sm:$0xff]
        %v2832 = vld [vmem:[%s2729 + $0x330] sm:$0xff]
        %v2833 = vld [vmem:[%s2729 + $0x338] sm:$0xff]
        %v2834 = vld [vmem:[%s2729 + $0x340] sm:$0xff]
        %v2835 = vld [vmem:[%s2729 + $0x348] sm:$0xff]
        %v2836 = vld [vmem:[%s2729 + $0x350] sm:$0xff]
        %v2837 = vld [vmem:[%s2729 + $0x358] sm:$0xff]
        %v2838 = vld [vmem:[%s2729 + $0x360] sm:$0xff]
        %v2839 = vld [vmem:[%s2729 + $0x368] sm:$0xff]
        %v2840 = vld [vmem:[%s2729 + $0x370] sm:$0xff]
        %v2841 = vld [vmem:[%s2729 + $0x378] sm:$0xff]
        %v2842 = vld [vmem:[%s2729 + $0x380] sm:$0xff]
        %v2843 = vld [vmem:[%s2729 + $0x388] sm:$0xff]
        %v2844 = vld [vmem:[%s2729 + $0x390] sm:$0xff]
        %v2845 = vld [vmem:[%s2729 + $0x398] sm:$0xff]
        %v2846 = vld [vmem:[%s2729 + $0x3a0] sm:$0xff]
        %v2847 = vld [vmem:[%s2729 + $0x3a8] sm:$0xff]
        %v2848 = vld [vmem:[%s2729 + $0x3b0] sm:$0xff]
        %v2849 = vld [vmem:[%s2729 + $0x3b8] sm:$0xff]
        %v2850 = vld [vmem:[%s2729 + $0x3c0] sm:$0xff]
        %v2851 = vld [vmem:[%s2729 + $0x3c8] sm:$0xff]
        %v2852 = vld [vmem:[%s2729 + $0x3d0] sm:$0xff]
        %v2853 = vld [vmem:[%s2729 + $0x3d8] sm:$0xff]
        %v2854 = vld [vmem:[%s2729 + $0x3e0] sm:$0xff]
        %v2855 = vld [vmem:[%s2729 + $0x3e8] sm:$0xff]
        %v2856 = vld [vmem:[%s2729 + $0x3f0] sm:$0xff]
        %v2857 = vld [vmem:[%s2729 + $0x3f8] sm:$0xff]
        %v2858 = vld [vmem:[%s2729 + $0x400] sm:$0xff]
        %v2859 = vld [vmem:[%s2729 + $0x408] sm:$0xff]
        %v2860 = vld [vmem:[%s2729 + $0x410] sm:$0xff]
        %v2861 = vld [vmem:[%s2729 + $0x418] sm:$0xff]
        %v2862 = vld [vmem:[%s2729 + $0x420] sm:$0xff]
        %v2863 = vld [vmem:[%s2729 + $0x428] sm:$0xff]
        %v2864 = vld [vmem:[%s2729 + $0x430] sm:$0xff]
        %v2865 = vld [vmem:[%s2729 + $0x438] sm:$0xff]
        %v2866 = vld [vmem:[%s2729 + $0x440] sm:$0xff]
        %v2867 = vld [vmem:[%s2729 + $0x448] sm:$0xff]
        %v2868 = vld [vmem:[%s2729 + $0x450] sm:$0xff]
        %v2869 = vld [vmem:[%s2729 + $0x458] sm:$0xff]
        %v2870 = vld [vmem:[%s2729 + $0x460] sm:$0xff]
        %v2871 = vld [vmem:[%s2729 + $0x468] sm:$0xff]
        %v2872 = vld [vmem:[%s2729 + $0x470] sm:$0xff]
        %v2873 = vld [vmem:[%s2729 + $0x478] sm:$0xff]
        %v2874 = vld [vmem:[%s2729 + $0x480] sm:$0xff]
        %v2875 = vld [vmem:[%s2729 + $0x488] sm:$0xff]
        %v2876 = vld [vmem:[%s2729 + $0x490] sm:$0xff]
        %v2877 = vld [vmem:[%s2729 + $0x498] sm:$0xff]
        %v2878 = vld [vmem:[%s2729 + $0x4a0] sm:$0xff]
        %v2879 = vld [vmem:[%s2729 + $0x4a8] sm:$0xff]
        %v2880 = vld [vmem:[%s2729 + $0x4b0] sm:$0xff]
        %v2881 = vld [vmem:[%s2729 + $0x4b8] sm:$0xff]
        %v2882 = vld [vmem:[%s2729 + $0x4c0] sm:$0xff]
        %v2883 = vld [vmem:[%s2729 + $0x4c8] sm:$0xff]
        %v2884 = vld [vmem:[%s2729 + $0x4d0] sm:$0xff]
        %v2885 = vld [vmem:[%s2729 + $0x4d8] sm:$0xff]
        %v2886 = vld [vmem:[%s2729 + $0x4e0] sm:$0xff]
        %v2887 = vld [vmem:[%s2729 + $0x4e8] sm:$0xff]
        %v2888 = vld [vmem:[%s2729 + $0x4f0] sm:$0xff]
        %v2889 = vld [vmem:[%s2729 + $0x4f8] sm:$0xff]
        %v2890 = vld [vmem:[%s2729 + $0x500] sm:$0xff]
        %v2891 = vld [vmem:[%s2729 + $0x508] sm:$0xff]
        %v2892 = vld [vmem:[%s2729 + $0x510] sm:$0xff]
        %v2893 = vld [vmem:[%s2729 + $0x518] sm:$0xff]
        %v2894 = vld [vmem:[%s2729 + $0x520] sm:$0xff]
        %v2895 = vld [vmem:[%s2729 + $0x528] sm:$0xff]
        %v2896 = vld [vmem:[%s2729 + $0x530] sm:$0xff]
        %v2897 = vld [vmem:[%s2729 + $0x538] sm:$0xff]
        %v2898 = vld [vmem:[%s2729 + $0x540] sm:$0xff]
        %v2899 = vld [vmem:[%s2729 + $0x548] sm:$0xff]
        %v2900 = vld [vmem:[%s2729 + $0x550] sm:$0xff]
        %v2901 = vld [vmem:[%s2729 + $0x558] sm:$0xff]
        %v2902 = vld [vmem:[%s2729 + $0x560] sm:$0xff]
        %v2903 = vld [vmem:[%s2729 + $0x568] sm:$0xff]
        %v2904 = vld [vmem:[%s2729 + $0x570] sm:$0xff]
        %v2905 = vld [vmem:[%s2729 + $0x578] sm:$0xff]
        %v2906 = vld [vmem:[%s2729 + $0x580] sm:$0xff]
        %v2907 = vld [vmem:[%s2729 + $0x588] sm:$0xff]
        %v2908 = vld [vmem:[%s2729 + $0x590] sm:$0xff]
        %v2909 = vld [vmem:[%s2729 + $0x598] sm:$0xff]
        %v2910 = vld [vmem:[%s2729 + $0x5a0] sm:$0xff]
        %v2911 = vld [vmem:[%s2729 + $0x5a8] sm:$0xff]
        %v2912 = vld [vmem:[%s2729 + $0x5b0] sm:$0xff]
        %v2913 = vld [vmem:[%s2729 + $0x5b8] sm:$0xff]
        %v2914 = vld [vmem:[%s2729 + $0x5c0] sm:$0xff]
        %v2915 = vld [vmem:[%s2729 + $0x5c8] sm:$0xff]
        %v2916 = vld [vmem:[%s2729 + $0x5d0] sm:$0xff]
        %v2917 = vld [vmem:[%s2729 + $0x5d8] sm:$0xff]
        %v2918 = vld [vmem:[%s2729 + $0x5e0] sm:$0xff]
        %v2919 = vld [vmem:[%s2729 + $0x5e8] sm:$0xff]
        %v2920 = vld [vmem:[%s2729 + $0x5f0] sm:$0xff]
        %v2921 = vld [vmem:[%s2729 + $0x5f8] sm:$0xff]
        %v2922 = vld [vmem:[%s2729 + $0x600] sm:$0xff]
        %v2923 = vld [vmem:[%s2729 + $0x608] sm:$0xff]
        %v2924 = vld [vmem:[%s2729 + $0x610] sm:$0xff]
        %v2925 = vld [vmem:[%s2729 + $0x618] sm:$0xff]
        %v2926 = vld [vmem:[%s2729 + $0x620] sm:$0xff]
        %v2927 = vld [vmem:[%s2729 + $0x628] sm:$0xff]
        %v2928 = vld [vmem:[%s2729 + $0x630] sm:$0xff]
        %v2929 = vld [vmem:[%s2729 + $0x638] sm:$0xff]
        %v2930 = vld [vmem:[%s2729 + $0x640] sm:$0xff]
        %v2931 = vld [vmem:[%s2729 + $0x648] sm:$0xff]
        %v2932 = vld [vmem:[%s2729 + $0x650] sm:$0xff]
        %v2933 = vld [vmem:[%s2729 + $0x658] sm:$0xff]
        %v2934 = vld [vmem:[%s2729 + $0x660] sm:$0xff]
        %v2935 = vld [vmem:[%s2729 + $0x668] sm:$0xff]
        %v2936 = vld [vmem:[%s2729 + $0x670] sm:$0xff]
        %v2937 = vld [vmem:[%s2729 + $0x678] sm:$0xff]
        %v2938 = vld [vmem:[%s2729 + $0x680] sm:$0xff]
        %v2939 = vld [vmem:[%s2729 + $0x688] sm:$0xff]
        %v2940 = vld [vmem:[%s2729 + $0x690] sm:$0xff]
        %v2941 = vld [vmem:[%s2729 + $0x698] sm:$0xff]
        %v2942 = vld [vmem:[%s2729 + $0x6a0] sm:$0xff]
        %v2943 = vld [vmem:[%s2729 + $0x6a8] sm:$0xff]
        %v2944 = vld [vmem:[%s2729 + $0x6b0] sm:$0xff]
        %v2945 = vld [vmem:[%s2729 + $0x6b8] sm:$0xff]
        %v2946 = vld [vmem:[%s2729 + $0x6c0] sm:$0xff]
        %v2947 = vld [vmem:[%s2729 + $0x6c8] sm:$0xff]
        %v2948 = vld [vmem:[%s2729 + $0x6d0] sm:$0xff]
        %v2949 = vld [vmem:[%s2729 + $0x6d8] sm:$0xff]
        %v2950 = vld [vmem:[%s2729 + $0x6e0] sm:$0xff]
        %v2951 = vld [vmem:[%s2729 + $0x6e8] sm:$0xff]
        %v2952 = vld [vmem:[%s2729 + $0x6f0] sm:$0xff]
        %v2953 = vld [vmem:[%s2729 + $0x6f8] sm:$0xff]
        %v2954 = vld [vmem:[%s2729 + $0x700] sm:$0xff]
        %v2955 = vld [vmem:[%s2729 + $0x708] sm:$0xff]
        %v2956 = vld [vmem:[%s2729 + $0x710] sm:$0xff]
        %v2957 = vld [vmem:[%s2729 + $0x718] sm:$0xff]
        %v2958 = vld [vmem:[%s2729 + $0x720] sm:$0xff]
        %v2959 = vld [vmem:[%s2729 + $0x728] sm:$0xff]
        %v2960 = vld [vmem:[%s2729 + $0x730] sm:$0xff]
        %v2961 = vld [vmem:[%s2729 + $0x738] sm:$0xff]
        %v2962 = vld [vmem:[%s2729 + $0x740] sm:$0xff]
        %v2963 = vld [vmem:[%s2729 + $0x748] sm:$0xff]
        %v2964 = vld [vmem:[%s2729 + $0x750] sm:$0xff]
        %v2965 = vld [vmem:[%s2729 + $0x758] sm:$0xff]
        %v2966 = vld [vmem:[%s2729 + $0x760] sm:$0xff]
        %v2967 = vld [vmem:[%s2729 + $0x768] sm:$0xff]
        %v2968 = vld [vmem:[%s2729 + $0x770] sm:$0xff]
        %v2969 = vld [vmem:[%s2729 + $0x778] sm:$0xff]
        %v2970 = vld [vmem:[%s2729 + $0x780] sm:$0xff]
        %v2971 = vld [vmem:[%s2729 + $0x788] sm:$0xff]
        %v2972 = vld [vmem:[%s2729 + $0x790] sm:$0xff]
        %v2973 = vld [vmem:[%s2729 + $0x798] sm:$0xff]
        %v2974 = vld [vmem:[%s2729 + $0x7a0] sm:$0xff]
        %v2975 = vld [vmem:[%s2729 + $0x7a8] sm:$0xff]
        %v2976 = vld [vmem:[%s2729 + $0x7b0] sm:$0xff]
        %v2977 = vld [vmem:[%s2729 + $0x7b8] sm:$0xff]
        %v2978 = vld [vmem:[%s2729 + $0x7c0] sm:$0xff]
        %v2979 = vld [vmem:[%s2729 + $0x7c8] sm:$0xff]
        %v2980 = vld [vmem:[%s2729 + $0x7d0] sm:$0xff]
        %v2981 = vld [vmem:[%s2729 + $0x7d8] sm:$0xff]
        %v2982 = vld [vmem:[%s2729 + $0x7e0] sm:$0xff]
        %v2983 = vld [vmem:[%s2729 + $0x7e8] sm:$0xff]
        %v2984 = vld [vmem:[%s2729 + $0x7f0] sm:$0xff]
        %v2985 = vld [vmem:[%s2729 + $0x7f8] sm:$0xff]
        %2986 = vmatprep.subr.mxu0 %v2731
        %2987 = vmatpush1.msra.mxu0 %v2730
        %2988 = vmatprep.subr.mxu0 %v2735
        %2989 = vmatpush1.msra.mxu0 %v2734
        %2990 = vmatprep.subr.mxu0 %v2739
        %2991 = vmatpush1.msra.mxu0 %v2738
        %2992 = vmatprep.subr.mxu0 %v2743
        %2993 = vmatpush1.msra.mxu0 %v2742
        %2994 = vmatprep.subr.mxu0 %v2747
        %2995 = vmatpush1.msra.mxu0 %v2746
        %2996 = vmatprep.subr.mxu0 %v2751
        %2997 = vmatpush1.msra.mxu0 %v2750
        %2998 = vmatprep.subr.mxu0 %v2755
        %2999 = vmatpush1.msra.mxu0 %v2754
        %3000 = vmatprep.subr.mxu0 %v2759
        %3001 = vmatpush1.msra.mxu0 %v2758
        %3002 = vmatprep.subr.mxu0 %v2763
        %3003 = vmatpush1.msra.mxu0 %v2762
        %3004 = vmatprep.subr.mxu0 %v2767
        %3005 = vmatpush1.msra.mxu0 %v2766
        %3006 = vmatprep.subr.mxu0 %v2771
        %3007 = vmatpush1.msra.mxu0 %v2770
        %3008 = vmatprep.subr.mxu0 %v2775
        %3009 = vmatpush1.msra.mxu0 %v2774
        %3010 = vmatprep.subr.mxu0 %v2779
        %3011 = vmatpush1.msra.mxu0 %v2778
        %3012 = vmatprep.subr.mxu0 %v2783
        %3013 = vmatpush1.msra.mxu0 %v2782
        %3014 = vmatprep.subr.mxu0 %v2787
        %3015 = vmatpush1.msra.mxu0 %v2786
        %3016 = vmatprep.subr.mxu0 %v2791
        %3017 = vmatpush1.msra.mxu0 %v2790
        %3018 = vmatprep.subr.mxu0 %v2795
        %3019 = vmatpush1.msra.mxu0 %v2794
        %3020 = vmatprep.subr.mxu0 %v2799
        %3021 = vmatpush1.msra.mxu0 %v2798
        %3022 = vmatprep.subr.mxu0 %v2803
        %3023 = vmatpush1.msra.mxu0 %v2802
        %3024 = vmatprep.subr.mxu0 %v2807
        %3025 = vmatpush1.msra.mxu0 %v2806
        %3026 = vmatprep.subr.mxu0 %v2811
        %3027 = vmatpush1.msra.mxu0 %v2810
        %3028 = vmatprep.subr.mxu0 %v2815
        %3029 = vmatpush1.msra.mxu0 %v2814
        %3030 = vmatprep.subr.mxu0 %v2819
        %3031 = vmatpush1.msra.mxu0 %v2818
        %3032 = vmatprep.subr.mxu0 %v2823
        %3033 = vmatpush1.msra.mxu0 %v2822
        %3034 = vmatprep.subr.mxu0 %v2827
        %3035 = vmatpush1.msra.mxu0 %v2826
        %3036 = vmatprep.subr.mxu0 %v2831
        %3037 = vmatpush1.msra.mxu0 %v2830
        %3038 = vmatprep.subr.mxu0 %v2835
        %3039 = vmatpush1.msra.mxu0 %v2834
        %3040 = vmatprep.subr.mxu0 %v2839
        %3041 = vmatpush1.msra.mxu0 %v2838
        %3042 = vmatprep.subr.mxu0 %v2843
        %3043 = vmatpush1.msra.mxu0 %v2842
        %3044 = vmatprep.subr.mxu0 %v2847
        %3045 = vmatpush1.msra.mxu0 %v2846
        %3046 = vmatprep.subr.mxu0 %v2851
        %3047 = vmatpush1.msra.mxu0 %v2850
        %3048 = vmatprep.subr.mxu0 %v2855
        %3049 = vmatpush1.msra.mxu0 %v2854
        %3050 = vmatprep.mubr.f32.mxu0 %v2702
        %3051 = vmatmul.mubr.f32.gmra.mrb[0].mxu0 %v2699
        %v3052 = vpop.f32.mrb[0].mxu0
        %v3053 = vadd.f32 0.0, %v3052
        %v3054 = vpop.f32.mrb[0].mxu0
        %v3055 = vadd.f32 0.0, %v3054
        %3056 = vmatprep.mubr.f32.mxu0 %v2714
        %3057 = vmatmul.mubr.f32.gmra.mrb[0].mxu0 %v2711
        %v3058 = vpop.f32.mrb[0].mxu0
        %v3059 = vadd.f32 0.0, %v3058
        %v3060 = vpop.f32.mrb[0].mxu0
        %v3061 = vadd.f32 0.0, %v3060
        %3062 = vdwg.mxu0
        %3063 = vmatprep.subr.mxu0 %v2859
        %3064 = vmatpush1.msra.mxu0 %v2858
        %3065 = vmatprep.subr.mxu0 %v2863
        %3066 = vmatpush1.msra.mxu0 %v2862
        %3067 = vmatprep.subr.mxu0 %v2867
        %3068 = vmatpush1.msra.mxu0 %v2866
        %3069 = vmatprep.subr.mxu0 %v2871
        %3070 = vmatpush1.msra.mxu0 %v2870
        %3071 = vmatprep.subr.mxu0 %v2875
        %3072 = vmatpush1.msra.mxu0 %v2874
        %3073 = vmatprep.subr.mxu0 %v2879
        %3074 = vmatpush1.msra.mxu0 %v2878
        %3075 = vmatprep.subr.mxu0 %v2883
        %3076 = vmatpush1.msra.mxu0 %v2882
        %3077 = vmatprep.subr.mxu0 %v2887
        %3078 = vmatpush1.msra.mxu0 %v2886
        %3079 = vmatprep.subr.mxu0 %v2891
        %3080 = vmatpush1.msra.mxu0 %v2890
        %3081 = vmatprep.subr.mxu0 %v2895
        %3082 = vmatpush1.msra.mxu0 %v2894
        %3083 = vmatprep.subr.mxu0 %v2899
        %3084 = vmatpush1.msra.mxu0 %v2898
        %3085 = vmatprep.subr.mxu0 %v2903
        %3086 = vmatpush1.msra.mxu0 %v2902
        %3087 = vmatprep.subr.mxu0 %v2907
        %3088 = vmatpush1.msra.mxu0 %v2906
        %3089 = vmatprep.subr.mxu0 %v2911
        %3090 = vmatpush1.msra.mxu0 %v2910
        %3091 = vmatprep.subr.mxu0 %v2915
        %3092 = vmatpush1.msra.mxu0 %v2914
        %3093 = vmatprep.subr.mxu0 %v2919
        %3094 = vmatpush1.msra.mxu0 %v2918
        %3095 = vmatprep.subr.mxu0 %v2923
        %3096 = vmatpush1.msra.mxu0 %v2922
        %3097 = vmatprep.subr.mxu0 %v2927
        %3098 = vmatpush1.msra.mxu0 %v2926
        %3099 = vmatprep.subr.mxu0 %v2931
        %3100 = vmatpush1.msra.mxu0 %v2930
        %3101 = vmatprep.subr.mxu0 %v2935
        %3102 = vmatpush1.msra.mxu0 %v2934
        %3103 = vmatprep.subr.mxu0 %v2939
        %3104 = vmatpush1.msra.mxu0 %v2938
        %3105 = vmatprep.subr.mxu0 %v2943
        %3106 = vmatpush1.msra.mxu0 %v2942
        %3107 = vmatprep.subr.mxu0 %v2947
        %3108 = vmatpush1.msra.mxu0 %v2946
        %3109 = vmatprep.subr.mxu0 %v2951
        %3110 = vmatpush1.msra.mxu0 %v2950
        %3111 = vmatprep.subr.mxu0 %v2955
        %3112 = vmatpush1.msra.mxu0 %v2954
        %3113 = vmatprep.subr.mxu0 %v2959
        %3114 = vmatpush1.msra.mxu0 %v2958
        %3115 = vmatprep.subr.mxu0 %v2963
        %3116 = vmatpush1.msra.mxu0 %v2962
        %3117 = vmatprep.subr.mxu0 %v2967
        %3118 = vmatpush1.msra.mxu0 %v2966
        %3119 = vmatprep.subr.mxu0 %v2971
        %3120 = vmatpush1.msra.mxu0 %v2970
        %3121 = vmatprep.subr.mxu0 %v2975
        %3122 = vmatpush1.msra.mxu0 %v2974
        %3123 = vmatprep.subr.mxu0 %v2979
        %3124 = vmatpush1.msra.mxu0 %v2978
        %3125 = vmatprep.subr.mxu0 %v2983
        %3126 = vmatpush1.msra.mxu0 %v2982
        %3127 = vmatprep.mubr.f32.mxu0 %v2708
        %3128 = vmatmul.mubr.f32.gmra.mrb[0].mxu0 %v2705
        %v3129 = vpop.f32.mrb[0].mxu0
        %v3130 = vadd.f32 %v3053, %v3129
        %v3131 = vpop.f32.mrb[0].mxu0
        %v3132 = vadd.f32 %v3055, %v3131
        %3133 = vmatprep.mubr.f32.mxu0 %v2720
        %3134 = vmatmul.mubr.f32.gmra.mrb[0].mxu0 %v2717
        %v3135 = vpop.f32.mrb[0].mxu0
        %v3136 = vadd.f32 %v3059, %v3135
        %v3137 = vpop.f32.mrb[0].mxu0
        %v3138 = vadd.f32 %v3061, %v3137
        %3139 = vdwg.mxu0
        %3140 = vmatprep.subr.mxu0 %v2733
        %3141 = vmatpush1.msra.mxu0 %v2732
        %3142 = vmatprep.subr.mxu0 %v2737
        %3143 = vmatpush1.msra.mxu0 %v2736
        %3144 = vmatprep.subr.mxu0 %v2741
        %3145 = vmatpush1.msra.mxu0 %v2740
        %3146 = vmatprep.subr.mxu0 %v2745
        %3147 = vmatpush1.msra.mxu0 %v2744
        %3148 = vmatprep.subr.mxu0 %v2749
        %3149 = vmatpush1.msra.mxu0 %v2748
        %3150 = vmatprep.subr.mxu0 %v2753
        %3151 = vmatpush1.msra.mxu0 %v2752
        %3152 = vmatprep.subr.mxu0 %v2757
        %3153 = vmatpush1.msra.mxu0 %v2756
        %3154 = vmatprep.subr.mxu0 %v2761
        %3155 = vmatpush1.msra.mxu0 %v2760
        %3156 = vmatprep.subr.mxu0 %v2765
        %3157 = vmatpush1.msra.mxu0 %v2764
        %3158 = vmatprep.subr.mxu0 %v2769
        %3159 = vmatpush1.msra.mxu0 %v2768
        %3160 = vmatprep.subr.mxu0 %v2773
        %3161 = vmatpush1.msra.mxu0 %v2772
        %3162 = vmatprep.subr.mxu0 %v2777
        %3163 = vmatpush1.msra.mxu0 %v2776
        %3164 = vmatprep.subr.mxu0 %v2781
        %3165 = vmatpush1.msra.mxu0 %v2780
        %3166 = vmatprep.subr.mxu0 %v2785
        %3167 = vmatpush1.msra.mxu0 %v2784
        %3168 = vmatprep.subr.mxu0 %v2789
        %3169 = vmatpush1.msra.mxu0 %v2788
        %3170 = vmatprep.subr.mxu0 %v2793
        %3171 = vmatpush1.msra.mxu0 %v2792
        %3172 = vmatprep.subr.mxu0 %v2797
        %3173 = vmatpush1.msra.mxu0 %v2796
        %3174 = vmatprep.subr.mxu0 %v2801
        %3175 = vmatpush1.msra.mxu0 %v2800
        %3176 = vmatprep.subr.mxu0 %v2805
        %3177 = vmatpush1.msra.mxu0 %v2804
        %3178 = vmatprep.subr.mxu0 %v2809
        %3179 = vmatpush1.msra.mxu0 %v2808
        %3180 = vmatprep.subr.mxu0 %v2813
        %3181 = vmatpush1.msra.mxu0 %v2812
        %3182 = vmatprep.subr.mxu0 %v2817
        %3183 = vmatpush1.msra.mxu0 %v2816
        %3184 = vmatprep.subr.mxu0 %v2821
        %3185 = vmatpush1.msra.mxu0 %v2820
        %3186 = vmatprep.subr.mxu0 %v2825
        %3187 = vmatpush1.msra.mxu0 %v2824
        %3188 = vmatprep.subr.mxu0 %v2829
        %3189 = vmatpush1.msra.mxu0 %v2828
        %3190 = vmatprep.subr.mxu0 %v2833
        %3191 = vmatpush1.msra.mxu0 %v2832
        %3192 = vmatprep.subr.mxu0 %v2837
        %3193 = vmatpush1.msra.mxu0 %v2836
        %3194 = vmatprep.subr.mxu0 %v2841
        %3195 = vmatpush1.msra.mxu0 %v2840
        %3196 = vmatprep.subr.mxu0 %v2845
        %3197 = vmatpush1.msra.mxu0 %v2844
        %3198 = vmatprep.subr.mxu0 %v2849
        %3199 = vmatpush1.msra.mxu0 %v2848
        %3200 = vmatprep.subr.mxu0 %v2853
        %3201 = vmatpush1.msra.mxu0 %v2852
        %3202 = vmatprep.subr.mxu0 %v2857
        %3203 = vmatpush1.msra.mxu0 %v2856
        %3204 = vmatprep.mubr.f32.mxu0 %v2702
        %3205 = vmatmul.mubr.f32.gmra.mrb[0].mxu0 %v2699
        %v3206 = vpop.f32.mrb[0].mxu0
        %v3207 = vadd.f32 0.0, %v3206
        %v3208 = vpop.f32.mrb[0].mxu0
        %v3209 = vadd.f32 0.0, %v3208
        %3210 = vmatprep.mubr.f32.mxu0 %v2714
        %3211 = vmatmul.mubr.f32.gmra.mrb[0].mxu0 %v2711
        %v3212 = vpop.f32.mrb[0].mxu0
        %v3213 = vadd.f32 0.0, %v3212
        %v3214 = vpop.f32.mrb[0].mxu0
        %v3215 = vadd.f32 0.0, %v3214
        %3216 = vdwg.mxu0
        %3217 = vmatprep.subr.mxu0 %v2861
        %3218 = vmatpush1.msra.mxu0 %v2860
        %3219 = vmatprep.subr.mxu0 %v2865
        %3220 = vmatpush1.msra.mxu0 %v2864
        %3221 = vmatprep.subr.mxu0 %v2869
        %3222 = vmatpush1.msra.mxu0 %v2868
        %3223 = vmatprep.subr.mxu0 %v2873
        %3224 = vmatpush1.msra.mxu0 %v2872
        %3225 = vmatprep.subr.mxu0 %v2877
        %3226 = vmatpush1.msra.mxu0 %v2876
        %3227 = vmatprep.subr.mxu0 %v2881
        %3228 = vmatpush1.msra.mxu0 %v2880
        %3229 = vmatprep.subr.mxu0 %v2885
        %3230 = vmatpush1.msra.mxu0 %v2884
        %3231 = vmatprep.subr.mxu0 %v2889
        %3232 = vmatpush1.msra.mxu0 %v2888
        %3233 = vmatprep.subr.mxu0 %v2893
        %3234 = vmatpush1.msra.mxu0 %v2892
        %3235 = vmatprep.subr.mxu0 %v2897
        %3236 = vmatpush1.msra.mxu0 %v2896
        %3237 = vmatprep.subr.mxu0 %v2901
        %3238 = vmatpush1.msra.mxu0 %v2900
        %3239 = vmatprep.subr.mxu0 %v2905
        %3240 = vmatpush1.msra.mxu0 %v2904
        %3241 = vmatprep.subr.mxu0 %v2909
        %3242 = vmatpush1.msra.mxu0 %v2908
        %3243 = vmatprep.subr.mxu0 %v2913
        %3244 = vmatpush1.msra.mxu0 %v2912
        %3245 = vmatprep.subr.mxu0 %v2917
        %3246 = vmatpush1.msra.mxu0 %v2916
        %3247 = vmatprep.subr.mxu0 %v2921
        %3248 = vmatpush1.msra.mxu0 %v2920
        %3249 = vmatprep.subr.mxu0 %v2925
        %3250 = vmatpush1.msra.mxu0 %v2924
        %3251 = vmatprep.subr.mxu0 %v2929
        %3252 = vmatpush1.msra.mxu0 %v2928
        %3253 = vmatprep.subr.mxu0 %v2933
        %3254 = vmatpush1.msra.mxu0 %v2932
        %3255 = vmatprep.subr.mxu0 %v2937
        %3256 = vmatpush1.msra.mxu0 %v2936
        %3257 = vmatprep.subr.mxu0 %v2941
        %3258 = vmatpush1.msra.mxu0 %v2940
        %3259 = vmatprep.subr.mxu0 %v2945
        %3260 = vmatpush1.msra.mxu0 %v2944
        %3261 = vmatprep.subr.mxu0 %v2949
        %3262 = vmatpush1.msra.mxu0 %v2948
        %3263 = vmatprep.subr.mxu0 %v2953
        %3264 = vmatpush1.msra.mxu0 %v2952
        %3265 = vmatprep.subr.mxu0 %v2957
        %3266 = vmatpush1.msra.mxu0 %v2956
        %3267 = vmatprep.subr.mxu0 %v2961
        %3268 = vmatpush1.msra.mxu0 %v2960
        %3269 = vmatprep.subr.mxu0 %v2965
        %3270 = vmatpush1.msra.mxu0 %v2964
        %3271 = vmatprep.subr.mxu0 %v2969
        %3272 = vmatpush1.msra.mxu0 %v2968
        %3273 = vmatprep.subr.mxu0 %v2973
        %3274 = vmatpush1.msra.mxu0 %v2972
        %3275 = vmatprep.subr.mxu0 %v2977
        %3276 = vmatpush1.msra.mxu0 %v2976
        %3277 = vmatprep.subr.mxu0 %v2981
        %3278 = vmatpush1.msra.mxu0 %v2980
        %3279 = vmatprep.subr.mxu0 %v2985
        %3280 = vmatpush1.msra.mxu0 %v2984
        %3281 = vmatprep.mubr.f32.mxu0 %v2708
        %3282 = vmatmul.mubr.f32.gmra.mrb[0].mxu0 %v2705
        %v3283 = vpop.f32.mrb[0].mxu0
        %v3284 = vadd.f32 %v3207, %v3283
        %v3285 = vpop.f32.mrb[0].mxu0
        %v3286 = vadd.f32 %v3209, %v3285
        %3287 = vmatprep.mubr.f32.mxu0 %v2720
        %3288 = vmatmul.mubr.f32.gmra.mrb[0].mxu0 %v2717
        %v3289 = vpop.f32.mrb[0].mxu0
        %v3290 = vadd.f32 %v3213, %v3289
        %v3291 = vpop.f32.mrb[0].mxu0
        %v3292 = vadd.f32 %v3215, %v3291
        %3293 = vdwg.mxu0
        %3294 = vmatprep.subr.mxu0 %v2410
        %3295 = vmatpush1.msra.mxu0 %v2409
        %3296 = vmatprep.subr.mxu0 %v2414
        %3297 = vmatpush1.msra.mxu0 %v2413
        %3298 = vmatprep.subr.mxu0 %v2418
        %3299 = vmatpush1.msra.mxu0 %v2417
        %3300 = vmatprep.subr.mxu0 %v2422
        %3301 = vmatpush1.msra.mxu0 %v2421
        %3302 = vmatprep.subr.mxu0 %v2426
        %3303 = vmatpush1.msra.mxu0 %v2425
        %3304 = vmatprep.subr.mxu0 %v2430
        %3305 = vmatpush1.msra.mxu0 %v2429
        %3306 = vmatprep.subr.mxu0 %v2434
        %3307 = vmatpush1.msra.mxu0 %v2433
        %3308 = vmatprep.subr.mxu0 %v2438
        %3309 = vmatpush1.msra.mxu0 %v2437
        %3310 = vmatprep.subr.mxu0 %v2442
        %3311 = vmatpush1.msra.mxu0 %v2441
        %3312 = vmatprep.subr.mxu0 %v2446
        %3313 = vmatpush1.msra.mxu0 %v2445
        %3314 = vmatprep.subr.mxu0 %v2450
        %3315 = vmatpush1.msra.mxu0 %v2449
        %3316 = vmatprep.subr.mxu0 %v2454
        %3317 = vmatpush1.msra.mxu0 %v2453
        %3318 = vmatprep.subr.mxu0 %v2458
        %3319 = vmatpush1.msra.mxu0 %v2457
        %3320 = vmatprep.subr.mxu0 %v2462
        %3321 = vmatpush1.msra.mxu0 %v2461
        %3322 = vmatprep.subr.mxu0 %v2466
        %3323 = vmatpush1.msra.mxu0 %v2465
        %3324 = vmatprep.subr.mxu0 %v2470
        %3325 = vmatpush1.msra.mxu0 %v2469
        %3326 = vmatprep.subr.mxu0 %v2474
        %3327 = vmatpush1.msra.mxu0 %v2473
        %3328 = vmatprep.subr.mxu0 %v2478
        %3329 = vmatpush1.msra.mxu0 %v2477
        %3330 = vmatprep.subr.mxu0 %v2482
        %3331 = vmatpush1.msra.mxu0 %v2481
        %3332 = vmatprep.subr.mxu0 %v2486
        %3333 = vmatpush1.msra.mxu0 %v2485
        %3334 = vmatprep.subr.mxu0 %v2490
        %3335 = vmatpush1.msra.mxu0 %v2489
        %3336 = vmatprep.subr.mxu0 %v2494
        %3337 = vmatpush1.msra.mxu0 %v2493
        %3338 = vmatprep.subr.mxu0 %v2498
        %3339 = vmatpush1.msra.mxu0 %v2497
        %3340 = vmatprep.subr.mxu0 %v2502
        %3341 = vmatpush1.msra.mxu0 %v2501
        %3342 = vmatprep.subr.mxu0 %v2506
        %3343 = vmatpush1.msra.mxu0 %v2505
        %3344 = vmatprep.subr.mxu0 %v2510
        %3345 = vmatpush1.msra.mxu0 %v2509
        %3346 = vmatprep.subr.mxu0 %v2514
        %3347 = vmatpush1.msra.mxu0 %v2513
        %3348 = vmatprep.subr.mxu0 %v2518
        %3349 = vmatpush1.msra.mxu0 %v2517
        %3350 = vmatprep.subr.mxu0 %v2522
        %3351 = vmatpush1.msra.mxu0 %v2521
        %3352 = vmatprep.subr.mxu0 %v2526
        %3353 = vmatpush1.msra.mxu0 %v2525
        %3354 = vmatprep.subr.mxu0 %v2530
        %3355 = vmatpush1.msra.mxu0 %v2529
        %3356 = vmatprep.subr.mxu0 %v2534
        %3357 = vmatpush1.msra.mxu0 %v2533
        %3358 = vmatprep.mubr.f32.mxu0 %v2402
        %3359 = vmatmul.mubr.f32.gmra.mrb[0].mxu0 %v2401
        %v3360 = vpop.f32.mrb[0].mxu0
        %v3361 = vadd.f32 %v3130, %v3360
        %v3362 = vpop.f32.mrb[0].mxu0
        %v3363 = vadd.f32 %v3132, %v3362
        %3364 = vmatprep.mubr.f32.mxu0 %v2406
        %3365 = vmatmul.mubr.f32.gmra.mrb[0].mxu0 %v2405
        %v3366 = vpop.f32.mrb[0].mxu0
        %v3367 = vadd.f32 %v3136, %v3366
        %v3368 = vpop.f32.mrb[0].mxu0
        %v3369 = vadd.f32 %v3138, %v3368
        %3370 = vdwg.mxu0
        %3371 = vmatprep.subr.mxu0 %v2538
        %3372 = vmatpush1.msra.mxu0 %v2537
        %3373 = vmatprep.subr.mxu0 %v2542
        %3374 = vmatpush1.msra.mxu0 %v2541
        %3375 = vmatprep.subr.mxu0 %v2546
        %3376 = vmatpush1.msra.mxu0 %v2545
        %3377 = vmatprep.subr.mxu0 %v2550
        %3378 = vmatpush1.msra.mxu0 %v2549
        %3379 = vmatprep.subr.mxu0 %v2554
        %3380 = vmatpush1.msra.mxu0 %v2553
        %3381 = vmatprep.subr.mxu0 %v2558
        %3382 = vmatpush1.msra.mxu0 %v2557
        %3383 = vmatprep.subr.mxu0 %v2562
        %3384 = vmatpush1.msra.mxu0 %v2561
        %3385 = vmatprep.subr.mxu0 %v2566
        %3386 = vmatpush1.msra.mxu0 %v2565
        %3387 = vmatprep.subr.mxu0 %v2570
        %3388 = vmatpush1.msra.mxu0 %v2569
        %3389 = vmatprep.subr.mxu0 %v2574
        %3390 = vmatpush1.msra.mxu0 %v2573
        %3391 = vmatprep.subr.mxu0 %v2578
        %3392 = vmatpush1.msra.mxu0 %v2577
        %3393 = vmatprep.subr.mxu0 %v2582
        %3394 = vmatpush1.msra.mxu0 %v2581
        %3395 = vmatprep.subr.mxu0 %v2586
        %3396 = vmatpush1.msra.mxu0 %v2585
        %3397 = vmatprep.subr.mxu0 %v2590
        %3398 = vmatpush1.msra.mxu0 %v2589
        %3399 = vmatprep.subr.mxu0 %v2594
        %3400 = vmatpush1.msra.mxu0 %v2593
        %3401 = vmatprep.subr.mxu0 %v2598
        %3402 = vmatpush1.msra.mxu0 %v2597
        %3403 = vmatprep.subr.mxu0 %v2602
        %3404 = vmatpush1.msra.mxu0 %v2601
        %3405 = vmatprep.subr.mxu0 %v2606
        %3406 = vmatpush1.msra.mxu0 %v2605
        %3407 = vmatprep.subr.mxu0 %v2610
        %3408 = vmatpush1.msra.mxu0 %v2609
        %3409 = vmatprep.subr.mxu0 %v2614
        %3410 = vmatpush1.msra.mxu0 %v2613
        %3411 = vmatprep.subr.mxu0 %v2618
        %3412 = vmatpush1.msra.mxu0 %v2617
        %3413 = vmatprep.subr.mxu0 %v2622
        %3414 = vmatpush1.msra.mxu0 %v2621
        %3415 = vmatprep.subr.mxu0 %v2626
        %3416 = vmatpush1.msra.mxu0 %v2625
        %3417 = vmatprep.subr.mxu0 %v2630
        %3418 = vmatpush1.msra.mxu0 %v2629
        %3419 = vmatprep.subr.mxu0 %v2634
        %3420 = vmatpush1.msra.mxu0 %v2633
        %3421 = vmatprep.subr.mxu0 %v2638
        %3422 = vmatpush1.msra.mxu0 %v2637
        %3423 = vmatprep.subr.mxu0 %v2642
        %3424 = vmatpush1.msra.mxu0 %v2641
        %3425 = vmatprep.subr.mxu0 %v2646
        %3426 = vmatpush1.msra.mxu0 %v2645
        %3427 = vmatprep.subr.mxu0 %v2650
        %3428 = vmatpush1.msra.mxu0 %v2649
        %3429 = vmatprep.subr.mxu0 %v2654
        %3430 = vmatpush1.msra.mxu0 %v2653
        %3431 = vmatprep.subr.mxu0 %v2658
        %3432 = vmatpush1.msra.mxu0 %v2657
        %3433 = vmatprep.subr.mxu0 %v2662
        %3434 = vmatpush1.msra.mxu0 %v2661
        %3435 = vmatprep.mubr.f32.mxu0 %v2404
        %3436 = vmatmul.mubr.f32.gmra.mrb[0].mxu0 %v2403
        %v3437 = vpop.f32.mrb[0].mxu0
        %v3438 = vadd.f32 %v3361, %v3437
        %v3439 = vpop.f32.mrb[0].mxu0
        %v3440 = vadd.f32 %v3363, %v3439
        %3441 = vmatprep.mubr.f32.mxu0 %v2408
        %3442 = vmatmul.mubr.f32.gmra.mrb[0].mxu0 %v2407
        %v3443 = vpop.f32.mrb[0].mxu0
        %v3444 = vadd.f32 %v3367, %v3443
        %v3445 = vpop.f32.mrb[0].mxu0
        %v3446 = vadd.f32 %v3369, %v3445
        %3447 = vdwg.mxu0
        %3448 = vmatprep.subr.mxu0 %v2412
        %3449 = vmatpush1.msra.mxu0 %v2411
        %3450 = vmatprep.subr.mxu0 %v2416
        %3451 = vmatpush1.msra.mxu0 %v2415
        %3452 = vmatprep.subr.mxu0 %v2420
        %3453 = vmatpush1.msra.mxu0 %v2419
        %3454 = vmatprep.subr.mxu0 %v2424
        %3455 = vmatpush1.msra.mxu0 %v2423
        %3456 = vmatprep.subr.mxu0 %v2428
        %3457 = vmatpush1.msra.mxu0 %v2427
        %3458 = vmatprep.subr.mxu0 %v2432
        %3459 = vmatpush1.msra.mxu0 %v2431
        %3460 = vmatprep.subr.mxu0 %v2436
        %3461 = vmatpush1.msra.mxu0 %v2435
        %3462 = vmatprep.subr.mxu0 %v2440
        %3463 = vmatpush1.msra.mxu0 %v2439
        %3464 = vmatprep.subr.mxu0 %v2444
        %3465 = vmatpush1.msra.mxu0 %v2443
        %3466 = vmatprep.subr.mxu0 %v2448
        %3467 = vmatpush1.msra.mxu0 %v2447
        %3468 = vmatprep.subr.mxu0 %v2452
        %3469 = vmatpush1.msra.mxu0 %v2451
        %3470 = vmatprep.subr.mxu0 %v2456
        %3471 = vmatpush1.msra.mxu0 %v2455
        %3472 = vmatprep.subr.mxu0 %v2460
        %3473 = vmatpush1.msra.mxu0 %v2459
        %3474 = vmatprep.subr.mxu0 %v2464
        %3475 = vmatpush1.msra.mxu0 %v2463
        %3476 = vmatprep.subr.mxu0 %v2468
        %3477 = vmatpush1.msra.mxu0 %v2467
        %3478 = vmatprep.subr.mxu0 %v2472
        %3479 = vmatpush1.msra.mxu0 %v2471
        %3480 = vmatprep.subr.mxu0 %v2476
        %3481 = vmatpush1.msra.mxu0 %v2475
        %3482 = vmatprep.subr.mxu0 %v2480
        %3483 = vmatpush1.msra.mxu0 %v2479
        %3484 = vmatprep.subr.mxu0 %v2484
        %3485 = vmatpush1.msra.mxu0 %v2483
        %3486 = vmatprep.subr.mxu0 %v2488
        %3487 = vmatpush1.msra.mxu0 %v2487
        %3488 = vmatprep.subr.mxu0 %v2492
        %3489 = vmatpush1.msra.mxu0 %v2491
        %3490 = vmatprep.subr.mxu0 %v2496
        %3491 = vmatpush1.msra.mxu0 %v2495
        %3492 = vmatprep.subr.mxu0 %v2500
        %3493 = vmatpush1.msra.mxu0 %v2499
        %3494 = vmatprep.subr.mxu0 %v2504
        %3495 = vmatpush1.msra.mxu0 %v2503
        %3496 = vmatprep.subr.mxu0 %v2508
        %3497 = vmatpush1.msra.mxu0 %v2507
        %3498 = vmatprep.subr.mxu0 %v2512
        %3499 = vmatpush1.msra.mxu0 %v2511
        %3500 = vmatprep.subr.mxu0 %v2516
        %3501 = vmatpush1.msra.mxu0 %v2515
        %3502 = vmatprep.subr.mxu0 %v2520
        %3503 = vmatpush1.msra.mxu0 %v2519
        %3504 = vmatprep.subr.mxu0 %v2524
        %3505 = vmatpush1.msra.mxu0 %v2523
        %3506 = vmatprep.subr.mxu0 %v2528
        %3507 = vmatpush1.msra.mxu0 %v2527
        %3508 = vmatprep.subr.mxu0 %v2532
        %3509 = vmatpush1.msra.mxu0 %v2531
        %3510 = vmatprep.subr.mxu0 %v2536
        %3511 = vmatpush1.msra.mxu0 %v2535
        %3512 = vmatprep.mubr.f32.mxu0 %v2402
        %3513 = vmatmul.mubr.f32.gmra.mrb[0].mxu0 %v2401
        %v3514 = vpop.f32.mrb[0].mxu0
        %v3515 = vadd.f32 %v3284, %v3514
        %v3516 = vpop.f32.mrb[0].mxu0
        %v3517 = vadd.f32 %v3286, %v3516
        %3518 = vmatprep.mubr.f32.mxu0 %v2406
        %3519 = vmatmul.mubr.f32.gmra.mrb[0].mxu0 %v2405
        %v3520 = vpop.f32.mrb[0].mxu0
        %v3521 = vadd.f32 %v3290, %v3520
        %v3522 = vpop.f32.mrb[0].mxu0
        %v3523 = vadd.f32 %v3292, %v3522
        %3524 = vdwg.mxu0
        %3525 = vmatprep.subr.mxu0 %v2540
        %3526 = vmatpush1.msra.mxu0 %v2539
        %3527 = vmatprep.subr.mxu0 %v2544
        %3528 = vmatpush1.msra.mxu0 %v2543
        %3529 = vmatprep.subr.mxu0 %v2548
        %3530 = vmatpush1.msra.mxu0 %v2547
        %3531 = vmatprep.subr.mxu0 %v2552
        %3532 = vmatpush1.msra.mxu0 %v2551
        %3533 = vmatprep.subr.mxu0 %v2556
        %3534 = vmatpush1.msra.mxu0 %v2555
        %3535 = vmatprep.subr.mxu0 %v2560
        %3536 = vmatpush1.msra.mxu0 %v2559
        %3537 = vmatprep.subr.mxu0 %v2564
        %3538 = vmatpush1.msra.mxu0 %v2563
        %3539 = vmatprep.subr.mxu0 %v2568
        %3540 = vmatpush1.msra.mxu0 %v2567
        %3541 = vmatprep.subr.mxu0 %v2572
        %3542 = vmatpush1.msra.mxu0 %v2571
        %3543 = vmatprep.subr.mxu0 %v2576
        %3544 = vmatpush1.msra.mxu0 %v2575
        %3545 = vmatprep.subr.mxu0 %v2580
        %3546 = vmatpush1.msra.mxu0 %v2579
        %3547 = vmatprep.subr.mxu0 %v2584
        %3548 = vmatpush1.msra.mxu0 %v2583
        %3549 = vmatprep.subr.mxu0 %v2588
        %3550 = vmatpush1.msra.mxu0 %v2587
        %3551 = vmatprep.subr.mxu0 %v2592
        %3552 = vmatpush1.msra.mxu0 %v2591
        %3553 = vmatprep.subr.mxu0 %v2596
        %3554 = vmatpush1.msra.mxu0 %v2595
        %3555 = vmatprep.subr.mxu0 %v2600
        %3556 = vmatpush1.msra.mxu0 %v2599
        %3557 = vmatprep.subr.mxu0 %v2604
        %3558 = vmatpush1.msra.mxu0 %v2603
        %3559 = vmatprep.subr.mxu0 %v2608
        %3560 = vmatpush1.msra.mxu0 %v2607
        %3561 = vmatprep.subr.mxu0 %v2612
        %3562 = vmatpush1.msra.mxu0 %v2611
        %3563 = vmatprep.subr.mxu0 %v2616
        %3564 = vmatpush1.msra.mxu0 %v2615
        %3565 = vmatprep.subr.mxu0 %v2620
        %3566 = vmatpush1.msra.mxu0 %v2619
        %3567 = vmatprep.subr.mxu0 %v2624
        %3568 = vmatpush1.msra.mxu0 %v2623
        %3569 = vmatprep.subr.mxu0 %v2628
        %3570 = vmatpush1.msra.mxu0 %v2627
        %3571 = vmatprep.subr.mxu0 %v2632
        %3572 = vmatpush1.msra.mxu0 %v2631
        %3573 = vmatprep.subr.mxu0 %v2636
        %3574 = vmatpush1.msra.mxu0 %v2635
        %3575 = vmatprep.subr.mxu0 %v2640
        %3576 = vmatpush1.msra.mxu0 %v2639
        %3577 = vmatprep.subr.mxu0 %v2644
        %3578 = vmatpush1.msra.mxu0 %v2643
        %3579 = vmatprep.subr.mxu0 %v2648
        %3580 = vmatpush1.msra.mxu0 %v2647
        %3581 = vmatprep.subr.mxu0 %v2652
        %3582 = vmatpush1.msra.mxu0 %v2651
        %3583 = vmatprep.subr.mxu0 %v2656
        %3584 = vmatpush1.msra.mxu0 %v2655
        %3585 = vmatprep.subr.mxu0 %v2660
        %3586 = vmatpush1.msra.mxu0 %v2659
        %3587 = vmatprep.subr.mxu0 %v2664
        %3588 = vmatpush1.msra.mxu0 %v2663
        %3589 = vmatprep.mubr.f32.mxu0 %v2404
        %3590 = vmatmul.mubr.f32.gmra.mrb[0].mxu0 %v2403
        %v3591 = vpop.f32.mrb[0].mxu0
        %v3592 = vadd.f32 %v3515, %v3591
        %v3593 = vpop.f32.mrb[0].mxu0
        %v3594 = vadd.f32 %v3517, %v3593
        %3595 = vmatprep.mubr.f32.mxu0 %v2408
        %3596 = vmatmul.mubr.f32.gmra.mrb[0].mxu0 %v2407
        %v3597 = vpop.f32.mrb[0].mxu0
        %v3598 = vadd.f32 %v3521, %v3597
        %v3599 = vpop.f32.mrb[0].mxu0
        %v3600 = vadd.f32 %v3523, %v3599
        %3601 = vdwg.mxu0
        %v3602 = vld [vmem:[#allocation3] sm:$0xfc]
        %v3603 = vld [vmem:[#allocation3 + $0x8] sm:$0xfc]
        %v3604 = vld [vmem:[#allocation3 + $0x10] sm:$0xfc]
        %v3605 = vld [vmem:[#allocation3 + $0x18] sm:$0xfc]
        %v3606 = vld [vmem:[#allocation3 + $0x20] sm:$0x3]
        %v3607 = vld [vmem:[#allocation3 + $0x28] sm:$0x3]
        %v3608 = vld [vmem:[#allocation3 + $0x30] sm:$0x3]
        %v3609 = vld [vmem:[#allocation3 + $0x38] sm:$0x3]
        %v3610 = vld [vmem:[#allocation3 + $0x40] sm:$0xfc]
        %v3611 = vld [vmem:[#allocation3 + $0x48] sm:$0xfc]
        %v3612 = vld [vmem:[#allocation3 + $0x50] sm:$0xfc]
        %v3613 = vld [vmem:[#allocation3 + $0x58] sm:$0xfc]
        %v3614 = vld [vmem:[#allocation3 + $0x60] sm:$0x3]
        %v3615 = vld [vmem:[#allocation3 + $0x68] sm:$0x3]
        %v3616 = vld [vmem:[#allocation3 + $0x70] sm:$0x3]
        %v3617 = vld [vmem:[#allocation3 + $0x78] sm:$0x3]
        %v3634 = vrot.slane %v3602, 2
        %v3635 = vrot.slane %v3606, 2
        %v3636 = vsel %vm1687, %v3634, %v3635
        %v3637 = vrot.slane %v3603, 2
        %v3638 = vrot.slane %v3607, 2
        %v3639 = vsel %vm1687, %v3637, %v3638
        %v3640 = vrot.slane %v3604, 2
        %v3641 = vrot.slane %v3608, 2
        %v3642 = vsel %vm1687, %v3640, %v3641
        %v3643 = vrot.slane %v3605, 2
        %v3644 = vrot.slane %v3609, 2
        %v3645 = vsel %vm1687, %v3643, %v3644
        %v3646 = vrot.slane %v3610, 2
        %v3647 = vrot.slane %v3614, 2
        %v3648 = vsel %vm1687, %v3646, %v3647
        %v3649 = vrot.slane %v3611, 2
        %v3650 = vrot.slane %v3615, 2
        %v3651 = vsel %vm1687, %v3649, %v3650
        %v3652 = vrot.slane %v3612, 2
        %v3653 = vrot.slane %v3616, 2
        %v3654 = vsel %vm1687, %v3652, %v3653
        %v3655 = vrot.slane %v3613, 2
        %v3656 = vrot.slane %v3617, 2
        %v3657 = vsel %vm1687, %v3655, %v3656
        %s3666 = scalar_lea.vmem [#allocation12], 4096
        %v3667 = vld [vmem:[%s3666] sm:$0xff]
        %v3668 = vld [vmem:[%s3666 + $0x8] sm:$0xff]
        %v3669 = vld [vmem:[%s3666 + $0x10] sm:$0xff]
        %v3670 = vld [vmem:[%s3666 + $0x18] sm:$0xff]
        %v3671 = vld [vmem:[%s3666 + $0x20] sm:$0xff]
        %v3672 = vld [vmem:[%s3666 + $0x28] sm:$0xff]
        %v3673 = vld [vmem:[%s3666 + $0x30] sm:$0xff]
        %v3674 = vld [vmem:[%s3666 + $0x38] sm:$0xff]
        %v3675 = vld [vmem:[%s3666 + $0x40] sm:$0xff]
        %v3676 = vld [vmem:[%s3666 + $0x48] sm:$0xff]
        %v3677 = vld [vmem:[%s3666 + $0x50] sm:$0xff]
        %v3678 = vld [vmem:[%s3666 + $0x58] sm:$0xff]
        %v3679 = vld [vmem:[%s3666 + $0x60] sm:$0xff]
        %v3680 = vld [vmem:[%s3666 + $0x68] sm:$0xff]
        %v3681 = vld [vmem:[%s3666 + $0x70] sm:$0xff]
        %v3682 = vld [vmem:[%s3666 + $0x78] sm:$0xff]
        %v3683 = vld [vmem:[%s3666 + $0x80] sm:$0xff]
        %v3684 = vld [vmem:[%s3666 + $0x88] sm:$0xff]
        %v3685 = vld [vmem:[%s3666 + $0x90] sm:$0xff]
        %v3686 = vld [vmem:[%s3666 + $0x98] sm:$0xff]
        %v3687 = vld [vmem:[%s3666 + $0xa0] sm:$0xff]
        %v3688 = vld [vmem:[%s3666 + $0xa8] sm:$0xff]
        %v3689 = vld [vmem:[%s3666 + $0xb0] sm:$0xff]
        %v3690 = vld [vmem:[%s3666 + $0xb8] sm:$0xff]
        %v3691 = vld [vmem:[%s3666 + $0xc0] sm:$0xff]
        %v3692 = vld [vmem:[%s3666 + $0xc8] sm:$0xff]
        %v3693 = vld [vmem:[%s3666 + $0xd0] sm:$0xff]
        %v3694 = vld [vmem:[%s3666 + $0xd8] sm:$0xff]
        %v3695 = vld [vmem:[%s3666 + $0xe0] sm:$0xff]
        %v3696 = vld [vmem:[%s3666 + $0xe8] sm:$0xff]
        %v3697 = vld [vmem:[%s3666 + $0xf0] sm:$0xff]
        %v3698 = vld [vmem:[%s3666 + $0xf8] sm:$0xff]
        %v3699 = vld [vmem:[%s3666 + $0x100] sm:$0xff]
        %v3700 = vld [vmem:[%s3666 + $0x108] sm:$0xff]
        %v3701 = vld [vmem:[%s3666 + $0x110] sm:$0xff]
        %v3702 = vld [vmem:[%s3666 + $0x118] sm:$0xff]
        %v3703 = vld [vmem:[%s3666 + $0x120] sm:$0xff]
        %v3704 = vld [vmem:[%s3666 + $0x128] sm:$0xff]
        %v3705 = vld [vmem:[%s3666 + $0x130] sm:$0xff]
        %v3706 = vld [vmem:[%s3666 + $0x138] sm:$0xff]
        %v3707 = vld [vmem:[%s3666 + $0x140] sm:$0xff]
        %v3708 = vld [vmem:[%s3666 + $0x148] sm:$0xff]
        %v3709 = vld [vmem:[%s3666 + $0x150] sm:$0xff]
        %v3710 = vld [vmem:[%s3666 + $0x158] sm:$0xff]
        %v3711 = vld [vmem:[%s3666 + $0x160] sm:$0xff]
        %v3712 = vld [vmem:[%s3666 + $0x168] sm:$0xff]
        %v3713 = vld [vmem:[%s3666 + $0x170] sm:$0xff]
        %v3714 = vld [vmem:[%s3666 + $0x178] sm:$0xff]
        %v3715 = vld [vmem:[%s3666 + $0x180] sm:$0xff]
        %v3716 = vld [vmem:[%s3666 + $0x188] sm:$0xff]
        %v3717 = vld [vmem:[%s3666 + $0x190] sm:$0xff]
        %v3718 = vld [vmem:[%s3666 + $0x198] sm:$0xff]
        %v3719 = vld [vmem:[%s3666 + $0x1a0] sm:$0xff]
        %v3720 = vld [vmem:[%s3666 + $0x1a8] sm:$0xff]
        %v3721 = vld [vmem:[%s3666 + $0x1b0] sm:$0xff]
        %v3722 = vld [vmem:[%s3666 + $0x1b8] sm:$0xff]
        %v3723 = vld [vmem:[%s3666 + $0x1c0] sm:$0xff]
        %v3724 = vld [vmem:[%s3666 + $0x1c8] sm:$0xff]
        %v3725 = vld [vmem:[%s3666 + $0x1d0] sm:$0xff]
        %v3726 = vld [vmem:[%s3666 + $0x1d8] sm:$0xff]
        %v3727 = vld [vmem:[%s3666 + $0x1e0] sm:$0xff]
        %v3728 = vld [vmem:[%s3666 + $0x1e8] sm:$0xff]
        %v3729 = vld [vmem:[%s3666 + $0x1f0] sm:$0xff]
        %v3730 = vld [vmem:[%s3666 + $0x1f8] sm:$0xff]
        %v3731 = vld [vmem:[%s3666 + $0x200] sm:$0xff]
        %v3732 = vld [vmem:[%s3666 + $0x208] sm:$0xff]
        %v3733 = vld [vmem:[%s3666 + $0x210] sm:$0xff]
        %v3734 = vld [vmem:[%s3666 + $0x218] sm:$0xff]
        %v3735 = vld [vmem:[%s3666 + $0x220] sm:$0xff]
        %v3736 = vld [vmem:[%s3666 + $0x228] sm:$0xff]
        %v3737 = vld [vmem:[%s3666 + $0x230] sm:$0xff]
        %v3738 = vld [vmem:[%s3666 + $0x238] sm:$0xff]
        %v3739 = vld [vmem:[%s3666 + $0x240] sm:$0xff]
        %v3740 = vld [vmem:[%s3666 + $0x248] sm:$0xff]
        %v3741 = vld [vmem:[%s3666 + $0x250] sm:$0xff]
        %v3742 = vld [vmem:[%s3666 + $0x258] sm:$0xff]
        %v3743 = vld [vmem:[%s3666 + $0x260] sm:$0xff]
        %v3744 = vld [vmem:[%s3666 + $0x268] sm:$0xff]
        %v3745 = vld [vmem:[%s3666 + $0x270] sm:$0xff]
        %v3746 = vld [vmem:[%s3666 + $0x278] sm:$0xff]
        %v3747 = vld [vmem:[%s3666 + $0x280] sm:$0xff]
        %v3748 = vld [vmem:[%s3666 + $0x288] sm:$0xff]
        %v3749 = vld [vmem:[%s3666 + $0x290] sm:$0xff]
        %v3750 = vld [vmem:[%s3666 + $0x298] sm:$0xff]
        %v3751 = vld [vmem:[%s3666 + $0x2a0] sm:$0xff]
        %v3752 = vld [vmem:[%s3666 + $0x2a8] sm:$0xff]
        %v3753 = vld [vmem:[%s3666 + $0x2b0] sm:$0xff]
        %v3754 = vld [vmem:[%s3666 + $0x2b8] sm:$0xff]
        %v3755 = vld [vmem:[%s3666 + $0x2c0] sm:$0xff]
        %v3756 = vld [vmem:[%s3666 + $0x2c8] sm:$0xff]
        %v3757 = vld [vmem:[%s3666 + $0x2d0] sm:$0xff]
        %v3758 = vld [vmem:[%s3666 + $0x2d8] sm:$0xff]
        %v3759 = vld [vmem:[%s3666 + $0x2e0] sm:$0xff]
        %v3760 = vld [vmem:[%s3666 + $0x2e8] sm:$0xff]
        %v3761 = vld [vmem:[%s3666 + $0x2f0] sm:$0xff]
        %v3762 = vld [vmem:[%s3666 + $0x2f8] sm:$0xff]
        %v3763 = vld [vmem:[%s3666 + $0x300] sm:$0xff]
        %v3764 = vld [vmem:[%s3666 + $0x308] sm:$0xff]
        %v3765 = vld [vmem:[%s3666 + $0x310] sm:$0xff]
        %v3766 = vld [vmem:[%s3666 + $0x318] sm:$0xff]
        %v3767 = vld [vmem:[%s3666 + $0x320] sm:$0xff]
        %v3768 = vld [vmem:[%s3666 + $0x328] sm:$0xff]
        %v3769 = vld [vmem:[%s3666 + $0x330] sm:$0xff]
        %v3770 = vld [vmem:[%s3666 + $0x338] sm:$0xff]
        %v3771 = vld [vmem:[%s3666 + $0x340] sm:$0xff]
        %v3772 = vld [vmem:[%s3666 + $0x348] sm:$0xff]
        %v3773 = vld [vmem:[%s3666 + $0x350] sm:$0xff]
        %v3774 = vld [vmem:[%s3666 + $0x358] sm:$0xff]
        %v3775 = vld [vmem:[%s3666 + $0x360] sm:$0xff]
        %v3776 = vld [vmem:[%s3666 + $0x368] sm:$0xff]
        %v3777 = vld [vmem:[%s3666 + $0x370] sm:$0xff]
        %v3778 = vld [vmem:[%s3666 + $0x378] sm:$0xff]
        %v3779 = vld [vmem:[%s3666 + $0x380] sm:$0xff]
        %v3780 = vld [vmem:[%s3666 + $0x388] sm:$0xff]
        %v3781 = vld [vmem:[%s3666 + $0x390] sm:$0xff]
        %v3782 = vld [vmem:[%s3666 + $0x398] sm:$0xff]
        %v3783 = vld [vmem:[%s3666 + $0x3a0] sm:$0xff]
        %v3784 = vld [vmem:[%s3666 + $0x3a8] sm:$0xff]
        %v3785 = vld [vmem:[%s3666 + $0x3b0] sm:$0xff]
        %v3786 = vld [vmem:[%s3666 + $0x3b8] sm:$0xff]
        %v3787 = vld [vmem:[%s3666 + $0x3c0] sm:$0xff]
        %v3788 = vld [vmem:[%s3666 + $0x3c8] sm:$0xff]
        %v3789 = vld [vmem:[%s3666 + $0x3d0] sm:$0xff]
        %v3790 = vld [vmem:[%s3666 + $0x3d8] sm:$0xff]
        %v3791 = vld [vmem:[%s3666 + $0x3e0] sm:$0xff]
        %v3792 = vld [vmem:[%s3666 + $0x3e8] sm:$0xff]
        %v3793 = vld [vmem:[%s3666 + $0x3f0] sm:$0xff]
        %v3794 = vld [vmem:[%s3666 + $0x3f8] sm:$0xff]
        %v3795 = vld [vmem:[%s3666 + $0x400] sm:$0xff]
        %v3796 = vld [vmem:[%s3666 + $0x408] sm:$0xff]
        %v3797 = vld [vmem:[%s3666 + $0x410] sm:$0xff]
        %v3798 = vld [vmem:[%s3666 + $0x418] sm:$0xff]
        %v3799 = vld [vmem:[%s3666 + $0x420] sm:$0xff]
        %v3800 = vld [vmem:[%s3666 + $0x428] sm:$0xff]
        %v3801 = vld [vmem:[%s3666 + $0x430] sm:$0xff]
        %v3802 = vld [vmem:[%s3666 + $0x438] sm:$0xff]
        %v3803 = vld [vmem:[%s3666 + $0x440] sm:$0xff]
        %v3804 = vld [vmem:[%s3666 + $0x448] sm:$0xff]
        %v3805 = vld [vmem:[%s3666 + $0x450] sm:$0xff]
        %v3806 = vld [vmem:[%s3666 + $0x458] sm:$0xff]
        %v3807 = vld [vmem:[%s3666 + $0x460] sm:$0xff]
        %v3808 = vld [vmem:[%s3666 + $0x468] sm:$0xff]
        %v3809 = vld [vmem:[%s3666 + $0x470] sm:$0xff]
        %v3810 = vld [vmem:[%s3666 + $0x478] sm:$0xff]
        %v3811 = vld [vmem:[%s3666 + $0x480] sm:$0xff]
        %v3812 = vld [vmem:[%s3666 + $0x488] sm:$0xff]
        %v3813 = vld [vmem:[%s3666 + $0x490] sm:$0xff]
        %v3814 = vld [vmem:[%s3666 + $0x498] sm:$0xff]
        %v3815 = vld [vmem:[%s3666 + $0x4a0] sm:$0xff]
        %v3816 = vld [vmem:[%s3666 + $0x4a8] sm:$0xff]
        %v3817 = vld [vmem:[%s3666 + $0x4b0] sm:$0xff]
        %v3818 = vld [vmem:[%s3666 + $0x4b8] sm:$0xff]
        %v3819 = vld [vmem:[%s3666 + $0x4c0] sm:$0xff]
        %v3820 = vld [vmem:[%s3666 + $0x4c8] sm:$0xff]
        %v3821 = vld [vmem:[%s3666 + $0x4d0] sm:$0xff]
        %v3822 = vld [vmem:[%s3666 + $0x4d8] sm:$0xff]
        %v3823 = vld [vmem:[%s3666 + $0x4e0] sm:$0xff]
        %v3824 = vld [vmem:[%s3666 + $0x4e8] sm:$0xff]
        %v3825 = vld [vmem:[%s3666 + $0x4f0] sm:$0xff]
        %v3826 = vld [vmem:[%s3666 + $0x4f8] sm:$0xff]
        %v3827 = vld [vmem:[%s3666 + $0x500] sm:$0xff]
        %v3828 = vld [vmem:[%s3666 + $0x508] sm:$0xff]
        %v3829 = vld [vmem:[%s3666 + $0x510] sm:$0xff]
        %v3830 = vld [vmem:[%s3666 + $0x518] sm:$0xff]
        %v3831 = vld [vmem:[%s3666 + $0x520] sm:$0xff]
        %v3832 = vld [vmem:[%s3666 + $0x528] sm:$0xff]
        %v3833 = vld [vmem:[%s3666 + $0x530] sm:$0xff]
        %v3834 = vld [vmem:[%s3666 + $0x538] sm:$0xff]
        %v3835 = vld [vmem:[%s3666 + $0x540] sm:$0xff]
        %v3836 = vld [vmem:[%s3666 + $0x548] sm:$0xff]
        %v3837 = vld [vmem:[%s3666 + $0x550] sm:$0xff]
        %v3838 = vld [vmem:[%s3666 + $0x558] sm:$0xff]
        %v3839 = vld [vmem:[%s3666 + $0x560] sm:$0xff]
        %v3840 = vld [vmem:[%s3666 + $0x568] sm:$0xff]
        %v3841 = vld [vmem:[%s3666 + $0x570] sm:$0xff]
        %v3842 = vld [vmem:[%s3666 + $0x578] sm:$0xff]
        %v3843 = vld [vmem:[%s3666 + $0x580] sm:$0xff]
        %v3844 = vld [vmem:[%s3666 + $0x588] sm:$0xff]
        %v3845 = vld [vmem:[%s3666 + $0x590] sm:$0xff]
        %v3846 = vld [vmem:[%s3666 + $0x598] sm:$0xff]
        %v3847 = vld [vmem:[%s3666 + $0x5a0] sm:$0xff]
        %v3848 = vld [vmem:[%s3666 + $0x5a8] sm:$0xff]
        %v3849 = vld [vmem:[%s3666 + $0x5b0] sm:$0xff]
        %v3850 = vld [vmem:[%s3666 + $0x5b8] sm:$0xff]
        %v3851 = vld [vmem:[%s3666 + $0x5c0] sm:$0xff]
        %v3852 = vld [vmem:[%s3666 + $0x5c8] sm:$0xff]
        %v3853 = vld [vmem:[%s3666 + $0x5d0] sm:$0xff]
        %v3854 = vld [vmem:[%s3666 + $0x5d8] sm:$0xff]
        %v3855 = vld [vmem:[%s3666 + $0x5e0] sm:$0xff]
        %v3856 = vld [vmem:[%s3666 + $0x5e8] sm:$0xff]
        %v3857 = vld [vmem:[%s3666 + $0x5f0] sm:$0xff]
        %v3858 = vld [vmem:[%s3666 + $0x5f8] sm:$0xff]
        %v3859 = vld [vmem:[%s3666 + $0x600] sm:$0xff]
        %v3860 = vld [vmem:[%s3666 + $0x608] sm:$0xff]
        %v3861 = vld [vmem:[%s3666 + $0x610] sm:$0xff]
        %v3862 = vld [vmem:[%s3666 + $0x618] sm:$0xff]
        %v3863 = vld [vmem:[%s3666 + $0x620] sm:$0xff]
        %v3864 = vld [vmem:[%s3666 + $0x628] sm:$0xff]
        %v3865 = vld [vmem:[%s3666 + $0x630] sm:$0xff]
        %v3866 = vld [vmem:[%s3666 + $0x638] sm:$0xff]
        %v3867 = vld [vmem:[%s3666 + $0x640] sm:$0xff]
        %v3868 = vld [vmem:[%s3666 + $0x648] sm:$0xff]
        %v3869 = vld [vmem:[%s3666 + $0x650] sm:$0xff]
        %v3870 = vld [vmem:[%s3666 + $0x658] sm:$0xff]
        %v3871 = vld [vmem:[%s3666 + $0x660] sm:$0xff]
        %v3872 = vld [vmem:[%s3666 + $0x668] sm:$0xff]
        %v3873 = vld [vmem:[%s3666 + $0x670] sm:$0xff]
        %v3874 = vld [vmem:[%s3666 + $0x678] sm:$0xff]
        %v3875 = vld [vmem:[%s3666 + $0x680] sm:$0xff]
        %v3876 = vld [vmem:[%s3666 + $0x688] sm:$0xff]
        %v3877 = vld [vmem:[%s3666 + $0x690] sm:$0xff]
        %v3878 = vld [vmem:[%s3666 + $0x698] sm:$0xff]
        %v3879 = vld [vmem:[%s3666 + $0x6a0] sm:$0xff]
        %v3880 = vld [vmem:[%s3666 + $0x6a8] sm:$0xff]
        %v3881 = vld [vmem:[%s3666 + $0x6b0] sm:$0xff]
        %v3882 = vld [vmem:[%s3666 + $0x6b8] sm:$0xff]
        %v3883 = vld [vmem:[%s3666 + $0x6c0] sm:$0xff]
        %v3884 = vld [vmem:[%s3666 + $0x6c8] sm:$0xff]
        %v3885 = vld [vmem:[%s3666 + $0x6d0] sm:$0xff]
        %v3886 = vld [vmem:[%s3666 + $0x6d8] sm:$0xff]
        %v3887 = vld [vmem:[%s3666 + $0x6e0] sm:$0xff]
        %v3888 = vld [vmem:[%s3666 + $0x6e8] sm:$0xff]
        %v3889 = vld [vmem:[%s3666 + $0x6f0] sm:$0xff]
        %v3890 = vld [vmem:[%s3666 + $0x6f8] sm:$0xff]
        %v3891 = vld [vmem:[%s3666 + $0x700] sm:$0xff]
        %v3892 = vld [vmem:[%s3666 + $0x708] sm:$0xff]
        %v3893 = vld [vmem:[%s3666 + $0x710] sm:$0xff]
        %v3894 = vld [vmem:[%s3666 + $0x718] sm:$0xff]
        %v3895 = vld [vmem:[%s3666 + $0x720] sm:$0xff]
        %v3896 = vld [vmem:[%s3666 + $0x728] sm:$0xff]
        %v3897 = vld [vmem:[%s3666 + $0x730] sm:$0xff]
        %v3898 = vld [vmem:[%s3666 + $0x738] sm:$0xff]
        %v3899 = vld [vmem:[%s3666 + $0x740] sm:$0xff]
        %v3900 = vld [vmem:[%s3666 + $0x748] sm:$0xff]
        %v3901 = vld [vmem:[%s3666 + $0x750] sm:$0xff]
        %v3902 = vld [vmem:[%s3666 + $0x758] sm:$0xff]
        %v3903 = vld [vmem:[%s3666 + $0x760] sm:$0xff]
        %v3904 = vld [vmem:[%s3666 + $0x768] sm:$0xff]
        %v3905 = vld [vmem:[%s3666 + $0x770] sm:$0xff]
        %v3906 = vld [vmem:[%s3666 + $0x778] sm:$0xff]
        %v3907 = vld [vmem:[%s3666 + $0x780] sm:$0xff]
        %v3908 = vld [vmem:[%s3666 + $0x788] sm:$0xff]
        %v3909 = vld [vmem:[%s3666 + $0x790] sm:$0xff]
        %v3910 = vld [vmem:[%s3666 + $0x798] sm:$0xff]
        %v3911 = vld [vmem:[%s3666 + $0x7a0] sm:$0xff]
        %v3912 = vld [vmem:[%s3666 + $0x7a8] sm:$0xff]
        %v3913 = vld [vmem:[%s3666 + $0x7b0] sm:$0xff]
        %v3914 = vld [vmem:[%s3666 + $0x7b8] sm:$0xff]
        %v3915 = vld [vmem:[%s3666 + $0x7c0] sm:$0xff]
        %v3916 = vld [vmem:[%s3666 + $0x7c8] sm:$0xff]
        %v3917 = vld [vmem:[%s3666 + $0x7d0] sm:$0xff]
        %v3918 = vld [vmem:[%s3666 + $0x7d8] sm:$0xff]
        %v3919 = vld [vmem:[%s3666 + $0x7e0] sm:$0xff]
        %v3920 = vld [vmem:[%s3666 + $0x7e8] sm:$0xff]
        %v3921 = vld [vmem:[%s3666 + $0x7f0] sm:$0xff]
        %v3922 = vld [vmem:[%s3666 + $0x7f8] sm:$0xff]
        %3923 = vmatprep.subr.mxu0 %v3668
        %3924 = vmatpush1.msra.mxu0 %v3667
        %3925 = vmatprep.subr.mxu0 %v3672
        %3926 = vmatpush1.msra.mxu0 %v3671
        %3927 = vmatprep.subr.mxu0 %v3676
        %3928 = vmatpush1.msra.mxu0 %v3675
        %3929 = vmatprep.subr.mxu0 %v3680
        %3930 = vmatpush1.msra.mxu0 %v3679
        %3931 = vmatprep.subr.mxu0 %v3684
        %3932 = vmatpush1.msra.mxu0 %v3683
        %3933 = vmatprep.subr.mxu0 %v3688
        %3934 = vmatpush1.msra.mxu0 %v3687
        %3935 = vmatprep.subr.mxu0 %v3692
        %3936 = vmatpush1.msra.mxu0 %v3691
        %3937 = vmatprep.subr.mxu0 %v3696
        %3938 = vmatpush1.msra.mxu0 %v3695
        %3939 = vmatprep.subr.mxu0 %v3700
        %3940 = vmatpush1.msra.mxu0 %v3699
        %3941 = vmatprep.subr.mxu0 %v3704
        %3942 = vmatpush1.msra.mxu0 %v3703
        %3943 = vmatprep.subr.mxu0 %v3708
        %3944 = vmatpush1.msra.mxu0 %v3707
        %3945 = vmatprep.subr.mxu0 %v3712
        %3946 = vmatpush1.msra.mxu0 %v3711
        %3947 = vmatprep.subr.mxu0 %v3716
        %3948 = vmatpush1.msra.mxu0 %v3715
        %3949 = vmatprep.subr.mxu0 %v3720
        %3950 = vmatpush1.msra.mxu0 %v3719
        %3951 = vmatprep.subr.mxu0 %v3724
        %3952 = vmatpush1.msra.mxu0 %v3723
        %3953 = vmatprep.subr.mxu0 %v3728
        %3954 = vmatpush1.msra.mxu0 %v3727
        %3955 = vmatprep.subr.mxu0 %v3732
        %3956 = vmatpush1.msra.mxu0 %v3731
        %3957 = vmatprep.subr.mxu0 %v3736
        %3958 = vmatpush1.msra.mxu0 %v3735
        %3959 = vmatprep.subr.mxu0 %v3740
        %3960 = vmatpush1.msra.mxu0 %v3739
        %3961 = vmatprep.subr.mxu0 %v3744
        %3962 = vmatpush1.msra.mxu0 %v3743
        %3963 = vmatprep.subr.mxu0 %v3748
        %3964 = vmatpush1.msra.mxu0 %v3747
        %3965 = vmatprep.subr.mxu0 %v3752
        %3966 = vmatpush1.msra.mxu0 %v3751
        %3967 = vmatprep.subr.mxu0 %v3756
        %3968 = vmatpush1.msra.mxu0 %v3755
        %3969 = vmatprep.subr.mxu0 %v3760
        %3970 = vmatpush1.msra.mxu0 %v3759
        %3971 = vmatprep.subr.mxu0 %v3764
        %3972 = vmatpush1.msra.mxu0 %v3763
        %3973 = vmatprep.subr.mxu0 %v3768
        %3974 = vmatpush1.msra.mxu0 %v3767
        %3975 = vmatprep.subr.mxu0 %v3772
        %3976 = vmatpush1.msra.mxu0 %v3771
        %3977 = vmatprep.subr.mxu0 %v3776
        %3978 = vmatpush1.msra.mxu0 %v3775
        %3979 = vmatprep.subr.mxu0 %v3780
        %3980 = vmatpush1.msra.mxu0 %v3779
        %3981 = vmatprep.subr.mxu0 %v3784
        %3982 = vmatpush1.msra.mxu0 %v3783
        %3983 = vmatprep.subr.mxu0 %v3788
        %3984 = vmatpush1.msra.mxu0 %v3787
        %3985 = vmatprep.subr.mxu0 %v3792
        %3986 = vmatpush1.msra.mxu0 %v3791
        %3987 = vmatprep.mubr.f32.mxu0 %v3639
        %3988 = vmatmul.mubr.f32.gmra.mrb[0].mxu0 %v3636
        %v3989 = vpop.f32.mrb[0].mxu0
        %v3990 = vadd.f32 0.0, %v3989
        %v3991 = vpop.f32.mrb[0].mxu0
        %v3992 = vadd.f32 0.0, %v3991
        %3993 = vmatprep.mubr.f32.mxu0 %v3651
        %3994 = vmatmul.mubr.f32.gmra.mrb[0].mxu0 %v3648
        %v3995 = vpop.f32.mrb[0].mxu0
        %v3996 = vadd.f32 0.0, %v3995
        %v3997 = vpop.f32.mrb[0].mxu0
        %v3998 = vadd.f32 0.0, %v3997
        %3999 = vdwg.mxu0
        %4000 = vmatprep.subr.mxu0 %v3796
        %4001 = vmatpush1.msra.mxu0 %v3795
        %4002 = vmatprep.subr.mxu0 %v3800
        %4003 = vmatpush1.msra.mxu0 %v3799
        %4004 = vmatprep.subr.mxu0 %v3804
        %4005 = vmatpush1.msra.mxu0 %v3803
        %4006 = vmatprep.subr.mxu0 %v3808
        %4007 = vmatpush1.msra.mxu0 %v3807
        %4008 = vmatprep.subr.mxu0 %v3812
        %4009 = vmatpush1.msra.mxu0 %v3811
        %4010 = vmatprep.subr.mxu0 %v3816
        %4011 = vmatpush1.msra.mxu0 %v3815
        %4012 = vmatprep.subr.mxu0 %v3820
        %4013 = vmatpush1.msra.mxu0 %v3819
        %4014 = vmatprep.subr.mxu0 %v3824
        %4015 = vmatpush1.msra.mxu0 %v3823
        %4016 = vmatprep.subr.mxu0 %v3828
        %4017 = vmatpush1.msra.mxu0 %v3827
        %4018 = vmatprep.subr.mxu0 %v3832
        %4019 = vmatpush1.msra.mxu0 %v3831
        %4020 = vmatprep.subr.mxu0 %v3836
        %4021 = vmatpush1.msra.mxu0 %v3835
        %4022 = vmatprep.subr.mxu0 %v3840
        %4023 = vmatpush1.msra.mxu0 %v3839
        %4024 = vmatprep.subr.mxu0 %v3844
        %4025 = vmatpush1.msra.mxu0 %v3843
        %4026 = vmatprep.subr.mxu0 %v3848
        %4027 = vmatpush1.msra.mxu0 %v3847
        %4028 = vmatprep.subr.mxu0 %v3852
        %4029 = vmatpush1.msra.mxu0 %v3851
        %4030 = vmatprep.subr.mxu0 %v3856
        %4031 = vmatpush1.msra.mxu0 %v3855
        %4032 = vmatprep.subr.mxu0 %v3860
        %4033 = vmatpush1.msra.mxu0 %v3859
        %4034 = vmatprep.subr.mxu0 %v3864
        %4035 = vmatpush1.msra.mxu0 %v3863
        %4036 = vmatprep.subr.mxu0 %v3868
        %4037 = vmatpush1.msra.mxu0 %v3867
        %4038 = vmatprep.subr.mxu0 %v3872
        %4039 = vmatpush1.msra.mxu0 %v3871
        %4040 = vmatprep.subr.mxu0 %v3876
        %4041 = vmatpush1.msra.mxu0 %v3875
        %4042 = vmatprep.subr.mxu0 %v3880
        %4043 = vmatpush1.msra.mxu0 %v3879
        %4044 = vmatprep.subr.mxu0 %v3884
        %4045 = vmatpush1.msra.mxu0 %v3883
        %4046 = vmatprep.subr.mxu0 %v3888
        %4047 = vmatpush1.msra.mxu0 %v3887
        %4048 = vmatprep.subr.mxu0 %v3892
        %4049 = vmatpush1.msra.mxu0 %v3891
        %4050 = vmatprep.subr.mxu0 %v3896
        %4051 = vmatpush1.msra.mxu0 %v3895
        %4052 = vmatprep.subr.mxu0 %v3900
        %4053 = vmatpush1.msra.mxu0 %v3899
        %4054 = vmatprep.subr.mxu0 %v3904
        %4055 = vmatpush1.msra.mxu0 %v3903
        %4056 = vmatprep.subr.mxu0 %v3908
        %4057 = vmatpush1.msra.mxu0 %v3907
        %4058 = vmatprep.subr.mxu0 %v3912
        %4059 = vmatpush1.msra.mxu0 %v3911
        %4060 = vmatprep.subr.mxu0 %v3916
        %4061 = vmatpush1.msra.mxu0 %v3915
        %4062 = vmatprep.subr.mxu0 %v3920
        %4063 = vmatpush1.msra.mxu0 %v3919
        %4064 = vmatprep.mubr.f32.mxu0 %v3645
        %4065 = vmatmul.mubr.f32.gmra.mrb[0].mxu0 %v3642
        %v4066 = vpop.f32.mrb[0].mxu0
        %v4067 = vadd.f32 %v3990, %v4066
        %v4068 = vpop.f32.mrb[0].mxu0
        %v4069 = vadd.f32 %v3992, %v4068
        %4070 = vmatprep.mubr.f32.mxu0 %v3657
        %4071 = vmatmul.mubr.f32.gmra.mrb[0].mxu0 %v3654
        %v4072 = vpop.f32.mrb[0].mxu0
        %v4073 = vadd.f32 %v3996, %v4072
        %v4074 = vpop.f32.mrb[0].mxu0
        %v4075 = vadd.f32 %v3998, %v4074
        %4076 = vdwg.mxu0
        %4077 = vmatprep.subr.mxu0 %v3670
        %4078 = vmatpush1.msra.mxu0 %v3669
        %4079 = vmatprep.subr.mxu0 %v3674
        %4080 = vmatpush1.msra.mxu0 %v3673
        %4081 = vmatprep.subr.mxu0 %v3678
        %4082 = vmatpush1.msra.mxu0 %v3677
        %4083 = vmatprep.subr.mxu0 %v3682
        %4084 = vmatpush1.msra.mxu0 %v3681
        %4085 = vmatprep.subr.mxu0 %v3686
        %4086 = vmatpush1.msra.mxu0 %v3685
        %4087 = vmatprep.subr.mxu0 %v3690
        %4088 = vmatpush1.msra.mxu0 %v3689
        %4089 = vmatprep.subr.mxu0 %v3694
        %4090 = vmatpush1.msra.mxu0 %v3693
        %4091 = vmatprep.subr.mxu0 %v3698
        %4092 = vmatpush1.msra.mxu0 %v3697
        %4093 = vmatprep.subr.mxu0 %v3702
        %4094 = vmatpush1.msra.mxu0 %v3701
        %4095 = vmatprep.subr.mxu0 %v3706
        %4096 = vmatpush1.msra.mxu0 %v3705
        %4097 = vmatprep.subr.mxu0 %v3710
        %4098 = vmatpush1.msra.mxu0 %v3709
        %4099 = vmatprep.subr.mxu0 %v3714
        %4100 = vmatpush1.msra.mxu0 %v3713
        %4101 = vmatprep.subr.mxu0 %v3718
        %4102 = vmatpush1.msra.mxu0 %v3717
        %4103 = vmatprep.subr.mxu0 %v3722
        %4104 = vmatpush1.msra.mxu0 %v3721
        %4105 = vmatprep.subr.mxu0 %v3726
        %4106 = vmatpush1.msra.mxu0 %v3725
        %4107 = vmatprep.subr.mxu0 %v3730
        %4108 = vmatpush1.msra.mxu0 %v3729
        %4109 = vmatprep.subr.mxu0 %v3734
        %4110 = vmatpush1.msra.mxu0 %v3733
        %4111 = vmatprep.subr.mxu0 %v3738
        %4112 = vmatpush1.msra.mxu0 %v3737
        %4113 = vmatprep.subr.mxu0 %v3742
        %4114 = vmatpush1.msra.mxu0 %v3741
        %4115 = vmatprep.subr.mxu0 %v3746
        %4116 = vmatpush1.msra.mxu0 %v3745
        %4117 = vmatprep.subr.mxu0 %v3750
        %4118 = vmatpush1.msra.mxu0 %v3749
        %4119 = vmatprep.subr.mxu0 %v3754
        %4120 = vmatpush1.msra.mxu0 %v3753
        %4121 = vmatprep.subr.mxu0 %v3758
        %4122 = vmatpush1.msra.mxu0 %v3757
        %4123 = vmatprep.subr.mxu0 %v3762
        %4124 = vmatpush1.msra.mxu0 %v3761
        %4125 = vmatprep.subr.mxu0 %v3766
        %4126 = vmatpush1.msra.mxu0 %v3765
        %4127 = vmatprep.subr.mxu0 %v3770
        %4128 = vmatpush1.msra.mxu0 %v3769
        %4129 = vmatprep.subr.mxu0 %v3774
        %4130 = vmatpush1.msra.mxu0 %v3773
        %4131 = vmatprep.subr.mxu0 %v3778
        %4132 = vmatpush1.msra.mxu0 %v3777
        %4133 = vmatprep.subr.mxu0 %v3782
        %4134 = vmatpush1.msra.mxu0 %v3781
        %4135 = vmatprep.subr.mxu0 %v3786
        %4136 = vmatpush1.msra.mxu0 %v3785
        %4137 = vmatprep.subr.mxu0 %v3790
        %4138 = vmatpush1.msra.mxu0 %v3789
        %4139 = vmatprep.subr.mxu0 %v3794
        %4140 = vmatpush1.msra.mxu0 %v3793
        %4141 = vmatprep.mubr.f32.mxu0 %v3639
        %4142 = vmatmul.mubr.f32.gmra.mrb[0].mxu0 %v3636
        %v4143 = vpop.f32.mrb[0].mxu0
        %v4144 = vadd.f32 0.0, %v4143
        %v4145 = vpop.f32.mrb[0].mxu0
        %v4146 = vadd.f32 0.0, %v4145
        %4147 = vmatprep.mubr.f32.mxu0 %v3651
        %4148 = vmatmul.mubr.f32.gmra.mrb[0].mxu0 %v3648
        %v4149 = vpop.f32.mrb[0].mxu0
        %v4150 = vadd.f32 0.0, %v4149
        %v4151 = vpop.f32.mrb[0].mxu0
        %v4152 = vadd.f32 0.0, %v4151
        %4153 = vdwg.mxu0
        %4154 = vmatprep.subr.mxu0 %v3798
        %4155 = vmatpush1.msra.mxu0 %v3797
        %4156 = vmatprep.subr.mxu0 %v3802
        %4157 = vmatpush1.msra.mxu0 %v3801
        %4158 = vmatprep.subr.mxu0 %v3806
        %4159 = vmatpush1.msra.mxu0 %v3805
        %4160 = vmatprep.subr.mxu0 %v3810
        %4161 = vmatpush1.msra.mxu0 %v3809
        %4162 = vmatprep.subr.mxu0 %v3814
        %4163 = vmatpush1.msra.mxu0 %v3813
        %4164 = vmatprep.subr.mxu0 %v3818
        %4165 = vmatpush1.msra.mxu0 %v3817
        %4166 = vmatprep.subr.mxu0 %v3822
        %4167 = vmatpush1.msra.mxu0 %v3821
        %4168 = vmatprep.subr.mxu0 %v3826
        %4169 = vmatpush1.msra.mxu0 %v3825
        %4170 = vmatprep.subr.mxu0 %v3830
        %4171 = vmatpush1.msra.mxu0 %v3829
        %4172 = vmatprep.subr.mxu0 %v3834
        %4173 = vmatpush1.msra.mxu0 %v3833
        %4174 = vmatprep.subr.mxu0 %v3838
        %4175 = vmatpush1.msra.mxu0 %v3837
        %4176 = vmatprep.subr.mxu0 %v3842
        %4177 = vmatpush1.msra.mxu0 %v3841
        %4178 = vmatprep.subr.mxu0 %v3846
        %4179 = vmatpush1.msra.mxu0 %v3845
        %4180 = vmatprep.subr.mxu0 %v3850
        %4181 = vmatpush1.msra.mxu0 %v3849
        %4182 = vmatprep.subr.mxu0 %v3854
        %4183 = vmatpush1.msra.mxu0 %v3853
        %4184 = vmatprep.subr.mxu0 %v3858
        %4185 = vmatpush1.msra.mxu0 %v3857
        %4186 = vmatprep.subr.mxu0 %v3862
        %4187 = vmatpush1.msra.mxu0 %v3861
        %4188 = vmatprep.subr.mxu0 %v3866
        %4189 = vmatpush1.msra.mxu0 %v3865
        %4190 = vmatprep.subr.mxu0 %v3870
        %4191 = vmatpush1.msra.mxu0 %v3869
        %4192 = vmatprep.subr.mxu0 %v3874
        %4193 = vmatpush1.msra.mxu0 %v3873
        %4194 = vmatprep.subr.mxu0 %v3878
        %4195 = vmatpush1.msra.mxu0 %v3877
        %4196 = vmatprep.subr.mxu0 %v3882
        %4197 = vmatpush1.msra.mxu0 %v3881
        %4198 = vmatprep.subr.mxu0 %v3886
        %4199 = vmatpush1.msra.mxu0 %v3885
        %4200 = vmatprep.subr.mxu0 %v3890
        %4201 = vmatpush1.msra.mxu0 %v3889
        %4202 = vmatprep.subr.mxu0 %v3894
        %4203 = vmatpush1.msra.mxu0 %v3893
        %4204 = vmatprep.subr.mxu0 %v3898
        %4205 = vmatpush1.msra.mxu0 %v3897
        %4206 = vmatprep.subr.mxu0 %v3902
        %4207 = vmatpush1.msra.mxu0 %v3901
        %4208 = vmatprep.subr.mxu0 %v3906
        %4209 = vmatpush1.msra.mxu0 %v3905
        %4210 = vmatprep.subr.mxu0 %v3910
        %4211 = vmatpush1.msra.mxu0 %v3909
        %4212 = vmatprep.subr.mxu0 %v3914
        %4213 = vmatpush1.msra.mxu0 %v3913
        %4214 = vmatprep.subr.mxu0 %v3918
        %4215 = vmatpush1.msra.mxu0 %v3917
        %4216 = vmatprep.subr.mxu0 %v3922
        %4217 = vmatpush1.msra.mxu0 %v3921
        %4218 = vmatprep.mubr.f32.mxu0 %v3645
        %4219 = vmatmul.mubr.f32.gmra.mrb[0].mxu0 %v3642
        %v4220 = vpop.f32.mrb[0].mxu0
        %v4221 = vadd.f32 %v4144, %v4220
        %v4222 = vpop.f32.mrb[0].mxu0
        %v4223 = vadd.f32 %v4146, %v4222
        %4224 = vmatprep.mubr.f32.mxu0 %v3657
        %4225 = vmatmul.mubr.f32.gmra.mrb[0].mxu0 %v3654
        %v4226 = vpop.f32.mrb[0].mxu0
        %v4227 = vadd.f32 %v4150, %v4226
        %v4228 = vpop.f32.mrb[0].mxu0
        %v4229 = vadd.f32 %v4152, %v4228
        %4230 = vdwg.mxu0
        %v4231 = vadd.f32 %v3438, %v4067
        %v4232 = vadd.f32 %v3440, %v4069
        %v4233 = vadd.f32 %v3592, %v4221
        %v4234 = vadd.f32 %v3594, %v4223
        %v4235 = vadd.f32 %v3444, %v4073
        %v4236 = vadd.f32 %v3446, %v4075
        %v4237 = vadd.f32 %v3598, %v4227
        %v4238 = vadd.f32 %v3600, %v4229
        %v4239 = vld [vmem:[#allocation13] sm:$0xf]
        %v4241 = vlaneseq
        %v4242 = vshrl.u32 %v4241, 7
        %v4243 = vsub.s32 0, %v4242
        %v4244 = vrot.slane %v4239, %v4243
        %v4245 = vlaneseq
        %v4246 = vshrl.u32 %v4245, 7
        %v4247 = vsub.s32 1, %v4246
        %v4248 = vrot.slane %v4239, %v4247
        %v4249 = vlaneseq
        %v4250 = vshrl.u32 %v4249, 7
        %v4251 = vsub.s32 2, %v4250
        %v4252 = vrot.slane %v4239, %v4251
        %v4253 = vlaneseq
        %v4254 = vshrl.u32 %v4253, 7
        %v4255 = vsub.s32 3, %v4254
        %v4256 = vrot.slane %v4239, %v4255
        %v4261 = vmul.f32 %v4231, %v4244
        %v4262 = vmul.f32 %v4232, %v4248
        %v4263 = vmul.f32 %v4233, %v4252
        %v4264 = vmul.f32 %v4234, %v4256
        %v4265 = vmul.f32 %v4235, %v4244
        %v4266 = vmul.f32 %v4236, %v4248
        %v4267 = vmul.f32 %v4237, %v4252
        %v4268 = vmul.f32 %v4238, %v4256
        %v4269 = vld [vmem:[#allocation15] sm:$0xf]
        %v4271 = vlaneseq
        %v4272 = vshrl.u32 %v4271, 7
        %v4273 = vsub.s32 0, %v4272
        %v4274 = vrot.slane %v4269, %v4273
        %v4275 = vlaneseq
        %v4276 = vshrl.u32 %v4275, 7
        %v4277 = vsub.s32 1, %v4276
        %v4278 = vrot.slane %v4269, %v4277
        %v4279 = vlaneseq
        %v4280 = vshrl.u32 %v4279, 7
        %v4281 = vsub.s32 2, %v4280
        %v4282 = vrot.slane %v4269, %v4281
        %v4283 = vlaneseq
        %v4284 = vshrl.u32 %v4283, 7
        %v4285 = vsub.s32 3, %v4284
        %v4286 = vrot.slane %v4269, %v4285
        %v4291 = vadd.f32 %v4261, %v4274
        %v4292 = vadd.f32 %v4262, %v4278
        %v4293 = vadd.f32 %v4263, %v4282
        %v4294 = vadd.f32 %v4264, %v4286
        %v4295 = vadd.f32 %v4265, %v4274
        %v4296 = vadd.f32 %v4266, %v4278
        %v4297 = vadd.f32 %v4267, %v4282
        %v4298 = vadd.f32 %v4268, %v4286
        %v4299 = vadd.f32 %v4291, %v379
        %v4300 = vadd.f32 %v4292, %v380
        %v4301 = vadd.f32 %v4293, %v381
        %v4302 = vadd.f32 %v4294, %v382
        %v4303 = vadd.f32 %v4295, %v383
        %v4304 = vadd.f32 %v4296, %v384
        %v4305 = vadd.f32 %v4297, %v385
        %v4306 = vadd.f32 %v4298, %v386
        %v4307 = vmax.f32 %v4299, 0.0
        %v4308 = vmax.f32 %v4300, 0.0
        %v4309 = vmax.f32 %v4301, 0.0
        %v4310 = vmax.f32 %v4302, 0.0
        %v4311 = vmax.f32 %v4303, 0.0
        %v4312 = vmax.f32 %v4304, 0.0
        %v4313 = vmax.f32 %v4305, 0.0
        %v4314 = vmax.f32 %v4306, 0.0
        %4315 = vst [vmem:[%s376] sm:$0xff] %v4307
        %4316 = vst [vmem:[%s376 + $0x8] sm:$0xff] %v4308
        %4317 = vst [vmem:[%s376 + $0x10] sm:$0xff] %v4309
        %4318 = vst [vmem:[%s376 + $0x18] sm:$0xff] %v4310
        %4319 = vst [vmem:[%s376 + $0x20] sm:$0xff] %v4311
        %4320 = vst [vmem:[%s376 + $0x28] sm:$0xff] %v4312
        %4321 = vst [vmem:[%s376 + $0x30] sm:$0xff] %v4313
        %4322 = vst [vmem:[%s376 + $0x38] sm:$0xff] %v4314
        %s4323 = sand.u32 %s187, 1
        %s4324 = scalar_lea.sflag [#allocation6], %s4323
        %s4325 = sand.u32 %s187, 1
        %s4326 = smul.addr %s4325, 64
        %s4327 = scalar_lea.vmem [#allocation16], %s4326
        // Predicated region
        $region77: #{tpu_custom_call.1} parent=47 // pred_check
          %p4328 = pneg %p197
        $region78: #{tpu_custom_call.1} parent=47 // pred_check_branch
          %4330 = sbr.rel (%p4328) target = $region80
        $region79: #{tpu_custom_call.1} parent=47 // pred_region
          %s4331 = smul.u32 2, %s27
          %s4333 = ssub.s32 1024, 1024
          %4334 = vsyncadd %s4324, %s4333
          %s4335 = smul.addr %s4331, 4
          %s4336 = smul.addr %s4335, 128
          %s4337 = scalar_lea.hbm %s7, %s4336
          %s4338 = sshll.u32 %s4327, 4
          %s4339 = int_to_ptr.vmem [resolvable:$true] %s4338
          %4344 = dma.vmem_to_hbm [thread:$0]  %s4339, 1024, %s4337, %s4324, 512, 512, 32
        $region80: #{tpu_custom_call.1} parent=47 // pred_fallthru
          _
      $region48: #{tpu_custom_call.1} parent=5 // pred_fallthru
        _
      %p4345 = scmp.le.s32.totalorder 2, %s22
      // Predicated region
      $region81: #{tpu_custom_call.1} parent=5 // pred_check
        %p4346 = pneg %p4345
      $region82: #{tpu_custom_call.1} parent=5 // pred_check_branch
        %4348 = sbr.rel (%p4346) target = $region84
      $region83: #{tpu_custom_call.1} parent=5 // pred_region
        %s4349 = ssub.s32 %s22, 2
        // Predicated region
        $region85: #{tpu_custom_call.1} parent=83 // pred_check
          %p4350 = pneg %p203
        $region86: #{tpu_custom_call.1} parent=83 // pred_check_branch
          %4352 = sbr.rel (%p4350) target = $region88
        $region87: #{tpu_custom_call.1} parent=83 // pred_region
          %s4353 = sand.u32 %s188, 1
          %s4354 = scalar_lea.sflag [#allocation6], %s4353
          %s4355 = sand.u32 %s188, 1
          %s4356 = smul.addr %s4355, 64
          %s4357 = scalar_lea.vmem [#allocation16], %s4356
          %4358 = dma.done %s4354, 1024
        $region88: #{tpu_custom_call.1} parent=83 // pred_fallthru
          _
      $region84: #{tpu_custom_call.1} parent=5 // pred_fallthru
        _
    $region6: #{tpu_custom_call.1} parent=1 // loop_footer
      %s26 = sadd.s32 1, %s22
    $region7: #{tpu_custom_call.1} parent=1 // loop_footer_branch
      %21 = sbr.rel target = $region3
    $region8: #{tpu_custom_call.1} parent=1 // loop_exit
      _
    %4359 = vsyncpa [#allocation5], 1
    %s4360 = scalar_lea.sflag [#allocation5], 1
    %4361 = vsyncpa %s4360, 1
    %4362 = vsyncpa [#allocation8], 1
    %4363 = vsyncpa [#allocation11], 1
    %4364 = vsyncpa [#allocation14], 1
    %4365 = vsyncpa [#allocation6], 1
    %s4366 = scalar_lea.sflag [#allocation6], 1
    %4367 = vsyncpa %s4366, 1

</llo_original>
